<compile_context>
chip_gen: v7x
topology: tpu7x:2x2x1
jax: 0.10.0
libtpu: 0.0.40
codegen_flags: <defaults>
</compile_context>

<pallas_src>
import functools

import jax
import jax.numpy as jnp
from jax.experimental import pallas as pl
from jax.experimental.pallas import tpu as pltpu

EPS = 1e-5


def _round_up(x, m):
    return (x + m - 1) // m * m


# ------------------------------------------------------------------
# Fused kernel: BN1+ReLU+1x1 grouped conv -> (+b2)+ReLU -> 3x3 grouped conv
#               -> concat([x, conv_out], channels)
# One grid step = one image (batch axis is "parallel").
#   x_ref  : (1, H*W, Cin)          input activations
#   a1,b1  : (1, Cin)               folded BN1 affine (f32)
#   w1s    : (Cin, Cmid_p)          block-diag 1x1 weights * BN2 scale
#   b2     : (1, Cmid_p)            BN2 shift (zero-padded, f32)
#   w2     : (9, Cmid_p, Cout_p)    block-diag 3x3 tap weights
#   o_ref  : (1, H*W, Cin+Cout)     concatenated output
#   pad_ref: (R, Cmid_p) f32        flat zero-halo scratch, row stride W+2
#   acc_ref: (H*(W+2), Cout_p) f32  conv-2 accumulator (padded-row layout)
# ------------------------------------------------------------------
def make_dense_layer_kernel(H, W, Cin, Cout, Cmid_p, Cout_p, R):
    Wp = W + 2
    HWp = H * Wp

    def kernel(x_ref, a1_ref, b1_ref, w1s_ref, b2_ref, w2_ref, o_ref,
               pad_ref, acc_ref):
        cdt = w1s_ref.dtype                          # MXU compute dtype

        # ---- fused concat: pass the original channels straight through ----
        x = x_ref[0]                                 # (H*W, Cin)
        o_ref[0, :, :Cin] = x.astype(o_ref.dtype)

        # ---- stage 1: BN1 + ReLU + 1x1 grouped conv (BN2 scale is folded
        #      into w1s), then BN2 shift + ReLU ------------------------------
        act1 = jnp.maximum(
            x.astype(jnp.float32) * a1_ref[...] + b1_ref[...], 0.0)
        mid = jnp.dot(act1.astype(cdt), w1s_ref[...],
                      preferred_element_type=jnp.float32)    # (H*W, Cmid_p)
        act2 = jnp.maximum(mid + b2_ref[...], 0.0)           # f32

        # ---- scatter into the flat zero-halo scratch (row stride Wp) -------
        # Only the halo cells are re-zeroed each step (cheap, and safe under
        # the "parallel" grid axis); the interior is overwritten row by row.
        pad_ref[0:Wp + 1, :] = jnp.zeros((Wp + 1, Cmid_p), pad_ref.dtype)
        pad_ref[(H + 1) * Wp:R, :] = jnp.zeros(
            (R - (H + 1) * Wp, Cmid_p), pad_ref.dtype)
        zgap = jnp.zeros((2, Cmid_p), pad_ref.dtype)
        for y in range(H):                           # static unroll
            base = (y + 1) * Wp + 1
            pad_ref[base:base + W, :] = act2[y * W:(y + 1) * W, :]
            # right halo of this row + left halo of the next row
            pad_ref[base + W:base + W + 2, :] = zgap

        # ---- 3x3 grouped conv (pad=1): nine contiguous-window MXU matmuls
        #      accumulated into a VMEM f32 scratch (tap 0 assigns) -----------
        for t in range(9):
            ky, kx = t // 3, t % 3
            d = ky * Wp + kx
            win = pad_ref[d:d + HWp, :].astype(cdt)
            contrib = jnp.dot(win, w2_ref[t],
                              preferred_element_type=jnp.float32)
            if t == 0:
                acc_ref[...] = contrib
            else:
                acc_ref[...] += contrib

        # ---- extract interior columns; write the new channels into the tail
        #      of the concatenated output (no HBM lane padding) --------------
        for y in range(H):
            row = acc_ref[y * Wp:y * Wp + W, :Cout]
            o_ref[0, y * W:(y + 1) * W, Cin:Cin + Cout] = row.astype(
                o_ref.dtype)

    return kernel


# ------------------------------------------------------------------
# One-time parameter preparation (OFF the per-step hot path)
# ------------------------------------------------------------------
def fold_bn(gamma, beta, mean, var):
    a = gamma / jnp.sqrt(var + EPS)
    return a, beta - mean * a


def _block_diag_1x1(w, groups, cin, cmid_p):
    # w: (Cmid, Cin//G, 1, 1) OIHW -> dense (Cin, Cmid_p), lane-padded, f32
    cmid, cin_g = w.shape[0], w.shape[1]
    cout_g = cmid // groups
    Wd = jnp.zeros((cin, cmid_p), jnp.float32)
    for g in range(groups):
        blk = jnp.transpose(w[g * cout_g:(g + 1) * cout_g, :, 0, 0])
        Wd = Wd.at[g * cin_g:(g + 1) * cin_g,
                   g * cout_g:(g + 1) * cout_g].set(blk)
    return Wd


def _block_diag_3x3_taps(w, groups, cmid_p, cout_p, dtype):
    # w: (Cout, Cmid//G, 3, 3) OIHW -> (9, Cmid_p, Cout_p) tap-major weights
    cout, cin_g = w.shape[0], w.shape[1]
    cout_g = cout // groups
    Wt = jnp.zeros((3, 3, cmid_p, cout_p), jnp.float32)
    for g in range(groups):
        blk = jnp.transpose(w[g * cout_g:(g + 1) * cout_g], (2, 3, 1, 0))
        Wt = Wt.at[:, :, g * cin_g:(g + 1) * cin_g,
                   g * cout_g:(g + 1) * cout_g].set(blk)
    return Wt.reshape(9, cmid_p, cout_p).astype(dtype)


def prepare_dense_layer(p, group_1x1, group_3x3, compute_dtype=jnp.bfloat16):
    """Fold BN1/BN2 into affines, fold the BN2 *scale* into the 1x1 weights,
    build lane-padded block-diagonal dense weights.  Call once at load time."""
    Cin = p["g1"].shape[0]
    Cmid = p["w1"].shape[0]
    Cout = p["w2"].shape[0]
    Cmid_p = _round_up(Cmid, 128)     # VMEM-only padding (free)
    Cout_p = _round_up(Cout, 128)     # accumulator-only padding (VMEM)

    a1, b1 = fold_bn(p["g1"], p["b1"], p["m1"], p["v1"])
    a2, b2 = fold_bn(p["g2"], p["b2"], p["m2"], p["v2"])

    a2p = jnp.zeros((1, Cmid_p), jnp.float32).at[0, :Cmid].set(a2)
    b2p = jnp.zeros((1, Cmid_p), jnp.float32).at[0, :Cmid].set(b2)
    W1 = _block_diag_1x1(p["w1"], group_1x1, Cin, Cmid_p)
    W1s = (W1 * a2p).astype(compute_dtype)          # BN2 scale folded in
    W2t = _block_diag_3x3_taps(p["w2"], group_3x3, Cmid_p, Cout_p,
                               compute_dtype)
    prep = dict(a1=a1.reshape(1, Cin), b1=b1.reshape(1, Cin),
                w1s=W1s, b2=b2p, w2t=W2t)
    return prep, Cout


# ------------------------------------------------------------------
# _DenseLayer forward, NHWC-native (activations stay (N, H*W, C) end-to-end)
# ------------------------------------------------------------------
@functools.partial(jax.jit, static_argnames=("cout", "out_dtype"))
def dense_layer_forward_nhwc(x, a1, b1, w1s, b2, w2t, *, cout, out_dtype=None):
    """x: (N, H, W, Cin) NHWC. Returns concat([x, new], -1): (N,H,W,Cin+cout)."""
    N, H, W, Cin = x.shape
    Cmid_p = w1s.shape[1]
    Cout_p = w2t.shape[2]
    Wp = W + 2
    R = _round_up((H + 2) * Wp + 2, 8)
    Ctot = Cin + cout
    odt = x.dtype if out_dtype is None else out_dtype

    x_flat = x.reshape(N, H * W, Cin)               # contiguous -> free
    kernel = make_dense_layer_kernel(H, W, Cin, cout, Cmid_p, Cout_p, R)

    out_flat = pl.pallas_call(
        kernel,
        out_shape=jax.ShapeDtypeStruct((N, H * W, Ctot), odt),
        grid=(N,),
        in_specs=[
            pl.BlockSpec((1, H * W, Cin), lambda n: (n, 0, 0)),
            pl.BlockSpec((1, Cin), lambda n: (0, 0)),
            pl.BlockSpec((1, Cin), lambda n: (0, 0)),
            pl.BlockSpec((Cin, Cmid_p), lambda n: (0, 0)),
            pl.BlockSpec((1, Cmid_p), lambda n: (0, 0)),
            pl.BlockSpec((9, Cmid_p, Cout_p), lambda n: (0, 0, 0)),
        ],
        out_specs=pl.BlockSpec((1, H * W, Ctot), lambda n: (n, 0, 0)),
        scratch_shapes=[
            pltpu.VMEM((R, Cmid_p), jnp.float32),      # zero-halo activations
            pltpu.VMEM((H * Wp, Cout_p), jnp.float32),  # conv-2 accumulator
        ],
        compiler_params=pltpu.CompilerParams(
            dimension_semantics=("parallel",),
            vmem_limit_bytes=64 * 1024 * 1024),
    )(x_flat, a1, b1, w1s, b2, w2t)

    return out_flat.reshape(N, H, W, Ctot)


def dense_layer_forward_nchw(x_nchw, prep, cout, out_dtype=None):
    # Demo adapter only: a real model keeps NHWC end-to-end so these
    # transposes disappear and the kernel's fused concat IS the layer output.
    x = jnp.transpose(x_nchw, (0, 2, 3, 1))
    y = dense_layer_forward_nhwc(x, **prep, cout=cout, out_dtype=out_dtype)
    return jnp.transpose(y, (0, 3, 1, 2))


# ------------------------------------------------------------------
# Pure-JAX reference (correctness check).  matmul_dtype=None -> f32 conv;
# matmul_dtype=bf16 -> conv inputs/weights cast to bf16, f32 accumulation.
# ------------------------------------------------------------------
def ref_forward(x, p, group_1x1, group_3x3, matmul_dtype=None):
    def bn(h, g, b, m, v):
        sh = (1, -1, 1, 1)
        return ((h - m.reshape(sh)) / jnp.sqrt(v.reshape(sh) + EPS)
                * g.reshape(sh) + b.reshape(sh))

    def conv(h, w, groups, pad):
        if matmul_dtype is not None:
            h = h.astype(matmul_dtype)
            w = w.astype(matmul_dtype)
        return jax.lax.conv_general_dilated(
            h, w, (1, 1), pad, feature_group_count=groups,
            dimension_numbers=("NCHW", "OIHW", "NCHW"),
            preferred_element_type=jnp.float32)

    h = jax.nn.relu(bn(x, p["g1"], p["b1"], p["m1"], p["v1"]))
    h = conv(h, p["w1"], group_1x1, "VALID")
    h = jax.nn.relu(bn(h, p["g2"], p["b2"], p["m2"], p["v2"]))
    h = conv(h, p["w2"], group_3x3, ((1, 1), (1, 1)))
    return jnp.concatenate([x, h], axis=1)


if __name__ == "__main__":
    # Config consistent with the module:
    #   in_channels=8, growth_rate=4, bottleneck=4 -> Cmid=16, Cout=4
    #   group_1x1=2, group_3x3=2, N=2, H=W=16
    N, Cin, H, W = 2, 8, 16, 16
    growth_rate, bottleneck = 4, 4
    group_1x1, group_3x3 = 2, 2
    Cmid = bottleneck * growth_rate        # 16
    Cout_true = growth_rate                # 4

    key = jax.random.PRNGKey(0)
    ks = jax.random.split(key, 11)
    params = {
        # BN1 (over Cin), eval-mode running stats
        "g1": jax.random.uniform(ks[0], (Cin,), jnp.float32, 0.5, 1.5),
        "b1": 0.1 * jax.random.normal(ks[1], (Cin,), jnp.float32),
        "m1": 0.1 * jax.random.normal(ks[2], (Cin,), jnp.float32),
        "v1": jax.random.uniform(ks[3], (Cin,), jnp.float32, 0.5, 1.5),
        # conv_1 weight: (Cmid, Cin // group_1x1, 1, 1), bias=False
        "w1": 0.2 * jax.random.normal(ks[4], (Cmid, Cin // group_1x1, 1, 1),
                                      jnp.float32),
        # BN2 (over Cmid)
        "g2": jax.random.uniform(ks[5], (Cmid,), jnp.float32, 0.5, 1.5),
        "b2": 0.1 * jax.random.normal(ks[6], (Cmid,), jnp.float32),
        "m2": 0.1 * jax.random.normal(ks[7], (Cmid,), jnp.float32),
        "v2": jax.random.uniform(ks[8], (Cmid,), jnp.float32, 0.5, 1.5),
        # conv_2 weight: (Cout, Cmid // group_3x3, 3, 3), bias=False
        "w2": 0.2 * jax.random.normal(ks[9],
                                      (Cout_true, Cmid // group_3x3, 3, 3),
                                      jnp.float32),
    }
    x_nchw = jax.random.normal(ks[10], (N, Cin, H, W), jnp.float32)

    # 1) f32 MXU path: near-bit-accurate check against the pure-f32 reference.
    prep32, Cout = prepare_dense_layer(params, group_1x1, group_3x3,
                                       jnp.float32)
    out32 = jax.block_until_ready(
        dense_layer_forward_nchw(x_nchw, prep32, Cout))
    ref32 = jax.block_until_ready(
        ref_forward(x_nchw, params, group_1x1, group_3x3))
    assert out32.shape == (N, Cin + Cout, H, W), out32.shape
    err32 = float(jnp.max(jnp.abs(out32 - ref32)))
    assert jnp.allclose(out32, ref32, atol=2e-3, rtol=2e-3), err32

    # 2) bf16 MXU path (f32 activations at the HBM boundary).
    prep16, Cout = prepare_dense_layer(params, group_1x1, group_3x3,
                                       jnp.bfloat16)
    out16 = jax.block_until_ready(
        dense_layer_forward_nchw(x_nchw, prep16, Cout))
    ref16 = jax.block_until_ready(
        ref_forward(x_nchw, params, group_1x1, group_3x3, jnp.bfloat16))
    err16 = float(jnp.max(jnp.abs(out16 - ref16)))
    assert jnp.allclose(out16, ref16, atol=3e-2, rtol=3e-2), err16

    # 3) bf16 activations at the HBM boundary as well (halves HBM traffic).
    xb = x_nchw.astype(jnp.bfloat16)
    outb = jax.block_until_ready(
        dense_layer_forward_nchw(xb, prep16, Cout, out_dtype=jnp.bfloat16))
    refb = jax.block_until_ready(
        ref_forward(xb.astype(jnp.float32), params, group_1x1, group_3x3,
                    jnp.bfloat16))
    errb = float(jnp.max(jnp.abs(outb.astype(jnp.float32) - refb)))
    assert jnp.allclose(outb.astype(jnp.float32), refb,
                        atol=5e-2, rtol=5e-2), errb

    print("KERNEL_OK")
</pallas_src>

<mosaic_0001>
module attributes {stable_mosaic.version = 11 : i64} {
  func.func @kernel(%arg0: i32, %arg1: memref<1x256x8xf32, #tpu.memory_space<vmem>>, %arg2: memref<1x8xf32, #tpu.memory_space<vmem>>, %arg3: memref<1x8xf32, #tpu.memory_space<vmem>>, %arg4: memref<8x128xf32, #tpu.memory_space<vmem>>, %arg5: memref<1x128xf32, #tpu.memory_space<vmem>>, %arg6: memref<9x128x128xf32, #tpu.memory_space<vmem>>, %arg7: memref<1x256x12xf32, #tpu.memory_space<vmem>>, %arg8: memref<328x128xf32, #tpu.memory_space<vmem>>, %arg9: memref<288x128xf32, #tpu.memory_space<vmem>>) attributes {dimension_semantics = [#tpu.dimension_semantics<parallel>], iteration_bounds = array<i64: 2>, scalar_prefetch = 0 : i64, scratch_operands = 2 : i64, tpu.core_type = #tpu.core_type<tc>, window_params = [{transform_indices = @transform_0, window_bounds = array<i64: 1, 256, 8>}, {pipeline_mode = #tpu.pipeline_mode<synchronous>, transform_indices = @transform_1, window_bounds = array<i64: 1, 8>}, {pipeline_mode = #tpu.pipeline_mode<synchronous>, transform_indices = @transform_2, window_bounds = array<i64: 1, 8>}, {pipeline_mode = #tpu.pipeline_mode<synchronous>, transform_indices = @transform_3, window_bounds = array<i64: 8, 128>}, {pipeline_mode = #tpu.pipeline_mode<synchronous>, transform_indices = @transform_4, window_bounds = array<i64: 1, 128>}, {pipeline_mode = #tpu.pipeline_mode<synchronous>, transform_indices = @transform_5, window_bounds = array<i64: 9, 128, 128>}, {transform_indices = @transform_6, window_bounds = array<i64: 1, 256, 12>}]} {
    %c0 = arith.constant 0 : index
    %c0_0 = arith.constant 0 : index
    %c0_1 = arith.constant 0 : index
    %0 = vector.load %arg1[%c0, %c0_0, %c0_1] : memref<1x256x8xf32, #tpu.memory_space<vmem>>, vector<1x256x8xf32>
    %1 = vector.shape_cast %0 : vector<1x256x8xf32> to vector<256x8xf32>
    %c0_2 = arith.constant 0 : index
    %c0_3 = arith.constant 0 : index
    %c0_4 = arith.constant 0 : index
    %2 = vector.load %arg7[%c0_2, %c0_3, %c0_4] : memref<1x256x12xf32, #tpu.memory_space<vmem>>, vector<1x256x8xf32>
    %3 = vector.shape_cast %2 : vector<1x256x8xf32> to vector<256x8xf32>
    %4 = vector.shape_cast %1 : vector<256x8xf32> to vector<1x256x8xf32>
    tpu.vector_store %arg7[%c0_2, %c0_3, %c0_4], %4 {strides = array<i32>} : memref<1x256x12xf32, #tpu.memory_space<vmem>>, vector<1x256x8xf32>,
    %c0_5 = arith.constant 0 : index
    %c0_6 = arith.constant 0 : index
    %5 = vector.load %arg2[%c0_5, %c0_6] : memref<1x8xf32, #tpu.memory_space<vmem>>, vector<1x8xf32>
    %6 = vector.broadcast %5 : vector<1x8xf32> to vector<256x8xf32>
    %7 = arith.mulf %1, %6 : vector<256x8xf32>
    %c0_7 = arith.constant 0 : index
    %c0_8 = arith.constant 0 : index
    %8 = vector.load %arg3[%c0_7, %c0_8] : memref<1x8xf32, #tpu.memory_space<vmem>>, vector<1x8xf32>
    %9 = vector.broadcast %8 : vector<1x8xf32> to vector<256x8xf32>
    %10 = arith.addf %7, %9 : vector<256x8xf32>
    %cst = arith.constant 0.000000e+00 : f32
    %11 = vector.broadcast %cst : f32 to vector<256x8xf32>
    %12 = arith.maximumf %10, %11 : vector<256x8xf32>
    %c0_9 = arith.constant 0 : index
    %c0_10 = arith.constant 0 : index
    %13 = vector.load %arg4[%c0_9, %c0_10] : memref<8x128xf32, #tpu.memory_space<vmem>>, vector<8x128xf32>
    %cst_11 = arith.constant dense<0.000000e+00> : vector<256x128xf32>
    %14 = tpu.matmul %12, %13, %cst_11 {dimension_numbers = #tpu.dot_dimension_numbers<[1], [0], [0], [1], [0, 0, 1, 1], [], []>} : vector<256x8xf32>, vector<8x128xf32>, vector<256x128xf32> -> vector<256x128xf32>
    %c0_12 = arith.constant 0 : index
    %c0_13 = arith.constant 0 : index
    %15 = vector.load %arg5[%c0_12, %c0_13] : memref<1x128xf32, #tpu.memory_space<vmem>>, vector<1x128xf32>
    %16 = vector.broadcast %15 : vector<1x128xf32> to vector<256x128xf32>
    %17 = arith.addf %14, %16 : vector<256x128xf32>
    %cst_14 = arith.constant 0.000000e+00 : f32
    %18 = vector.broadcast %cst_14 : f32 to vector<256x128xf32>
    %19 = arith.maximumf %17, %18 : vector<256x128xf32>
    %cst_15 = arith.constant 0.000000e+00 : f32
    %20 = vector.broadcast %cst_15 : f32 to vector<19x128xf32>
    %c0_16 = arith.constant 0 : index
    %c0_17 = arith.constant 0 : index
    %21 = vector.load %arg8[%c0_16, %c0_17] : memref<328x128xf32, #tpu.memory_space<vmem>>, vector<19x128xf32>
    tpu.vector_store %arg8[%c0_16, %c0_17], %20 {strides = array<i32>} : memref<328x128xf32, #tpu.memory_space<vmem>>, vector<19x128xf32>,
    %cst_18 = arith.constant 0.000000e+00 : f32
    %22 = vector.broadcast %cst_18 : f32 to vector<22x128xf32>
    %c306 = arith.constant 306 : index
    %c0_19 = arith.constant 0 : index
    %23 = vector.load %arg8[%c306, %c0_19] : memref<328x128xf32, #tpu.memory_space<vmem>>, vector<22x128xf32>
    tpu.vector_store %arg8[%c306, %c0_19], %22 {strides = array<i32>} : memref<328x128xf32, #tpu.memory_space<vmem>>, vector<22x128xf32>,
    %cst_20 = arith.constant 0.000000e+00 : f32
    %24 = vector.broadcast %cst_20 : f32 to vector<2x128xf32>
    %25 = vector.extract_strided_slice %19 {offsets = [0, 0], sizes = [16, 128], strides = [1, 1]} : vector<256x128xf32> to vector<16x128xf32>
    %c19 = arith.constant 19 : index
    %c0_21 = arith.constant 0 : index
    %26 = vector.load %arg8[%c19, %c0_21] : memref<328x128xf32, #tpu.memory_space<vmem>>, vector<16x128xf32>
    tpu.vector_store %arg8[%c19, %c0_21], %25 {strides = array<i32>} : memref<328x128xf32, #tpu.memory_space<vmem>>, vector<16x128xf32>,
    %c35 = arith.constant 35 : index
    %c0_22 = arith.constant 0 : index
    %27 = vector.load %arg8[%c35, %c0_22] : memref<328x128xf32, #tpu.memory_space<vmem>>, vector<2x128xf32>
    tpu.vector_store %arg8[%c35, %c0_22], %24 {strides = array<i32>} : memref<328x128xf32, #tpu.memory_space<vmem>>, vector<2x128xf32>,
    %28 = vector.extract_strided_slice %19 {offsets = [16, 0], sizes = [16, 128], strides = [1, 1]} : vector<256x128xf32> to vector<16x128xf32>
    %c37 = arith.constant 37 : index
    %c0_23 = arith.constant 0 : index
    %29 = vector.load %arg8[%c37, %c0_23] : memref<328x128xf32, #tpu.memory_space<vmem>>, vector<16x128xf32>
    tpu.vector_store %arg8[%c37, %c0_23], %28 {strides = array<i32>} : memref<328x128xf32, #tpu.memory_space<vmem>>, vector<16x128xf32>,
    %c53 = arith.constant 53 : index
    %c0_24 = arith.constant 0 : index
    %30 = vector.load %arg8[%c53, %c0_24] : memref<328x128xf32, #tpu.memory_space<vmem>>, vector<2x128xf32>
    tpu.vector_store %arg8[%c53, %c0_24], %24 {strides = array<i32>} : memref<328x128xf32, #tpu.memory_space<vmem>>, vector<2x128xf32>,
    %31 = vector.extract_strided_slice %19 {offsets = [32, 0], sizes = [16, 128], strides = [1, 1]} : vector<256x128xf32> to vector<16x128xf32>
    %c55 = arith.constant 55 : index
    %c0_25 = arith.constant 0 : index
    %32 = vector.load %arg8[%c55, %c0_25] : memref<328x128xf32, #tpu.memory_space<vmem>>, vector<16x128xf32>
    tpu.vector_store %arg8[%c55, %c0_25], %31 {strides = array<i32>} : memref<328x128xf32, #tpu.memory_space<vmem>>, vector<16x128xf32>,
    %c71 = arith.constant 71 : index
    %c0_26 = arith.constant 0 : index
    %33 = vector.load %arg8[%c71, %c0_26] : memref<328x128xf32, #tpu.memory_space<vmem>>, vector<2x128xf32>
    tpu.vector_store %arg8[%c71, %c0_26], %24 {strides = array<i32>} : memref<328x128xf32, #tpu.memory_space<vmem>>, vector<2x128xf32>,
    %34 = vector.extract_strided_slice %19 {offsets = [48, 0], sizes = [16, 128], strides = [1, 1]} : vector<256x128xf32> to vector<16x128xf32>
    %c73 = arith.constant 73 : index
    %c0_27 = arith.constant 0 : index
    %35 = vector.load %arg8[%c73, %c0_27] : memref<328x128xf32, #tpu.memory_space<vmem>>, vector<16x128xf32>
    tpu.vector_store %arg8[%c73, %c0_27], %34 {strides = array<i32>} : memref<328x128xf32, #tpu.memory_space<vmem>>, vector<16x128xf32>,
    %c89 = arith.constant 89 : index
    %c0_28 = arith.constant 0 : index
    %36 = vector.load %arg8[%c89, %c0_28] : memref<328x128xf32, #tpu.memory_space<vmem>>, vector<2x128xf32>
    tpu.vector_store %arg8[%c89, %c0_28], %24 {strides = array<i32>} : memref<328x128xf32, #tpu.memory_space<vmem>>, vector<2x128xf32>,
    %37 = vector.extract_strided_slice %19 {offsets = [64, 0], sizes = [16, 128], strides = [1, 1]} : vector<256x128xf32> to vector<16x128xf32>
    %c91 = arith.constant 91 : index
    %c0_29 = arith.constant 0 : index
    %38 = vector.load %arg8[%c91, %c0_29] : memref<328x128xf32, #tpu.memory_space<vmem>>, vector<16x128xf32>
    tpu.vector_store %arg8[%c91, %c0_29], %37 {strides = array<i32>} : memref<328x128xf32, #tpu.memory_space<vmem>>, vector<16x128xf32>,
    %c107 = arith.constant 107 : index
    %c0_30 = arith.constant 0 : index
    %39 = vector.load %arg8[%c107, %c0_30] : memref<328x128xf32, #tpu.memory_space<vmem>>, vector<2x128xf32>
    tpu.vector_store %arg8[%c107, %c0_30], %24 {strides = array<i32>} : memref<328x128xf32, #tpu.memory_space<vmem>>, vector<2x128xf32>,
    %40 = vector.extract_strided_slice %19 {offsets = [80, 0], sizes = [16, 128], strides = [1, 1]} : vector<256x128xf32> to vector<16x128xf32>
    %c109 = arith.constant 109 : index
    %c0_31 = arith.constant 0 : index
    %41 = vector.load %arg8[%c109, %c0_31] : memref<328x128xf32, #tpu.memory_space<vmem>>, vector<16x128xf32>
    tpu.vector_store %arg8[%c109, %c0_31], %40 {strides = array<i32>} : memref<328x128xf32, #tpu.memory_space<vmem>>, vector<16x128xf32>,
    %c125 = arith.constant 125 : index
    %c0_32 = arith.constant 0 : index
    %42 = vector.load %arg8[%c125, %c0_32] : memref<328x128xf32, #tpu.memory_space<vmem>>, vector<2x128xf32>
    tpu.vector_store %arg8[%c125, %c0_32], %24 {strides = array<i32>} : memref<328x128xf32, #tpu.memory_space<vmem>>, vector<2x128xf32>,
    %43 = vector.extract_strided_slice %19 {offsets = [96, 0], sizes = [16, 128], strides = [1, 1]} : vector<256x128xf32> to vector<16x128xf32>
    %c127 = arith.constant 127 : index
    %c0_33 = arith.constant 0 : index
    %44 = vector.load %arg8[%c127, %c0_33] : memref<328x128xf32, #tpu.memory_space<vmem>>, vector<16x128xf32>
    tpu.vector_store %arg8[%c127, %c0_33], %43 {strides = array<i32>} : memref<328x128xf32, #tpu.memory_space<vmem>>, vector<16x128xf32>,
    %c143 = arith.constant 143 : index
    %c0_34 = arith.constant 0 : index
    %45 = vector.load %arg8[%c143, %c0_34] : memref<328x128xf32, #tpu.memory_space<vmem>>, vector<2x128xf32>
    tpu.vector_store %arg8[%c143, %c0_34], %24 {strides = array<i32>} : memref<328x128xf32, #tpu.memory_space<vmem>>, vector<2x128xf32>,
    %46 = vector.extract_strided_slice %19 {offsets = [112, 0], sizes = [16, 128], strides = [1, 1]} : vector<256x128xf32> to vector<16x128xf32>
    %c145 = arith.constant 145 : index
    %c0_35 = arith.constant 0 : index
    %47 = vector.load %arg8[%c145, %c0_35] : memref<328x128xf32, #tpu.memory_space<vmem>>, vector<16x128xf32>
    tpu.vector_store %arg8[%c145, %c0_35], %46 {strides = array<i32>} : memref<328x128xf32, #tpu.memory_space<vmem>>, vector<16x128xf32>,
    %c161 = arith.constant 161 : index
    %c0_36 = arith.constant 0 : index
    %48 = vector.load %arg8[%c161, %c0_36] : memref<328x128xf32, #tpu.memory_space<vmem>>, vector<2x128xf32>
    tpu.vector_store %arg8[%c161, %c0_36], %24 {strides = array<i32>} : memref<328x128xf32, #tpu.memory_space<vmem>>, vector<2x128xf32>,
    %49 = vector.extract_strided_slice %19 {offsets = [128, 0], sizes = [16, 128], strides = [1, 1]} : vector<256x128xf32> to vector<16x128xf32>
    %c163 = arith.constant 163 : index
    %c0_37 = arith.constant 0 : index
    %50 = vector.load %arg8[%c163, %c0_37] : memref<328x128xf32, #tpu.memory_space<vmem>>, vector<16x128xf32>
    tpu.vector_store %arg8[%c163, %c0_37], %49 {strides = array<i32>} : memref<328x128xf32, #tpu.memory_space<vmem>>, vector<16x128xf32>,
    %c179 = arith.constant 179 : index
    %c0_38 = arith.constant 0 : index
    %51 = vector.load %arg8[%c179, %c0_38] : memref<328x128xf32, #tpu.memory_space<vmem>>, vector<2x128xf32>
    tpu.vector_store %arg8[%c179, %c0_38], %24 {strides = array<i32>} : memref<328x128xf32, #tpu.memory_space<vmem>>, vector<2x128xf32>,
    %52 = vector.extract_strided_slice %19 {offsets = [144, 0], sizes = [16, 128], strides = [1, 1]} : vector<256x128xf32> to vector<16x128xf32>
    %c181 = arith.constant 181 : index
    %c0_39 = arith.constant 0 : index
    %53 = vector.load %arg8[%c181, %c0_39] : memref<328x128xf32, #tpu.memory_space<vmem>>, vector<16x128xf32>
    tpu.vector_store %arg8[%c181, %c0_39], %52 {strides = array<i32>} : memref<328x128xf32, #tpu.memory_space<vmem>>, vector<16x128xf32>,
    %c197 = arith.constant 197 : index
    %c0_40 = arith.constant 0 : index
    %54 = vector.load %arg8[%c197, %c0_40] : memref<328x128xf32, #tpu.memory_space<vmem>>, vector<2x128xf32>
    tpu.vector_store %arg8[%c197, %c0_40], %24 {strides = array<i32>} : memref<328x128xf32, #tpu.memory_space<vmem>>, vector<2x128xf32>,
    %55 = vector.extract_strided_slice %19 {offsets = [160, 0], sizes = [16, 128], strides = [1, 1]} : vector<256x128xf32> to vector<16x128xf32>
    %c199 = arith.constant 199 : index
    %c0_41 = arith.constant 0 : index
    %56 = vector.load %arg8[%c199, %c0_41] : memref<328x128xf32, #tpu.memory_space<vmem>>, vector<16x128xf32>
    tpu.vector_store %arg8[%c199, %c0_41], %55 {strides = array<i32>} : memref<328x128xf32, #tpu.memory_space<vmem>>, vector<16x128xf32>,
    %c215 = arith.constant 215 : index
    %c0_42 = arith.constant 0 : index
    %57 = vector.load %arg8[%c215, %c0_42] : memref<328x128xf32, #tpu.memory_space<vmem>>, vector<2x128xf32>
    tpu.vector_store %arg8[%c215, %c0_42], %24 {strides = array<i32>} : memref<328x128xf32, #tpu.memory_space<vmem>>, vector<2x128xf32>,
    %58 = vector.extract_strided_slice %19 {offsets = [176, 0], sizes = [16, 128], strides = [1, 1]} : vector<256x128xf32> to vector<16x128xf32>
    %c217 = arith.constant 217 : index
    %c0_43 = arith.constant 0 : index
    %59 = vector.load %arg8[%c217, %c0_43] : memref<328x128xf32, #tpu.memory_space<vmem>>, vector<16x128xf32>
    tpu.vector_store %arg8[%c217, %c0_43], %58 {strides = array<i32>} : memref<328x128xf32, #tpu.memory_space<vmem>>, vector<16x128xf32>,
    %c233 = arith.constant 233 : index
    %c0_44 = arith.constant 0 : index
    %60 = vector.load %arg8[%c233, %c0_44] : memref<328x128xf32, #tpu.memory_space<vmem>>, vector<2x128xf32>
    tpu.vector_store %arg8[%c233, %c0_44], %24 {strides = array<i32>} : memref<328x128xf32, #tpu.memory_space<vmem>>, vector<2x128xf32>,
    %61 = vector.extract_strided_slice %19 {offsets = [192, 0], sizes = [16, 128], strides = [1, 1]} : vector<256x128xf32> to vector<16x128xf32>
    %c235 = arith.constant 235 : index
    %c0_45 = arith.constant 0 : index
    %62 = vector.load %arg8[%c235, %c0_45] : memref<328x128xf32, #tpu.memory_space<vmem>>, vector<16x128xf32>
    tpu.vector_store %arg8[%c235, %c0_45], %61 {strides = array<i32>} : memref<328x128xf32, #tpu.memory_space<vmem>>, vector<16x128xf32>,
    %c251 = arith.constant 251 : index
    %c0_46 = arith.constant 0 : index
    %63 = vector.load %arg8[%c251, %c0_46] : memref<328x128xf32, #tpu.memory_space<vmem>>, vector<2x128xf32>
    tpu.vector_store %arg8[%c251, %c0_46], %24 {strides = array<i32>} : memref<328x128xf32, #tpu.memory_space<vmem>>, vector<2x128xf32>,
    %64 = vector.extract_strided_slice %19 {offsets = [208, 0], sizes = [16, 128], strides = [1, 1]} : vector<256x128xf32> to vector<16x128xf32>
    %c253 = arith.constant 253 : index
    %c0_47 = arith.constant 0 : index
    %65 = vector.load %arg8[%c253, %c0_47] : memref<328x128xf32, #tpu.memory_space<vmem>>, vector<16x128xf32>
    tpu.vector_store %arg8[%c253, %c0_47], %64 {strides = array<i32>} : memref<328x128xf32, #tpu.memory_space<vmem>>, vector<16x128xf32>,
    %c269 = arith.constant 269 : index
    %c0_48 = arith.constant 0 : index
    %66 = vector.load %arg8[%c269, %c0_48] : memref<328x128xf32, #tpu.memory_space<vmem>>, vector<2x128xf32>
    tpu.vector_store %arg8[%c269, %c0_48], %24 {strides = array<i32>} : memref<328x128xf32, #tpu.memory_space<vmem>>, vector<2x128xf32>,
    %67 = vector.extract_strided_slice %19 {offsets = [224, 0], sizes = [16, 128], strides = [1, 1]} : vector<256x128xf32> to vector<16x128xf32>
    %c271 = arith.constant 271 : index
    %c0_49 = arith.constant 0 : index
    %68 = vector.load %arg8[%c271, %c0_49] : memref<328x128xf32, #tpu.memory_space<vmem>>, vector<16x128xf32>
    tpu.vector_store %arg8[%c271, %c0_49], %67 {strides = array<i32>} : memref<328x128xf32, #tpu.memory_space<vmem>>, vector<16x128xf32>,
    %c287 = arith.constant 287 : index
    %c0_50 = arith.constant 0 : index
    %69 = vector.load %arg8[%c287, %c0_50] : memref<328x128xf32, #tpu.memory_space<vmem>>, vector<2x128xf32>
    tpu.vector_store %arg8[%c287, %c0_50], %24 {strides = array<i32>} : memref<328x128xf32, #tpu.memory_space<vmem>>, vector<2x128xf32>,
    %70 = vector.extract_strided_slice %19 {offsets = [240, 0], sizes = [16, 128], strides = [1, 1]} : vector<256x128xf32> to vector<16x128xf32>
    %c289 = arith.constant 289 : index
    %c0_51 = arith.constant 0 : index
    %71 = vector.load %arg8[%c289, %c0_51] : memref<328x128xf32, #tpu.memory_space<vmem>>, vector<16x128xf32>
    tpu.vector_store %arg8[%c289, %c0_51], %70 {strides = array<i32>} : memref<328x128xf32, #tpu.memory_space<vmem>>, vector<16x128xf32>,
    %c305 = arith.constant 305 : index
    %c0_52 = arith.constant 0 : index
    %72 = vector.load %arg8[%c305, %c0_52] : memref<328x128xf32, #tpu.memory_space<vmem>>, vector<2x128xf32>
    tpu.vector_store %arg8[%c305, %c0_52], %24 {strides = array<i32>} : memref<328x128xf32, #tpu.memory_space<vmem>>, vector<2x128xf32>,
    %c0_53 = arith.constant 0 : index
    %c0_54 = arith.constant 0 : index
    %73 = vector.load %arg8[%c0_53, %c0_54] : memref<328x128xf32, #tpu.memory_space<vmem>>, vector<288x128xf32>
    %c0_55 = arith.constant 0 : index
    %c0_56 = arith.constant 0 : index
    %c0_57 = arith.constant 0 : index
    %74 = vector.load %arg6[%c0_55, %c0_56, %c0_57] : memref<9x128x128xf32, #tpu.memory_space<vmem>>, vector<1x128x128xf32>
    %75 = vector.shape_cast %74 : vector<1x128x128xf32> to vector<128x128xf32>
    %cst_58 = arith.constant dense<0.000000e+00> : vector<288x128xf32>
    %76 = tpu.matmul %73, %75, %cst_58 {dimension_numbers = #tpu.dot_dimension_numbers<[1], [0], [0], [1], [0, 0, 1, 1], [], []>} : vector<288x128xf32>, vector<128x128xf32>, vector<288x128xf32> -> vector<288x128xf32>
    %c0_59 = arith.constant 0 : index
    %c0_60 = arith.constant 0 : index
    %77 = vector.load %arg9[%c0_59, %c0_60] : memref<288x128xf32, #tpu.memory_space<vmem>>, vector<288x128xf32>
    tpu.vector_store %arg9[%c0_59, %c0_60], %76 {strides = array<i32>} : memref<288x128xf32, #tpu.memory_space<vmem>>, vector<288x128xf32>,
    %c1 = arith.constant 1 : index
    %c0_61 = arith.constant 0 : index
    %78 = vector.load %arg8[%c1, %c0_61] : memref<328x128xf32, #tpu.memory_space<vmem>>, vector<288x128xf32>
    %c1_62 = arith.constant 1 : index
    %c0_63 = arith.constant 0 : index
    %c0_64 = arith.constant 0 : index
    %79 = vector.load %arg6[%c1_62, %c0_63, %c0_64] : memref<9x128x128xf32, #tpu.memory_space<vmem>>, vector<1x128x128xf32>
    %80 = vector.shape_cast %79 : vector<1x128x128xf32> to vector<128x128xf32>
    %cst_65 = arith.constant dense<0.000000e+00> : vector<288x128xf32>
    %81 = tpu.matmul %78, %80, %cst_65 {dimension_numbers = #tpu.dot_dimension_numbers<[1], [0], [0], [1], [0, 0, 1, 1], [], []>} : vector<288x128xf32>, vector<128x128xf32>, vector<288x128xf32> -> vector<288x128xf32>
    %c0_66 = arith.constant 0 : index
    %c0_67 = arith.constant 0 : index
    %82 = vector.load %arg9[%c0_66, %c0_67] : memref<288x128xf32, #tpu.memory_space<vmem>>, vector<288x128xf32>
    %83 = arith.addf %82, %81 : vector<288x128xf32>
    %c0_68 = arith.constant 0 : index
    %c0_69 = arith.constant 0 : index
    %84 = vector.load %arg9[%c0_68, %c0_69] : memref<288x128xf32, #tpu.memory_space<vmem>>, vector<288x128xf32>
    tpu.vector_store %arg9[%c0_68, %c0_69], %83 {strides = array<i32>} : memref<288x128xf32, #tpu.memory_space<vmem>>, vector<288x128xf32>,
    %c2 = arith.constant 2 : index
    %c0_70 = arith.constant 0 : index
    %85 = vector.load %arg8[%c2, %c0_70] : memref<328x128xf32, #tpu.memory_space<vmem>>, vector<288x128xf32>
    %c2_71 = arith.constant 2 : index
    %c0_72 = arith.constant 0 : index
    %c0_73 = arith.constant 0 : index
    %86 = vector.load %arg6[%c2_71, %c0_72, %c0_73] : memref<9x128x128xf32, #tpu.memory_space<vmem>>, vector<1x128x128xf32>
    %87 = vector.shape_cast %86 : vector<1x128x128xf32> to vector<128x128xf32>
    %cst_74 = arith.constant dense<0.000000e+00> : vector<288x128xf32>
    %88 = tpu.matmul %85, %87, %cst_74 {dimension_numbers = #tpu.dot_dimension_numbers<[1], [0], [0], [1], [0, 0, 1, 1], [], []>} : vector<288x128xf32>, vector<128x128xf32>, vector<288x128xf32> -> vector<288x128xf32>
    %c0_75 = arith.constant 0 : index
    %c0_76 = arith.constant 0 : index
    %89 = vector.load %arg9[%c0_75, %c0_76] : memref<288x128xf32, #tpu.memory_space<vmem>>, vector<288x128xf32>
    %90 = arith.addf %89, %88 : vector<288x128xf32>
    %c0_77 = arith.constant 0 : index
    %c0_78 = arith.constant 0 : index
    %91 = vector.load %arg9[%c0_77, %c0_78] : memref<288x128xf32, #tpu.memory_space<vmem>>, vector<288x128xf32>
    tpu.vector_store %arg9[%c0_77, %c0_78], %90 {strides = array<i32>} : memref<288x128xf32, #tpu.memory_space<vmem>>, vector<288x128xf32>,
    %c18 = arith.constant 18 : index
    %c0_79 = arith.constant 0 : index
    %92 = vector.load %arg8[%c18, %c0_79] : memref<328x128xf32, #tpu.memory_space<vmem>>, vector<288x128xf32>
    %c3 = arith.constant 3 : index
    %c0_80 = arith.constant 0 : index
    %c0_81 = arith.constant 0 : index
    %93 = vector.load %arg6[%c3, %c0_80, %c0_81] : memref<9x128x128xf32, #tpu.memory_space<vmem>>, vector<1x128x128xf32>
    %94 = vector.shape_cast %93 : vector<1x128x128xf32> to vector<128x128xf32>
    %cst_82 = arith.constant dense<0.000000e+00> : vector<288x128xf32>
    %95 = tpu.matmul %92, %94, %cst_82 {dimension_numbers = #tpu.dot_dimension_numbers<[1], [0], [0], [1], [0, 0, 1, 1], [], []>} : vector<288x128xf32>, vector<128x128xf32>, vector<288x128xf32> -> vector<288x128xf32>
    %c0_83 = arith.constant 0 : index
    %c0_84 = arith.constant 0 : index
    %96 = vector.load %arg9[%c0_83, %c0_84] : memref<288x128xf32, #tpu.memory_space<vmem>>, vector<288x128xf32>
    %97 = arith.addf %96, %95 : vector<288x128xf32>
    %c0_85 = arith.constant 0 : index
    %c0_86 = arith.constant 0 : index
    %98 = vector.load %arg9[%c0_85, %c0_86] : memref<288x128xf32, #tpu.memory_space<vmem>>, vector<288x128xf32>
    tpu.vector_store %arg9[%c0_85, %c0_86], %97 {strides = array<i32>} : memref<288x128xf32, #tpu.memory_space<vmem>>, vector<288x128xf32>,
    %c19_87 = arith.constant 19 : index
    %c0_88 = arith.constant 0 : index
    %99 = vector.load %arg8[%c19_87, %c0_88] : memref<328x128xf32, #tpu.memory_space<vmem>>, vector<288x128xf32>
    %c4 = arith.constant 4 : index
    %c0_89 = arith.constant 0 : index
    %c0_90 = arith.constant 0 : index
    %100 = vector.load %arg6[%c4, %c0_89, %c0_90] : memref<9x128x128xf32, #tpu.memory_space<vmem>>, vector<1x128x128xf32>
    %101 = vector.shape_cast %100 : vector<1x128x128xf32> to vector<128x128xf32>
    %cst_91 = arith.constant dense<0.000000e+00> : vector<288x128xf32>
    %102 = tpu.matmul %99, %101, %cst_91 {dimension_numbers = #tpu.dot_dimension_numbers<[1], [0], [0], [1], [0, 0, 1, 1], [], []>} : vector<288x128xf32>, vector<128x128xf32>, vector<288x128xf32> -> vector<288x128xf32>
    %c0_92 = arith.constant 0 : index
    %c0_93 = arith.constant 0 : index
    %103 = vector.load %arg9[%c0_92, %c0_93] : memref<288x128xf32, #tpu.memory_space<vmem>>, vector<288x128xf32>
    %104 = arith.addf %103, %102 : vector<288x128xf32>
    %c0_94 = arith.constant 0 : index
    %c0_95 = arith.constant 0 : index
    %105 = vector.load %arg9[%c0_94, %c0_95] : memref<288x128xf32, #tpu.memory_space<vmem>>, vector<288x128xf32>
    tpu.vector_store %arg9[%c0_94, %c0_95], %104 {strides = array<i32>} : memref<288x128xf32, #tpu.memory_space<vmem>>, vector<288x128xf32>,
    %c20 = arith.constant 20 : index
    %c0_96 = arith.constant 0 : index
    %106 = vector.load %arg8[%c20, %c0_96] : memref<328x128xf32, #tpu.memory_space<vmem>>, vector<288x128xf32>
    %c5 = arith.constant 5 : index
    %c0_97 = arith.constant 0 : index
    %c0_98 = arith.constant 0 : index
    %107 = vector.load %arg6[%c5, %c0_97, %c0_98] : memref<9x128x128xf32, #tpu.memory_space<vmem>>, vector<1x128x128xf32>
    %108 = vector.shape_cast %107 : vector<1x128x128xf32> to vector<128x128xf32>
    %cst_99 = arith.constant dense<0.000000e+00> : vector<288x128xf32>
    %109 = tpu.matmul %106, %108, %cst_99 {dimension_numbers = #tpu.dot_dimension_numbers<[1], [0], [0], [1], [0, 0, 1, 1], [], []>} : vector<288x128xf32>, vector<128x128xf32>, vector<288x128xf32> -> vector<288x128xf32>
    %c0_100 = arith.constant 0 : index
    %c0_101 = arith.constant 0 : index
    %110 = vector.load %arg9[%c0_100, %c0_101] : memref<288x128xf32, #tpu.memory_space<vmem>>, vector<288x128xf32>
    %111 = arith.addf %110, %109 : vector<288x128xf32>
    %c0_102 = arith.constant 0 : index
    %c0_103 = arith.constant 0 : index
    %112 = vector.load %arg9[%c0_102, %c0_103] : memref<288x128xf32, #tpu.memory_space<vmem>>, vector<288x128xf32>
    tpu.vector_store %arg9[%c0_102, %c0_103], %111 {strides = array<i32>} : memref<288x128xf32, #tpu.memory_space<vmem>>, vector<288x128xf32>,
    %c36 = arith.constant 36 : index
    %c0_104 = arith.constant 0 : index
    %113 = vector.load %arg8[%c36, %c0_104] : memref<328x128xf32, #tpu.memory_space<vmem>>, vector<288x128xf32>
    %c6 = arith.constant 6 : index
    %c0_105 = arith.constant 0 : index
    %c0_106 = arith.constant 0 : index
    %114 = vector.load %arg6[%c6, %c0_105, %c0_106] : memref<9x128x128xf32, #tpu.memory_space<vmem>>, vector<1x128x128xf32>
    %115 = vector.shape_cast %114 : vector<1x128x128xf32> to vector<128x128xf32>
    %cst_107 = arith.constant dense<0.000000e+00> : vector<288x128xf32>
    %116 = tpu.matmul %113, %115, %cst_107 {dimension_numbers = #tpu.dot_dimension_numbers<[1], [0], [0], [1], [0, 0, 1, 1], [], []>} : vector<288x128xf32>, vector<128x128xf32>, vector<288x128xf32> -> vector<288x128xf32>
    %c0_108 = arith.constant 0 : index
    %c0_109 = arith.constant 0 : index
    %117 = vector.load %arg9[%c0_108, %c0_109] : memref<288x128xf32, #tpu.memory_space<vmem>>, vector<288x128xf32>
    %118 = arith.addf %117, %116 : vector<288x128xf32>
    %c0_110 = arith.constant 0 : index
    %c0_111 = arith.constant 0 : index
    %119 = vector.load %arg9[%c0_110, %c0_111] : memref<288x128xf32, #tpu.memory_space<vmem>>, vector<288x128xf32>
    tpu.vector_store %arg9[%c0_110, %c0_111], %118 {strides = array<i32>} : memref<288x128xf32, #tpu.memory_space<vmem>>, vector<288x128xf32>,
    %c37_112 = arith.constant 37 : index
    %c0_113 = arith.constant 0 : index
    %120 = vector.load %arg8[%c37_112, %c0_113] : memref<328x128xf32, #tpu.memory_space<vmem>>, vector<288x128xf32>
    %c7 = arith.constant 7 : index
    %c0_114 = arith.constant 0 : index
    %c0_115 = arith.constant 0 : index
    %121 = vector.load %arg6[%c7, %c0_114, %c0_115] : memref<9x128x128xf32, #tpu.memory_space<vmem>>, vector<1x128x128xf32>
    %122 = vector.shape_cast %121 : vector<1x128x128xf32> to vector<128x128xf32>
    %cst_116 = arith.constant dense<0.000000e+00> : vector<288x128xf32>
    %123 = tpu.matmul %120, %122, %cst_116 {dimension_numbers = #tpu.dot_dimension_numbers<[1], [0], [0], [1], [0, 0, 1, 1], [], []>} : vector<288x128xf32>, vector<128x128xf32>, vector<288x128xf32> -> vector<288x128xf32>
    %c0_117 = arith.constant 0 : index
    %c0_118 = arith.constant 0 : index
    %124 = vector.load %arg9[%c0_117, %c0_118] : memref<288x128xf32, #tpu.memory_space<vmem>>, vector<288x128xf32>
    %125 = arith.addf %124, %123 : vector<288x128xf32>
    %c0_119 = arith.constant 0 : index
    %c0_120 = arith.constant 0 : index
    %126 = vector.load %arg9[%c0_119, %c0_120] : memref<288x128xf32, #tpu.memory_space<vmem>>, vector<288x128xf32>
    tpu.vector_store %arg9[%c0_119, %c0_120], %125 {strides = array<i32>} : memref<288x128xf32, #tpu.memory_space<vmem>>, vector<288x128xf32>,
    %c38 = arith.constant 38 : index
    %c0_121 = arith.constant 0 : index
    %127 = vector.load %arg8[%c38, %c0_121] : memref<328x128xf32, #tpu.memory_space<vmem>>, vector<288x128xf32>
    %c8 = arith.constant 8 : index
    %c0_122 = arith.constant 0 : index
    %c0_123 = arith.constant 0 : index
    %128 = vector.load %arg6[%c8, %c0_122, %c0_123] : memref<9x128x128xf32, #tpu.memory_space<vmem>>, vector<1x128x128xf32>
    %129 = vector.shape_cast %128 : vector<1x128x128xf32> to vector<128x128xf32>
    %cst_124 = arith.constant dense<0.000000e+00> : vector<288x128xf32>
    %130 = tpu.matmul %127, %129, %cst_124 {dimension_numbers = #tpu.dot_dimension_numbers<[1], [0], [0], [1], [0, 0, 1, 1], [], []>} : vector<288x128xf32>, vector<128x128xf32>, vector<288x128xf32> -> vector<288x128xf32>
    %c0_125 = arith.constant 0 : index
    %c0_126 = arith.constant 0 : index
    %131 = vector.load %arg9[%c0_125, %c0_126] : memref<288x128xf32, #tpu.memory_space<vmem>>, vector<288x128xf32>
    %132 = arith.addf %131, %130 : vector<288x128xf32>
    %c0_127 = arith.constant 0 : index
    %c0_128 = arith.constant 0 : index
    %133 = vector.load %arg9[%c0_127, %c0_128] : memref<288x128xf32, #tpu.memory_space<vmem>>, vector<288x128xf32>
    tpu.vector_store %arg9[%c0_127, %c0_128], %132 {strides = array<i32>} : memref<288x128xf32, #tpu.memory_space<vmem>>, vector<288x128xf32>,
    %c0_129 = arith.constant 0 : index
    %c0_130 = arith.constant 0 : index
    %134 = vector.load %arg9[%c0_129, %c0_130] : memref<288x128xf32, #tpu.memory_space<vmem>>, vector<16x4xf32>
    %c0_131 = arith.constant 0 : index
    %c0_132 = arith.constant 0 : index
    %c8_133 = arith.constant 8 : index
    %135 = vector.load %arg7[%c0_131, %c0_132, %c8_133] : memref<1x256x12xf32, #tpu.memory_space<vmem>>, vector<1x16x4xf32>
    %136 = vector.shape_cast %135 : vector<1x16x4xf32> to vector<16x4xf32>
    %137 = vector.shape_cast %134 : vector<16x4xf32> to vector<1x16x4xf32>
    tpu.vector_store %arg7[%c0_131, %c0_132, %c8_133], %137 {strides = array<i32>} : memref<1x256x12xf32, #tpu.memory_space<vmem>>, vector<1x16x4xf32>,
    %c18_134 = arith.constant 18 : index
    %c0_135 = arith.constant 0 : index
    %138 = vector.load %arg9[%c18_134, %c0_135] : memref<288x128xf32, #tpu.memory_space<vmem>>, vector<16x4xf32>
    %c0_136 = arith.constant 0 : index
    %c16 = arith.constant 16 : index
    %c8_137 = arith.constant 8 : index
    %139 = vector.load %arg7[%c0_136, %c16, %c8_137] : memref<1x256x12xf32, #tpu.memory_space<vmem>>, vector<1x16x4xf32>
    %140 = vector.shape_cast %139 : vector<1x16x4xf32> to vector<16x4xf32>
    %141 = vector.shape_cast %138 : vector<16x4xf32> to vector<1x16x4xf32>
    tpu.vector_store %arg7[%c0_136, %c16, %c8_137], %141 {strides = array<i32>} : memref<1x256x12xf32, #tpu.memory_space<vmem>>, vector<1x16x4xf32>,
    %c36_138 = arith.constant 36 : index
    %c0_139 = arith.constant 0 : index
    %142 = vector.load %arg9[%c36_138, %c0_139] : memref<288x128xf32, #tpu.memory_space<vmem>>, vector<16x4xf32>
    %c0_140 = arith.constant 0 : index
    %c32 = arith.constant 32 : index
    %c8_141 = arith.constant 8 : index
    %143 = vector.load %arg7[%c0_140, %c32, %c8_141] : memref<1x256x12xf32, #tpu.memory_space<vmem>>, vector<1x16x4xf32>
    %144 = vector.shape_cast %143 : vector<1x16x4xf32> to vector<16x4xf32>
    %145 = vector.shape_cast %142 : vector<16x4xf32> to vector<1x16x4xf32>
    tpu.vector_store %arg7[%c0_140, %c32, %c8_141], %145 {strides = array<i32>} : memref<1x256x12xf32, #tpu.memory_space<vmem>>, vector<1x16x4xf32>,
    %c54 = arith.constant 54 : index
    %c0_142 = arith.constant 0 : index
    %146 = vector.load %arg9[%c54, %c0_142] : memref<288x128xf32, #tpu.memory_space<vmem>>, vector<16x4xf32>
    %c0_143 = arith.constant 0 : index
    %c48 = arith.constant 48 : index
    %c8_144 = arith.constant 8 : index
    %147 = vector.load %arg7[%c0_143, %c48, %c8_144] : memref<1x256x12xf32, #tpu.memory_space<vmem>>, vector<1x16x4xf32>
    %148 = vector.shape_cast %147 : vector<1x16x4xf32> to vector<16x4xf32>
    %149 = vector.shape_cast %146 : vector<16x4xf32> to vector<1x16x4xf32>
    tpu.vector_store %arg7[%c0_143, %c48, %c8_144], %149 {strides = array<i32>} : memref<1x256x12xf32, #tpu.memory_space<vmem>>, vector<1x16x4xf32>,
    %c72 = arith.constant 72 : index
    %c0_145 = arith.constant 0 : index
    %150 = vector.load %arg9[%c72, %c0_145] : memref<288x128xf32, #tpu.memory_space<vmem>>, vector<16x4xf32>
    %c0_146 = arith.constant 0 : index
    %c64 = arith.constant 64 : index
    %c8_147 = arith.constant 8 : index
    %151 = vector.load %arg7[%c0_146, %c64, %c8_147] : memref<1x256x12xf32, #tpu.memory_space<vmem>>, vector<1x16x4xf32>
    %152 = vector.shape_cast %151 : vector<1x16x4xf32> to vector<16x4xf32>
    %153 = vector.shape_cast %150 : vector<16x4xf32> to vector<1x16x4xf32>
    tpu.vector_store %arg7[%c0_146, %c64, %c8_147], %153 {strides = array<i32>} : memref<1x256x12xf32, #tpu.memory_space<vmem>>, vector<1x16x4xf32>,
    %c90 = arith.constant 90 : index
    %c0_148 = arith.constant 0 : index
    %154 = vector.load %arg9[%c90, %c0_148] : memref<288x128xf32, #tpu.memory_space<vmem>>, vector<16x4xf32>
    %c0_149 = arith.constant 0 : index
    %c80 = arith.constant 80 : index
    %c8_150 = arith.constant 8 : index
    %155 = vector.load %arg7[%c0_149, %c80, %c8_150] : memref<1x256x12xf32, #tpu.memory_space<vmem>>, vector<1x16x4xf32>
    %156 = vector.shape_cast %155 : vector<1x16x4xf32> to vector<16x4xf32>
    %157 = vector.shape_cast %154 : vector<16x4xf32> to vector<1x16x4xf32>
    tpu.vector_store %arg7[%c0_149, %c80, %c8_150], %157 {strides = array<i32>} : memref<1x256x12xf32, #tpu.memory_space<vmem>>, vector<1x16x4xf32>,
    %c108 = arith.constant 108 : index
    %c0_151 = arith.constant 0 : index
    %158 = vector.load %arg9[%c108, %c0_151] : memref<288x128xf32, #tpu.memory_space<vmem>>, vector<16x4xf32>
    %c0_152 = arith.constant 0 : index
    %c96 = arith.constant 96 : index
    %c8_153 = arith.constant 8 : index
    %159 = vector.load %arg7[%c0_152, %c96, %c8_153] : memref<1x256x12xf32, #tpu.memory_space<vmem>>, vector<1x16x4xf32>
    %160 = vector.shape_cast %159 : vector<1x16x4xf32> to vector<16x4xf32>
    %161 = vector.shape_cast %158 : vector<16x4xf32> to vector<1x16x4xf32>
    tpu.vector_store %arg7[%c0_152, %c96, %c8_153], %161 {strides = array<i32>} : memref<1x256x12xf32, #tpu.memory_space<vmem>>, vector<1x16x4xf32>,
    %c126 = arith.constant 126 : index
    %c0_154 = arith.constant 0 : index
    %162 = vector.load %arg9[%c126, %c0_154] : memref<288x128xf32, #tpu.memory_space<vmem>>, vector<16x4xf32>
    %c0_155 = arith.constant 0 : index
    %c112 = arith.constant 112 : index
    %c8_156 = arith.constant 8 : index
    %163 = vector.load %arg7[%c0_155, %c112, %c8_156] : memref<1x256x12xf32, #tpu.memory_space<vmem>>, vector<1x16x4xf32>
    %164 = vector.shape_cast %163 : vector<1x16x4xf32> to vector<16x4xf32>
    %165 = vector.shape_cast %162 : vector<16x4xf32> to vector<1x16x4xf32>
    tpu.vector_store %arg7[%c0_155, %c112, %c8_156], %165 {strides = array<i32>} : memref<1x256x12xf32, #tpu.memory_space<vmem>>, vector<1x16x4xf32>,
    %c144 = arith.constant 144 : index
    %c0_157 = arith.constant 0 : index
    %166 = vector.load %arg9[%c144, %c0_157] : memref<288x128xf32, #tpu.memory_space<vmem>>, vector<16x4xf32>
    %c0_158 = arith.constant 0 : index
    %c128 = arith.constant 128 : index
    %c8_159 = arith.constant 8 : index
    %167 = vector.load %arg7[%c0_158, %c128, %c8_159] : memref<1x256x12xf32, #tpu.memory_space<vmem>>, vector<1x16x4xf32>
    %168 = vector.shape_cast %167 : vector<1x16x4xf32> to vector<16x4xf32>
    %169 = vector.shape_cast %166 : vector<16x4xf32> to vector<1x16x4xf32>
    tpu.vector_store %arg7[%c0_158, %c128, %c8_159], %169 {strides = array<i32>} : memref<1x256x12xf32, #tpu.memory_space<vmem>>, vector<1x16x4xf32>,
    %c162 = arith.constant 162 : index
    %c0_160 = arith.constant 0 : index
    %170 = vector.load %arg9[%c162, %c0_160] : memref<288x128xf32, #tpu.memory_space<vmem>>, vector<16x4xf32>
    %c0_161 = arith.constant 0 : index
    %c144_162 = arith.constant 144 : index
    %c8_163 = arith.constant 8 : index
    %171 = vector.load %arg7[%c0_161, %c144_162, %c8_163] : memref<1x256x12xf32, #tpu.memory_space<vmem>>, vector<1x16x4xf32>
    %172 = vector.shape_cast %171 : vector<1x16x4xf32> to vector<16x4xf32>
    %173 = vector.shape_cast %170 : vector<16x4xf32> to vector<1x16x4xf32>
    tpu.vector_store %arg7[%c0_161, %c144_162, %c8_163], %173 {strides = array<i32>} : memref<1x256x12xf32, #tpu.memory_space<vmem>>, vector<1x16x4xf32>,
    %c180 = arith.constant 180 : index
    %c0_164 = arith.constant 0 : index
    %174 = vector.load %arg9[%c180, %c0_164] : memref<288x128xf32, #tpu.memory_space<vmem>>, vector<16x4xf32>
    %c0_165 = arith.constant 0 : index
    %c160 = arith.constant 160 : index
    %c8_166 = arith.constant 8 : index
    %175 = vector.load %arg7[%c0_165, %c160, %c8_166] : memref<1x256x12xf32, #tpu.memory_space<vmem>>, vector<1x16x4xf32>
    %176 = vector.shape_cast %175 : vector<1x16x4xf32> to vector<16x4xf32>
    %177 = vector.shape_cast %174 : vector<16x4xf32> to vector<1x16x4xf32>
    tpu.vector_store %arg7[%c0_165, %c160, %c8_166], %177 {strides = array<i32>} : memref<1x256x12xf32, #tpu.memory_space<vmem>>, vector<1x16x4xf32>,
    %c198 = arith.constant 198 : index
    %c0_167 = arith.constant 0 : index
    %178 = vector.load %arg9[%c198, %c0_167] : memref<288x128xf32, #tpu.memory_space<vmem>>, vector<16x4xf32>
    %c0_168 = arith.constant 0 : index
    %c176 = arith.constant 176 : index
    %c8_169 = arith.constant 8 : index
    %179 = vector.load %arg7[%c0_168, %c176, %c8_169] : memref<1x256x12xf32, #tpu.memory_space<vmem>>, vector<1x16x4xf32>
    %180 = vector.shape_cast %179 : vector<1x16x4xf32> to vector<16x4xf32>
    %181 = vector.shape_cast %178 : vector<16x4xf32> to vector<1x16x4xf32>
    tpu.vector_store %arg7[%c0_168, %c176, %c8_169], %181 {strides = array<i32>} : memref<1x256x12xf32, #tpu.memory_space<vmem>>, vector<1x16x4xf32>,
    %c216 = arith.constant 216 : index
    %c0_170 = arith.constant 0 : index
    %182 = vector.load %arg9[%c216, %c0_170] : memref<288x128xf32, #tpu.memory_space<vmem>>, vector<16x4xf32>
    %c0_171 = arith.constant 0 : index
    %c192 = arith.constant 192 : index
    %c8_172 = arith.constant 8 : index
    %183 = vector.load %arg7[%c0_171, %c192, %c8_172] : memref<1x256x12xf32, #tpu.memory_space<vmem>>, vector<1x16x4xf32>
    %184 = vector.shape_cast %183 : vector<1x16x4xf32> to vector<16x4xf32>
    %185 = vector.shape_cast %182 : vector<16x4xf32> to vector<1x16x4xf32>
    tpu.vector_store %arg7[%c0_171, %c192, %c8_172], %185 {strides = array<i32>} : memref<1x256x12xf32, #tpu.memory_space<vmem>>, vector<1x16x4xf32>,
    %c234 = arith.constant 234 : index
    %c0_173 = arith.constant 0 : index
    %186 = vector.load %arg9[%c234, %c0_173] : memref<288x128xf32, #tpu.memory_space<vmem>>, vector<16x4xf32>
    %c0_174 = arith.constant 0 : index
    %c208 = arith.constant 208 : index
    %c8_175 = arith.constant 8 : index
    %187 = vector.load %arg7[%c0_174, %c208, %c8_175] : memref<1x256x12xf32, #tpu.memory_space<vmem>>, vector<1x16x4xf32>
    %188 = vector.shape_cast %187 : vector<1x16x4xf32> to vector<16x4xf32>
    %189 = vector.shape_cast %186 : vector<16x4xf32> to vector<1x16x4xf32>
    tpu.vector_store %arg7[%c0_174, %c208, %c8_175], %189 {strides = array<i32>} : memref<1x256x12xf32, #tpu.memory_space<vmem>>, vector<1x16x4xf32>,
    %c252 = arith.constant 252 : index
    %c0_176 = arith.constant 0 : index
    %190 = vector.load %arg9[%c252, %c0_176] : memref<288x128xf32, #tpu.memory_space<vmem>>, vector<16x4xf32>
    %c0_177 = arith.constant 0 : index
    %c224 = arith.constant 224 : index
    %c8_178 = arith.constant 8 : index
    %191 = vector.load %arg7[%c0_177, %c224, %c8_178] : memref<1x256x12xf32, #tpu.memory_space<vmem>>, vector<1x16x4xf32>
    %192 = vector.shape_cast %191 : vector<1x16x4xf32> to vector<16x4xf32>
    %193 = vector.shape_cast %190 : vector<16x4xf32> to vector<1x16x4xf32>
    tpu.vector_store %arg7[%c0_177, %c224, %c8_178], %193 {strides = array<i32>} : memref<1x256x12xf32, #tpu.memory_space<vmem>>, vector<1x16x4xf32>,
    %c270 = arith.constant 270 : index
    %c0_179 = arith.constant 0 : index
    %194 = vector.load %arg9[%c270, %c0_179] : memref<288x128xf32, #tpu.memory_space<vmem>>, vector<16x4xf32>
    %c0_180 = arith.constant 0 : index
    %c240 = arith.constant 240 : index
    %c8_181 = arith.constant 8 : index
    %195 = vector.load %arg7[%c0_180, %c240, %c8_181] : memref<1x256x12xf32, #tpu.memory_space<vmem>>, vector<1x16x4xf32>
    %196 = vector.shape_cast %195 : vector<1x16x4xf32> to vector<16x4xf32>
    %197 = vector.shape_cast %194 : vector<16x4xf32> to vector<1x16x4xf32>
    tpu.vector_store %arg7[%c0_180, %c240, %c8_181], %197 {strides = array<i32>} : memref<1x256x12xf32, #tpu.memory_space<vmem>>, vector<1x16x4xf32>,
    return
  }
  func.func @transform_0(%arg0: i32) -> (i32, i32, i32) {
    %c0_i32 = arith.constant 0 : i32
    %c0_i32_0 = arith.constant 0 : i32
    %c0_i32_1 = arith.constant 0 : i32
    return %arg0, %c0_i32, %c0_i32_0 : i32, i32, i32
  }
  func.func @transform_1(%arg0: i32) -> (i32, i32) {
    %c0_i32 = arith.constant 0 : i32
    %c0_i32_0 = arith.constant 0 : i32
    %c0_i32_1 = arith.constant 0 : i32
    return %c0_i32, %c0_i32_0 : i32, i32
  }
  func.func @transform_2(%arg0: i32) -> (i32, i32) {
    %c0_i32 = arith.constant 0 : i32
    %c0_i32_0 = arith.constant 0 : i32
    %c0_i32_1 = arith.constant 0 : i32
    return %c0_i32, %c0_i32_0 : i32, i32
  }
  func.func @transform_3(%arg0: i32) -> (i32, i32) {
    %c0_i32 = arith.constant 0 : i32
    %c0_i32_0 = arith.constant 0 : i32
    %c0_i32_1 = arith.constant 0 : i32
    return %c0_i32, %c0_i32_0 : i32, i32
  }
  func.func @transform_4(%arg0: i32) -> (i32, i32) {
    %c0_i32 = arith.constant 0 : i32
    %c0_i32_0 = arith.constant 0 : i32
    %c0_i32_1 = arith.constant 0 : i32
    return %c0_i32, %c0_i32_0 : i32, i32
  }
  func.func @transform_5(%arg0: i32) -> (i32, i32, i32) {
    %c0_i32 = arith.constant 0 : i32
    %c0_i32_0 = arith.constant 0 : i32
    %c0_i32_1 = arith.constant 0 : i32
    %c0_i32_2 = arith.constant 0 : i32
    return %c0_i32, %c0_i32_0, %c0_i32_1 : i32, i32, i32
  }
  func.func @transform_6(%arg0: i32) -> (i32, i32, i32) {
    %c0_i32 = arith.constant 0 : i32
    %c0_i32_0 = arith.constant 0 : i32
    %c0_i32_1 = arith.constant 0 : i32
    return %arg0, %c0_i32, %c0_i32_0 : i32, i32, i32
  }
}

</mosaic_0001>

<llo_original>
// kernel: dense_layer_forward_nhwc.1
$region0: #{dense_layer_forward_nhwc.1}
  #allocation0 [shape = 'u32[]', space=smem, size = 0x4, offset = 0x4, fixed_abs, tag = 'smem constant byte address 0x4 - core index']
  #allocation1 [shape = 'u32[144,128]{1,0:T(1,128)}', space=vmem, size = 0x12000, scoped, tag = 'internal scratch']
  #allocation2 [shape = 'f32[328,128]{1,0:T(8,128)}', space=vmem, size = 0x29000, scoped, tag = 'scratch operand']
  #allocation3 [shape = 'f32[288,128]{1,0:T(8,128)}', space=vmem, size = 0x24000, scoped, tag = 'scratch operand']
  %s0 = inlined_call_operand.hbm [shape: f32[2,256,8], index: 0, kind: input, shape index: {}]
  %s1 = inlined_call_operand.hbm [shape: f32[1,8], index: 1, kind: input, shape index: {}]
  %s2 = inlined_call_operand.hbm [shape: f32[1,8], index: 2, kind: input, shape index: {}]
  %s3 = inlined_call_operand.hbm [shape: f32[8,128], index: 3, kind: input, shape index: {}]
  %s4 = inlined_call_operand.hbm [shape: f32[1,128], index: 4, kind: input, shape index: {}]
  %s5 = inlined_call_operand.hbm [shape: f32[9,128,128], index: 5, kind: input, shape index: {}]
  %s6 = inlined_call_operand.hbm [shape: f32[2,256,12], index: 6, kind: output, shape index: {}]
  %s7 = sld [smem:[#allocation0]]
  $region81: #{dense_layer_forward_nhwc.1} parent=0
    _
  %s9 = ssub.s32 1, %s7
  %s10 = scalar_select 0, %s9, %s7
  $region1: #{dense_layer_forward_nhwc.1} parent=0
    #allocation4 [shape = 'u8[262144]{0}', space=vmem, size = 0x40000, scoped, tag = 'input window, operand 0']
    #allocation5 [shape = 's32[2]{0}', space=sflag, size = 0x8, scoped, tag = 'scoped memory for dense_layer_forward_nhwc.1']
    #allocation6 [shape = 's32[2]{0}', space=sflag, size = 0x8, scoped, tag = 'scoped memory for dense_layer_forward_nhwc.1']
    #allocation7 [shape = 'u8[512]{0}', space=vmem, size = 0x400, scoped, tag = 'input window, operand 1, single buffered']
    #allocation8 [shape = 's32[1]{0}', space=sflag, size = 0x4, scoped, tag = 'scoped memory for dense_layer_forward_nhwc.1']
    #allocation9 [shape = 'u8[512]{0}', space=vmem, size = 0x400, scoped, tag = 'input window, operand 2, single buffered']
    #allocation10 [shape = 'u8[4096]{0}', space=vmem, size = 0x1000, scoped, tag = 'input window, operand 3, single buffered']
    #allocation11 [shape = 's32[1]{0}', space=sflag, size = 0x4, scoped, tag = 'scoped memory for dense_layer_forward_nhwc.1']
    #allocation12 [shape = 'u8[512]{0}', space=vmem, size = 0x400, scoped, tag = 'input window, operand 4, single buffered']
    #allocation13 [shape = 'u8[589824]{0}', space=vmem, size = 0x90000, scoped, tag = 'input window, operand 5, single buffered']
    #allocation14 [shape = 's32[1]{0}', space=sflag, size = 0x4, scoped, tag = 'scoped memory for dense_layer_forward_nhwc.1']
    #allocation15 [shape = 'u8[262144]{0}', space=vmem, size = 0x40000, scoped, tag = 'output window, operand 0']
    %11 = vsyncpa [#allocation5], 0
    %s12 = scalar_lea.sflag [#allocation5], 1
    %13 = vsyncpa %s12, 0
    %14 = vsyncpa [#allocation8], 0
    %15 = vsyncpa [#allocation11], 0
    %16 = vsyncpa [#allocation14], 0
    %17 = vsyncpa [#allocation6], 0
    %s18 = scalar_lea.sflag [#allocation6], 1
    %19 = vsyncpa %s18, 0
    loop: start=0, step=1, limit=4
    $region2: #{dense_layer_forward_nhwc.1} parent=1 // loop_pre_header
      _
    $region3: #{dense_layer_forward_nhwc.1} parent=1 // loop_header
      %s21 = sphi 0, %s25
      %p22 = scmp.ge.s32.totalorder %s21, 4
      %s31 = sphi 0, %s33
      %s34 = sphi 0, %s31
      %s35 = sphi 0, %s34
      %s51 = sphi 0, %s35
      %s55 = sphi 0, %s55
      %s57 = sphi 0, %s55
      %s58 = sphi 0, %s57
      %s72 = sphi 0, %s58
      %s76 = sphi 0, %s76
      %s78 = sphi 0, %s76
      %s79 = sphi 0, %s78
      %s93 = sphi 0, %s79
      %s97 = sphi 0, %s97
      %s99 = sphi 0, %s97
      %s100 = sphi 0, %s99
      %s114 = sphi 0, %s100
      %s118 = sphi 0, %s118
      %s120 = sphi 0, %s118
      %s121 = sphi 0, %s120
      %s135 = sphi 0, %s121
      %s139 = sphi 0, %s139
      %s141 = sphi 0, %s139
      %s142 = sphi 0, %s141
      %s156 = sphi 0, %s142
      %s162 = sphi 0, %s164
      %s165 = sphi 0, %s162
      %s166 = sphi 0, %s165
      %s182 = sphi 0, %s166
    $region4: #{dense_layer_forward_nhwc.1} parent=1 // loop_header_branch
      %24 = sbr.rel (%p22) target = $region8
    $region5: #{dense_layer_forward_nhwc.1} parent=1 // loop_body
      %s26 = ssub.s32 %s21, 1
      %s27 = ssub.s32 %s21, 2
      %s28 = sadd.s32 %s21, 1
      %s29 = ssub.s32 %s21, %s28
      %p30 = scmp.eq.s32.totalorder %s29, 0
      %s32 = sadd.s32 %s31, 1
      %s33 = scalar_select %p30, %s31, %s32
      %p36 = pneg %p30
      %p37 = scmp.eq.s32.totalorder %s21, 1
      %p38 = por %p36, %p37
      %p39 = scmp.ne.s32.totalorder %s31, %s34
      %p40 = scmp.eq.s32.totalorder %s21, 0
      %p41 = por %p39, %p40
      %p42 = scmp.ne.s32.totalorder %s31, %s34
      %p43 = scmp.eq.s32.totalorder %s26, 1
      %p44 = por %p42, %p43
      %p45 = scmp.ne.s32.totalorder %s34, %s35
      %p46 = scmp.eq.s32.totalorder %s26, 0
      %p47 = por %p45, %p46
      %p48 = scmp.ne.s32.totalorder %s34, %s35
      %p49 = scmp.eq.s32.totalorder %s27, 1
      %p50 = por %p48, %p49
      %p52 = scmp.ne.s32.totalorder %s35, %s51
      %p53 = scmp.eq.s32.totalorder %s27, 0
      %p54 = por %p52, %p53
      %s56 = sadd.s32 %s55, 1
      %p59 = scmp.eq.s32.totalorder %s21, 1
      %p60 = scmp.ne.s32.totalorder %s55, %s57
      %p61 = scmp.eq.s32.totalorder %s21, 0
      %p62 = por %p60, %p61
      %p63 = scmp.ne.s32.totalorder %s55, %s57
      %p64 = scmp.eq.s32.totalorder %s26, 1
      %p65 = por %p63, %p64
      %p66 = scmp.ne.s32.totalorder %s57, %s58
      %p67 = scmp.eq.s32.totalorder %s26, 0
      %p68 = por %p66, %p67
      %p69 = scmp.ne.s32.totalorder %s57, %s58
      %p70 = scmp.eq.s32.totalorder %s27, 1
      %p71 = por %p69, %p70
      %p73 = scmp.ne.s32.totalorder %s58, %s72
      %p74 = scmp.eq.s32.totalorder %s27, 0
      %p75 = por %p73, %p74
      %s77 = sadd.s32 %s76, 1
      %p80 = scmp.eq.s32.totalorder %s21, 1
      %p81 = scmp.ne.s32.totalorder %s76, %s78
      %p82 = scmp.eq.s32.totalorder %s21, 0
      %p83 = por %p81, %p82
      %p84 = scmp.ne.s32.totalorder %s76, %s78
      %p85 = scmp.eq.s32.totalorder %s26, 1
      %p86 = por %p84, %p85
      %p87 = scmp.ne.s32.totalorder %s78, %s79
      %p88 = scmp.eq.s32.totalorder %s26, 0
      %p89 = por %p87, %p88
      %p90 = scmp.ne.s32.totalorder %s78, %s79
      %p91 = scmp.eq.s32.totalorder %s27, 1
      %p92 = por %p90, %p91
      %p94 = scmp.ne.s32.totalorder %s79, %s93
      %p95 = scmp.eq.s32.totalorder %s27, 0
      %p96 = por %p94, %p95
      %s98 = sadd.s32 %s97, 1
      %p101 = scmp.eq.s32.totalorder %s21, 1
      %p102 = scmp.ne.s32.totalorder %s97, %s99
      %p103 = scmp.eq.s32.totalorder %s21, 0
      %p104 = por %p102, %p103
      %p105 = scmp.ne.s32.totalorder %s97, %s99
      %p106 = scmp.eq.s32.totalorder %s26, 1
      %p107 = por %p105, %p106
      %p108 = scmp.ne.s32.totalorder %s99, %s100
      %p109 = scmp.eq.s32.totalorder %s26, 0
      %p110 = por %p108, %p109
      %p111 = scmp.ne.s32.totalorder %s99, %s100
      %p112 = scmp.eq.s32.totalorder %s27, 1
      %p113 = por %p111, %p112
      %p115 = scmp.ne.s32.totalorder %s100, %s114
      %p116 = scmp.eq.s32.totalorder %s27, 0
      %p117 = por %p115, %p116
      %s119 = sadd.s32 %s118, 1
      %p122 = scmp.eq.s32.totalorder %s21, 1
      %p123 = scmp.ne.s32.totalorder %s118, %s120
      %p124 = scmp.eq.s32.totalorder %s21, 0
      %p125 = por %p123, %p124
      %p126 = scmp.ne.s32.totalorder %s118, %s120
      %p127 = scmp.eq.s32.totalorder %s26, 1
      %p128 = por %p126, %p127
      %p129 = scmp.ne.s32.totalorder %s120, %s121
      %p130 = scmp.eq.s32.totalorder %s26, 0
      %p131 = por %p129, %p130
      %p132 = scmp.ne.s32.totalorder %s120, %s121
      %p133 = scmp.eq.s32.totalorder %s27, 1
      %p134 = por %p132, %p133
      %p136 = scmp.ne.s32.totalorder %s121, %s135
      %p137 = scmp.eq.s32.totalorder %s27, 0
      %p138 = por %p136, %p137
      %s140 = sadd.s32 %s139, 1
      %p143 = scmp.eq.s32.totalorder %s21, 1
      %p144 = scmp.ne.s32.totalorder %s139, %s141
      %p145 = scmp.eq.s32.totalorder %s21, 0
      %p146 = por %p144, %p145
      %p147 = scmp.ne.s32.totalorder %s139, %s141
      %p148 = scmp.eq.s32.totalorder %s26, 1
      %p149 = por %p147, %p148
      %p150 = scmp.ne.s32.totalorder %s141, %s142
      %p151 = scmp.eq.s32.totalorder %s26, 0
      %p152 = por %p150, %p151
      %p153 = scmp.ne.s32.totalorder %s141, %s142
      %p154 = scmp.eq.s32.totalorder %s27, 1
      %p155 = por %p153, %p154
      %p157 = scmp.ne.s32.totalorder %s142, %s156
      %p158 = scmp.eq.s32.totalorder %s27, 0
      %p159 = por %p157, %p158
      %s160 = ssub.s32 %s21, %s28
      %p161 = scmp.eq.s32.totalorder %s160, 0
      %s163 = sadd.s32 %s162, 1
      %s164 = scalar_select %p161, %s162, %s163
      %p167 = pneg %p161
      %p168 = scmp.eq.s32.totalorder %s21, 1
      %p169 = por %p167, %p168
      %p170 = scmp.ne.s32.totalorder %s162, %s165
      %p171 = scmp.eq.s32.totalorder %s21, 0
      %p172 = por %p170, %p171
      %p173 = scmp.ne.s32.totalorder %s162, %s165
      %p174 = scmp.eq.s32.totalorder %s26, 1
      %p175 = por %p173, %p174
      %p176 = scmp.ne.s32.totalorder %s165, %s166
      %p177 = scmp.eq.s32.totalorder %s26, 0
      %p178 = por %p176, %p177
      %p179 = scmp.ne.s32.totalorder %s165, %s166
      %p180 = scmp.eq.s32.totalorder %s27, 1
      %p181 = por %p179, %p180
      %p183 = scmp.ne.s32.totalorder %s166, %s182
      %p184 = scmp.eq.s32.totalorder %s27, 0
      %p185 = por %p183, %p184
      %p186 = scmp.le.s32.totalorder 1, %s21
      %p187 = scmp.lt.s32.totalorder %s21, 3
      %p188 = pnand %p186, %p187
      %p189 = pneg %p188
      // Predicated region
      $region9: #{dense_layer_forward_nhwc.1} parent=5 // pred_check
        _
      $region10: #{dense_layer_forward_nhwc.1} parent=5 // pred_check_branch
        %191 = sbr.rel (%p188) target = $region12
      $region11: #{dense_layer_forward_nhwc.1} parent=5 // pred_region
        %s192 = ssub.s32 %s21, 1
        // Predicated region
        $region13: #{dense_layer_forward_nhwc.1} parent=11 // pred_check
          %p193 = pneg %p68
        $region14: #{dense_layer_forward_nhwc.1} parent=11 // pred_check_branch
          %195 = sbr.rel (%p193) target = $region16
        $region15: #{dense_layer_forward_nhwc.1} parent=11 // pred_region
          %s197 = ssub.s32 16, 16
          %198 = vsyncadd [#allocation8], %s197
          %s200 = sshll.u32 [#allocation7], 4
          %s201 = int_to_ptr.vmem [resolvable:$true] %s200
          %203 = dma.hbm_to_vmem [thread:$0]  %s1, 16, %s201, [#allocation8]
        $region16: #{dense_layer_forward_nhwc.1} parent=11 // pred_fallthru
          _
        // Predicated region
        $region17: #{dense_layer_forward_nhwc.1} parent=11 // pred_check
          %p204 = pneg %p89
        $region18: #{dense_layer_forward_nhwc.1} parent=11 // pred_check_branch
          %206 = sbr.rel (%p204) target = $region20
        $region19: #{dense_layer_forward_nhwc.1} parent=11 // pred_region
          %s208 = ssub.s32 16, 16
          %209 = vsyncadd [#allocation8], %s208
          %s211 = sshll.u32 [#allocation9], 4
          %s212 = int_to_ptr.vmem [resolvable:$true] %s211
          %214 = dma.hbm_to_vmem [thread:$0]  %s2, 16, %s212, [#allocation8]
        $region20: #{dense_layer_forward_nhwc.1} parent=11 // pred_fallthru
          _
        // Predicated region
        $region21: #{dense_layer_forward_nhwc.1} parent=11 // pred_check
          %p215 = pneg %p110
        $region22: #{dense_layer_forward_nhwc.1} parent=11 // pred_check_branch
          %217 = sbr.rel (%p215) target = $region24
        $region23: #{dense_layer_forward_nhwc.1} parent=11 // pred_region
          %s219 = ssub.s32 128, 128
          %220 = vsyncadd [#allocation11], %s219
          %s222 = sshll.u32 [#allocation10], 4
          %s223 = int_to_ptr.vmem [resolvable:$true] %s222
          %225 = dma.hbm_to_vmem [thread:$0]  %s3, 128, %s223, [#allocation11]
        $region24: #{dense_layer_forward_nhwc.1} parent=11 // pred_fallthru
          _
        // Predicated region
        $region25: #{dense_layer_forward_nhwc.1} parent=11 // pred_check
          %p226 = pneg %p131
        $region26: #{dense_layer_forward_nhwc.1} parent=11 // pred_check_branch
          %228 = sbr.rel (%p226) target = $region28
        $region27: #{dense_layer_forward_nhwc.1} parent=11 // pred_region
          %s230 = ssub.s32 16, 16
          %231 = vsyncadd [#allocation11], %s230
          %s233 = sshll.u32 [#allocation12], 4
          %s234 = int_to_ptr.vmem [resolvable:$true] %s233
          %236 = dma.hbm_to_vmem [thread:$0]  %s4, 16, %s234, [#allocation11]
        $region28: #{dense_layer_forward_nhwc.1} parent=11 // pred_fallthru
          _
        // Predicated region
        $region29: #{dense_layer_forward_nhwc.1} parent=11 // pred_check
          %p237 = pneg %p152
        $region30: #{dense_layer_forward_nhwc.1} parent=11 // pred_check_branch
          %239 = sbr.rel (%p237) target = $region32
        $region31: #{dense_layer_forward_nhwc.1} parent=11 // pred_region
          %s241 = ssub.s32 18432, 18432
          %242 = vsyncadd [#allocation14], %s241
          %s243 = sshll.u32 [#allocation13], 4
          %s244 = int_to_ptr.vmem [resolvable:$true] %s243
          %249 = dma.hbm_to_vmem [thread:$0]  %s5, 18432, %s244, [#allocation14], 128, 128, 8
        $region32: #{dense_layer_forward_nhwc.1} parent=11 // pred_fallthru
          _
      $region12: #{dense_layer_forward_nhwc.1} parent=5 // pred_fallthru
        _
      %p250 = scmp.lt.s32.totalorder %s21, 2
      // Predicated region
      $region33: #{dense_layer_forward_nhwc.1} parent=5 // pred_check
        %p251 = pneg %p250
      $region34: #{dense_layer_forward_nhwc.1} parent=5 // pred_check_branch
        %253 = sbr.rel (%p251) target = $region36
      $region35: #{dense_layer_forward_nhwc.1} parent=5 // pred_region
        // Predicated region
        $region37: #{dense_layer_forward_nhwc.1} parent=35 // pred_check
          %p254 = pneg %p41
        $region38: #{dense_layer_forward_nhwc.1} parent=35 // pred_check_branch
          %256 = sbr.rel (%p254) target = $region40
        $region39: #{dense_layer_forward_nhwc.1} parent=35 // pred_region
          %s257 = sand.u32 %s31, 1
          %s258 = scalar_lea.sflag [#allocation5], %s257
          %s259 = sand.u32 %s31, 1
          %s260 = smul.addr %s259, 256
          %s261 = scalar_lea.vmem [#allocation4], %s260
          %s263 = ssub.s32 4096, 4096
          %264 = vsyncadd %s258, %s263
          %s265 = smul.addr %s21, 32
          %s266 = smul.addr %s265, 128
          %s267 = scalar_lea.hbm %s0, %s266
          %s268 = sshll.u32 %s261, 4
          %s269 = int_to_ptr.vmem [resolvable:$true] %s268
          %274 = dma.hbm_to_vmem [thread:$0]  %s267, 4096, %s269, %s258, 128, 128, 8
        $region40: #{dense_layer_forward_nhwc.1} parent=35 // pred_fallthru
          _
      $region36: #{dense_layer_forward_nhwc.1} parent=5 // pred_fallthru
        _
      %p275 = scmp.le.s32.totalorder 1, %s21
      %p276 = scmp.lt.s32.totalorder %s21, 3
      %p277 = pnand %p275, %p276
      %p278 = pneg %p277
      // Predicated region
      $region41: #{dense_layer_forward_nhwc.1} parent=5 // pred_check
        _
      $region42: #{dense_layer_forward_nhwc.1} parent=5 // pred_check_branch
        %280 = sbr.rel (%p277) target = $region44
      $region43: #{dense_layer_forward_nhwc.1} parent=5 // pred_region
        %s281 = ssub.s32 %s21, 1
        %s282 = sand.u32 %s34, 1
        %s283 = scalar_lea.sflag [#allocation5], %s282
        %s284 = sand.u32 %s34, 1
        %s285 = smul.addr %s284, 256
        %s286 = scalar_lea.vmem [#allocation4], %s285
        // Predicated region
        $region45: #{dense_layer_forward_nhwc.1} parent=43 // pred_check
          %p287 = pneg %p47
        $region46: #{dense_layer_forward_nhwc.1} parent=43 // pred_check_branch
          %289 = sbr.rel (%p287) target = $region48
        $region47: #{dense_layer_forward_nhwc.1} parent=43 // pred_region
          %290 = dma.done %s283, 4096
        $region48: #{dense_layer_forward_nhwc.1} parent=43 // pred_fallthru
          _
        // Predicated region
        $region49: #{dense_layer_forward_nhwc.1} parent=43 // pred_check
          %p291 = pneg %p68
        $region50: #{dense_layer_forward_nhwc.1} parent=43 // pred_check_branch
          %293 = sbr.rel (%p291) target = $region52
        $region51: #{dense_layer_forward_nhwc.1} parent=43 // pred_region
          %294 = dma.done [#allocation8], 16
        $region52: #{dense_layer_forward_nhwc.1} parent=43 // pred_fallthru
          _
        // Predicated region
        $region53: #{dense_layer_forward_nhwc.1} parent=43 // pred_check
          %p295 = pneg %p89
        $region54: #{dense_layer_forward_nhwc.1} parent=43 // pred_check_branch
          %297 = sbr.rel (%p295) target = $region56
        $region55: #{dense_layer_forward_nhwc.1} parent=43 // pred_region
          %298 = dma.done [#allocation8], 16
        $region56: #{dense_layer_forward_nhwc.1} parent=43 // pred_fallthru
          _
        // Predicated region
        $region57: #{dense_layer_forward_nhwc.1} parent=43 // pred_check
          %p299 = pneg %p110
        $region58: #{dense_layer_forward_nhwc.1} parent=43 // pred_check_branch
          %301 = sbr.rel (%p299) target = $region60
        $region59: #{dense_layer_forward_nhwc.1} parent=43 // pred_region
          %302 = dma.done [#allocation11], 128
        $region60: #{dense_layer_forward_nhwc.1} parent=43 // pred_fallthru
          _
        // Predicated region
        $region61: #{dense_layer_forward_nhwc.1} parent=43 // pred_check
          %p303 = pneg %p131
        $region62: #{dense_layer_forward_nhwc.1} parent=43 // pred_check_branch
          %305 = sbr.rel (%p303) target = $region64
        $region63: #{dense_layer_forward_nhwc.1} parent=43 // pred_region
          %306 = dma.done [#allocation11], 16
        $region64: #{dense_layer_forward_nhwc.1} parent=43 // pred_fallthru
          _
        // Predicated region
        $region65: #{dense_layer_forward_nhwc.1} parent=43 // pred_check
          %p307 = pneg %p152
        $region66: #{dense_layer_forward_nhwc.1} parent=43 // pred_check_branch
          %309 = sbr.rel (%p307) target = $region68
        $region67: #{dense_layer_forward_nhwc.1} parent=43 // pred_region
          %310 = dma.done [#allocation14], 18432
        $region68: #{dense_layer_forward_nhwc.1} parent=43 // pred_fallthru
          _
        %s311 = sand.u32 %s34, 1
        %s312 = scalar_lea.sflag [#allocation5], %s311
        %s313 = sand.u32 %s34, 1
        %s314 = smul.addr %s313, 256
        %s315 = scalar_lea.vmem [#allocation4], %s314
        %p316 = pneg %p47
        %p317 = pneg %p44
        %p318 = pneg %p68
        %p319 = pneg %p65
        %p320 = pneg %p89
        %p321 = pneg %p86
        %p322 = pneg %p110
        %p323 = pneg %p107
        %p324 = pneg %p131
        %p325 = pneg %p128
        %p326 = pneg %p152
        %p327 = pneg %p149
        %p328 = pneg %p178
        %p329 = pneg %p175
        %s330 = sand.u32 %s165, 1
        %s331 = scalar_lea.sflag [#allocation6], %s330
        %s332 = sand.u32 %s165, 1
        %s333 = smul.addr %s332, 256
        %s334 = scalar_lea.vmem [#allocation15], %s333
        %v335 = vld [vmem:[%s286] sm:$0xff]
        %v336 = vld [vmem:[%s286 + $0x8] sm:$0xff]
        %v337 = vld [vmem:[%s286 + $0x10] sm:$0xff]
        %v338 = vld [vmem:[%s286 + $0x18] sm:$0xff]
        %v339 = vld [vmem:[%s286 + $0x20] sm:$0xff]
        %v340 = vld [vmem:[%s286 + $0x28] sm:$0xff]
        %v341 = vld [vmem:[%s286 + $0x30] sm:$0xff]
        %v342 = vld [vmem:[%s286 + $0x38] sm:$0xff]
        %v343 = vld [vmem:[%s286 + $0x40] sm:$0xff]
        %v344 = vld [vmem:[%s286 + $0x48] sm:$0xff]
        %v345 = vld [vmem:[%s286 + $0x50] sm:$0xff]
        %v346 = vld [vmem:[%s286 + $0x58] sm:$0xff]
        %v347 = vld [vmem:[%s286 + $0x60] sm:$0xff]
        %v348 = vld [vmem:[%s286 + $0x68] sm:$0xff]
        %v349 = vld [vmem:[%s286 + $0x70] sm:$0xff]
        %v350 = vld [vmem:[%s286 + $0x78] sm:$0xff]
        %v351 = vld [vmem:[%s286 + $0x80] sm:$0xff]
        %v352 = vld [vmem:[%s286 + $0x88] sm:$0xff]
        %v353 = vld [vmem:[%s286 + $0x90] sm:$0xff]
        %v354 = vld [vmem:[%s286 + $0x98] sm:$0xff]
        %v355 = vld [vmem:[%s286 + $0xa0] sm:$0xff]
        %v356 = vld [vmem:[%s286 + $0xa8] sm:$0xff]
        %v357 = vld [vmem:[%s286 + $0xb0] sm:$0xff]
        %v358 = vld [vmem:[%s286 + $0xb8] sm:$0xff]
        %v359 = vld [vmem:[%s286 + $0xc0] sm:$0xff]
        %v360 = vld [vmem:[%s286 + $0xc8] sm:$0xff]
        %v361 = vld [vmem:[%s286 + $0xd0] sm:$0xff]
        %v362 = vld [vmem:[%s286 + $0xd8] sm:$0xff]
        %v363 = vld [vmem:[%s286 + $0xe0] sm:$0xff]
        %v364 = vld [vmem:[%s286 + $0xe8] sm:$0xff]
        %v365 = vld [vmem:[%s286 + $0xf0] sm:$0xff]
        %v366 = vld [vmem:[%s286 + $0xf8] sm:$0xff]
        %vm367 = vcmask 64512
        %368 = vst.msk [vmem:[%s334] sm:$0xff] %vm367, %v335
        %369 = vst.msk [vmem:[%s334 + $0x8] sm:$0xff] %vm367, %v336
        %370 = vst.msk [vmem:[%s334 + $0x10] sm:$0xff] %vm367, %v337
        %371 = vst.msk [vmem:[%s334 + $0x18] sm:$0xff] %vm367, %v338
        %372 = vst.msk [vmem:[%s334 + $0x20] sm:$0xff] %vm367, %v339
        %373 = vst.msk [vmem:[%s334 + $0x28] sm:$0xff] %vm367, %v340
        %374 = vst.msk [vmem:[%s334 + $0x30] sm:$0xff] %vm367, %v341
        %375 = vst.msk [vmem:[%s334 + $0x38] sm:$0xff] %vm367, %v342
        %376 = vst.msk [vmem:[%s334 + $0x40] sm:$0xff] %vm367, %v343
        %377 = vst.msk [vmem:[%s334 + $0x48] sm:$0xff] %vm367, %v344
        %378 = vst.msk [vmem:[%s334 + $0x50] sm:$0xff] %vm367, %v345
        %379 = vst.msk [vmem:[%s334 + $0x58] sm:$0xff] %vm367, %v346
        %380 = vst.msk [vmem:[%s334 + $0x60] sm:$0xff] %vm367, %v347
        %381 = vst.msk [vmem:[%s334 + $0x68] sm:$0xff] %vm367, %v348
        %382 = vst.msk [vmem:[%s334 + $0x70] sm:$0xff] %vm367, %v349
        %383 = vst.msk [vmem:[%s334 + $0x78] sm:$0xff] %vm367, %v350
        %384 = vst.msk [vmem:[%s334 + $0x80] sm:$0xff] %vm367, %v351
        %385 = vst.msk [vmem:[%s334 + $0x88] sm:$0xff] %vm367, %v352
        %386 = vst.msk [vmem:[%s334 + $0x90] sm:$0xff] %vm367, %v353
        %387 = vst.msk [vmem:[%s334 + $0x98] sm:$0xff] %vm367, %v354
        %388 = vst.msk [vmem:[%s334 + $0xa0] sm:$0xff] %vm367, %v355
        %389 = vst.msk [vmem:[%s334 + $0xa8] sm:$0xff] %vm367, %v356
        %390 = vst.msk [vmem:[%s334 + $0xb0] sm:$0xff] %vm367, %v357
        %391 = vst.msk [vmem:[%s334 + $0xb8] sm:$0xff] %vm367, %v358
        %392 = vst.msk [vmem:[%s334 + $0xc0] sm:$0xff] %vm367, %v359
        %393 = vst.msk [vmem:[%s334 + $0xc8] sm:$0xff] %vm367, %v360
        %394 = vst.msk [vmem:[%s334 + $0xd0] sm:$0xff] %vm367, %v361
        %395 = vst.msk [vmem:[%s334 + $0xd8] sm:$0xff] %vm367, %v362
        %396 = vst.msk [vmem:[%s334 + $0xe0] sm:$0xff] %vm367, %v363
        %397 = vst.msk [vmem:[%s334 + $0xe8] sm:$0xff] %vm367, %v364
        %398 = vst.msk [vmem:[%s334 + $0xf0] sm:$0xff] %vm367, %v365
        %399 = vst.msk [vmem:[%s334 + $0xf8] sm:$0xff] %vm367, %v366
        %v400 = vld [vmem:[#allocation7] sm:$0x1]
        %v402 = vlaneseq
        %v403 = vshrl.u32 %v402, 7
        %v404 = vsub.s32 0, %v403
        %v405 = vrot.slane %v400, %v404
        %v407 = vmul.f32 %v335, %v405
        %v408 = vmul.f32 %v336, %v405
        %v409 = vmul.f32 %v337, %v405
        %v410 = vmul.f32 %v338, %v405
        %v411 = vmul.f32 %v339, %v405
        %v412 = vmul.f32 %v340, %v405
        %v413 = vmul.f32 %v341, %v405
        %v414 = vmul.f32 %v342, %v405
        %v415 = vmul.f32 %v343, %v405
        %v416 = vmul.f32 %v344, %v405
        %v417 = vmul.f32 %v345, %v405
        %v418 = vmul.f32 %v346, %v405
        %v419 = vmul.f32 %v347, %v405
        %v420 = vmul.f32 %v348, %v405
        %v421 = vmul.f32 %v349, %v405
        %v422 = vmul.f32 %v350, %v405
        %v423 = vmul.f32 %v351, %v405
        %v424 = vmul.f32 %v352, %v405
        %v425 = vmul.f32 %v353, %v405
        %v426 = vmul.f32 %v354, %v405
        %v427 = vmul.f32 %v355, %v405
        %v428 = vmul.f32 %v356, %v405
        %v429 = vmul.f32 %v357, %v405
        %v430 = vmul.f32 %v358, %v405
        %v431 = vmul.f32 %v359, %v405
        %v432 = vmul.f32 %v360, %v405
        %v433 = vmul.f32 %v361, %v405
        %v434 = vmul.f32 %v362, %v405
        %v435 = vmul.f32 %v363, %v405
        %v436 = vmul.f32 %v364, %v405
        %v437 = vmul.f32 %v365, %v405
        %v438 = vmul.f32 %v366, %v405
        %v439 = vld [vmem:[#allocation9] sm:$0x1]
        %v441 = vlaneseq
        %v442 = vshrl.u32 %v441, 7
        %v443 = vsub.s32 0, %v442
        %v444 = vrot.slane %v439, %v443
        %v446 = vadd.f32 %v407, %v444
        %v447 = vadd.f32 %v408, %v444
        %v448 = vadd.f32 %v409, %v444
        %v449 = vadd.f32 %v410, %v444
        %v450 = vadd.f32 %v411, %v444
        %v451 = vadd.f32 %v412, %v444
        %v452 = vadd.f32 %v413, %v444
        %v453 = vadd.f32 %v414, %v444
        %v454 = vadd.f32 %v415, %v444
        %v455 = vadd.f32 %v416, %v444
        %v456 = vadd.f32 %v417, %v444
        %v457 = vadd.f32 %v418, %v444
        %v458 = vadd.f32 %v419, %v444
        %v459 = vadd.f32 %v420, %v444
        %v460 = vadd.f32 %v421, %v444
        %v461 = vadd.f32 %v422, %v444
        %v462 = vadd.f32 %v423, %v444
        %v463 = vadd.f32 %v424, %v444
        %v464 = vadd.f32 %v425, %v444
        %v465 = vadd.f32 %v426, %v444
        %v466 = vadd.f32 %v427, %v444
        %v467 = vadd.f32 %v428, %v444
        %v468 = vadd.f32 %v429, %v444
        %v469 = vadd.f32 %v430, %v444
        %v470 = vadd.f32 %v431, %v444
        %v471 = vadd.f32 %v432, %v444
        %v472 = vadd.f32 %v433, %v444
        %v473 = vadd.f32 %v434, %v444
        %v474 = vadd.f32 %v435, %v444
        %v475 = vadd.f32 %v436, %v444
        %v476 = vadd.f32 %v437, %v444
        %v477 = vadd.f32 %v438, %v444
        %v478 = vmax.f32 %v446, 0.0
        %v479 = vmax.f32 %v447, 0.0
        %v480 = vmax.f32 %v448, 0.0
        %v481 = vmax.f32 %v449, 0.0
        %v482 = vmax.f32 %v450, 0.0
        %v483 = vmax.f32 %v451, 0.0
        %v484 = vmax.f32 %v452, 0.0
        %v485 = vmax.f32 %v453, 0.0
        %v486 = vmax.f32 %v454, 0.0
        %v487 = vmax.f32 %v455, 0.0
        %v488 = vmax.f32 %v456, 0.0
        %v489 = vmax.f32 %v457, 0.0
        %v490 = vmax.f32 %v458, 0.0
        %v491 = vmax.f32 %v459, 0.0
        %v492 = vmax.f32 %v460, 0.0
        %v493 = vmax.f32 %v461, 0.0
        %v494 = vmax.f32 %v462, 0.0
        %v495 = vmax.f32 %v463, 0.0
        %v496 = vmax.f32 %v464, 0.0
        %v497 = vmax.f32 %v465, 0.0
        %v498 = vmax.f32 %v466, 0.0
        %v499 = vmax.f32 %v467, 0.0
        %v500 = vmax.f32 %v468, 0.0
        %v501 = vmax.f32 %v469, 0.0
        %v502 = vmax.f32 %v470, 0.0
        %v503 = vmax.f32 %v471, 0.0
        %v504 = vmax.f32 %v472, 0.0
        %v505 = vmax.f32 %v473, 0.0
        %v506 = vmax.f32 %v474, 0.0
        %v507 = vmax.f32 %v475, 0.0
        %v508 = vmax.f32 %v476, 0.0
        %v509 = vmax.f32 %v477, 0.0
        %v510 = vld [vmem:[#allocation10] sm:$0xff]
        %v511 = vld [vmem:[#allocation12] sm:$0x1]
        %v513 = vlaneseq
        %v514 = vshrl.u32 %v513, 7
        %v515 = vsub.s32 0, %v514
        %v516 = vrot.slane %v511, %v515
        %v519 = vsel %vm367, %v478, 0
        %v522 = vsel %vm367, %v479, 0
        %v525 = vsel %vm367, %v480, 0
        %v528 = vsel %vm367, %v481, 0
        %v531 = vsel %vm367, %v482, 0
        %v534 = vsel %vm367, %v483, 0
        %v537 = vsel %vm367, %v484, 0
        %v540 = vsel %vm367, %v485, 0
        %v543 = vsel %vm367, %v486, 0
        %v546 = vsel %vm367, %v487, 0
        %v549 = vsel %vm367, %v488, 0
        %v552 = vsel %vm367, %v489, 0
        %v555 = vsel %vm367, %v490, 0
        %v558 = vsel %vm367, %v491, 0
        %v561 = vsel %vm367, %v492, 0
        %v564 = vsel %vm367, %v493, 0
        %v567 = vsel %vm367, %v494, 0
        %v570 = vsel %vm367, %v495, 0
        %v573 = vsel %vm367, %v496, 0
        %v576 = vsel %vm367, %v497, 0
        %v579 = vsel %vm367, %v498, 0
        %v582 = vsel %vm367, %v499, 0
        %v585 = vsel %vm367, %v500, 0
        %v588 = vsel %vm367, %v501, 0
        %v591 = vsel %vm367, %v502, 0
        %v594 = vsel %vm367, %v503, 0
        %v597 = vsel %vm367, %v504, 0
        %v600 = vsel %vm367, %v505, 0
        %v603 = vsel %vm367, %v506, 0
        %v606 = vsel %vm367, %v507, 0
        %v609 = vsel %vm367, %v508, 0
        %v612 = vsel %vm367, %v509, 0
        %614 = vmatprep.subr.mxu0 0.0
        %615 = vmatpush1.msra.mxu0 %v510
        %616 = vmatprep.subr.mxu0 0.0
        %617 = vmatpush1.msra.mxu0 0.0
        %618 = vmatprep.subr.mxu0 0.0
        %619 = vmatpush1.msra.mxu0 0.0
        %620 = vmatprep.subr.mxu0 0.0
        %621 = vmatpush1.msra.mxu0 0.0
        %622 = vmatprep.subr.mxu0 0.0
        %623 = vmatpush1.msra.mxu0 0.0
        %624 = vmatprep.subr.mxu0 0.0
        %625 = vmatpush1.msra.mxu0 0.0
        %626 = vmatprep.subr.mxu0 0.0
        %627 = vmatpush1.msra.mxu0 0.0
        %628 = vmatprep.subr.mxu0 0.0
        %629 = vmatpush1.msra.mxu0 0.0
        %630 = vmatprep.subr.mxu0 0.0
        %631 = vmatpush1.msra.mxu0 0.0
        %632 = vmatprep.subr.mxu0 0.0
        %633 = vmatpush1.msra.mxu0 0.0
        %634 = vmatprep.subr.mxu0 0.0
        %635 = vmatpush1.msra.mxu0 0.0
        %636 = vmatprep.subr.mxu0 0.0
        %637 = vmatpush1.msra.mxu0 0.0
        %638 = vmatprep.subr.mxu0 0.0
        %639 = vmatpush1.msra.mxu0 0.0
        %640 = vmatprep.subr.mxu0 0.0
        %641 = vmatpush1.msra.mxu0 0.0
        %642 = vmatprep.subr.mxu0 0.0
        %643 = vmatpush1.msra.mxu0 0.0
        %644 = vmatprep.subr.mxu0 0.0
        %645 = vmatpush1.msra.mxu0 0.0
        %646 = vmatprep.subr.mxu0 0.0
        %647 = vmatpush1.msra.mxu0 0.0
        %648 = vmatprep.subr.mxu0 0.0
        %649 = vmatpush1.msra.mxu0 0.0
        %650 = vmatprep.subr.mxu0 0.0
        %651 = vmatpush1.msra.mxu0 0.0
        %652 = vmatprep.subr.mxu0 0.0
        %653 = vmatpush1.msra.mxu0 0.0
        %654 = vmatprep.subr.mxu0 0.0
        %655 = vmatpush1.msra.mxu0 0.0
        %656 = vmatprep.subr.mxu0 0.0
        %657 = vmatpush1.msra.mxu0 0.0
        %658 = vmatprep.subr.mxu0 0.0
        %659 = vmatpush1.msra.mxu0 0.0
        %660 = vmatprep.subr.mxu0 0.0
        %661 = vmatpush1.msra.mxu0 0.0
        %662 = vmatprep.subr.mxu0 0.0
        %663 = vmatpush1.msra.mxu0 0.0
        %664 = vmatprep.subr.mxu0 0.0
        %665 = vmatpush1.msra.mxu0 0.0
        %666 = vmatprep.subr.mxu0 0.0
        %667 = vmatpush1.msra.mxu0 0.0
        %668 = vmatprep.subr.mxu0 0.0
        %669 = vmatpush1.msra.mxu0 0.0
        %670 = vmatprep.subr.mxu0 0.0
        %671 = vmatpush1.msra.mxu0 0.0
        %672 = vmatprep.subr.mxu0 0.0
        %673 = vmatpush1.msra.mxu0 0.0
        %674 = vmatprep.subr.mxu0 0.0
        %675 = vmatpush1.msra.mxu0 0.0
        %676 = vmatprep.subr.mxu0 0.0
        %677 = vmatpush1.msra.mxu0 0.0
        %678 = vmatprep.mubr.f32.mxu0 0.0
        %679 = vmatmul.mubr.f32.gmra.mrb[0].mxu0 %v519
        %v680 = vpop.f32.mrb[0].mxu0
        %v681 = vadd.f32 %v516, %v680
        %v682 = vpop.f32.mrb[0].mxu0
        %683 = vmatprep.mubr.f32.mxu0 0.0
        %684 = vmatmul.mubr.f32.gmra.mrb[0].mxu0 %v522
        %v685 = vpop.f32.mrb[0].mxu0
        %v686 = vadd.f32 %v516, %v685
        %v687 = vpop.f32.mrb[0].mxu0
        %688 = vmatprep.mubr.f32.mxu0 0.0
        %689 = vmatmul.mubr.f32.gmra.mrb[0].mxu0 %v525
        %v690 = vpop.f32.mrb[0].mxu0
        %v691 = vadd.f32 %v516, %v690
        %v692 = vpop.f32.mrb[0].mxu0
        %693 = vmatprep.mubr.f32.mxu0 0.0
        %694 = vmatmul.mubr.f32.gmra.mrb[0].mxu0 %v528
        %v695 = vpop.f32.mrb[0].mxu0
        %v696 = vadd.f32 %v516, %v695
        %v697 = vpop.f32.mrb[0].mxu0
        %698 = vmatprep.mubr.f32.mxu0 0.0
        %699 = vmatmul.mubr.f32.gmra.mrb[0].mxu0 %v531
        %v700 = vpop.f32.mrb[0].mxu0
        %v701 = vadd.f32 %v516, %v700
        %v702 = vpop.f32.mrb[0].mxu0
        %703 = vmatprep.mubr.f32.mxu0 0.0
        %704 = vmatmul.mubr.f32.gmra.mrb[0].mxu0 %v534
        %v705 = vpop.f32.mrb[0].mxu0
        %v706 = vadd.f32 %v516, %v705
        %v707 = vpop.f32.mrb[0].mxu0
        %708 = vmatprep.mubr.f32.mxu0 0.0
        %709 = vmatmul.mubr.f32.gmra.mrb[0].mxu0 %v537
        %v710 = vpop.f32.mrb[0].mxu0
        %v711 = vadd.f32 %v516, %v710
        %v712 = vpop.f32.mrb[0].mxu0
        %713 = vmatprep.mubr.f32.mxu0 0.0
        %714 = vmatmul.mubr.f32.gmra.mrb[0].mxu0 %v540
        %v715 = vpop.f32.mrb[0].mxu0
        %v716 = vadd.f32 %v516, %v715
        %v717 = vpop.f32.mrb[0].mxu0
        %718 = vmatprep.mubr.f32.mxu0 0.0
        %719 = vmatmul.mubr.f32.gmra.mrb[0].mxu0 %v543
        %v720 = vpop.f32.mrb[0].mxu0
        %v721 = vadd.f32 %v516, %v720
        %v722 = vpop.f32.mrb[0].mxu0
        %723 = vmatprep.mubr.f32.mxu0 0.0
        %724 = vmatmul.mubr.f32.gmra.mrb[0].mxu0 %v546
        %v725 = vpop.f32.mrb[0].mxu0
        %v726 = vadd.f32 %v516, %v725
        %v727 = vpop.f32.mrb[0].mxu0
        %728 = vmatprep.mubr.f32.mxu0 0.0
        %729 = vmatmul.mubr.f32.gmra.mrb[0].mxu0 %v549
        %v730 = vpop.f32.mrb[0].mxu0
        %v731 = vadd.f32 %v516, %v730
        %v732 = vpop.f32.mrb[0].mxu0
        %733 = vmatprep.mubr.f32.mxu0 0.0
        %734 = vmatmul.mubr.f32.gmra.mrb[0].mxu0 %v552
        %v735 = vpop.f32.mrb[0].mxu0
        %v736 = vadd.f32 %v516, %v735
        %v737 = vpop.f32.mrb[0].mxu0
        %738 = vmatprep.mubr.f32.mxu0 0.0
        %739 = vmatmul.mubr.f32.gmra.mrb[0].mxu0 %v555
        %v740 = vpop.f32.mrb[0].mxu0
        %v741 = vadd.f32 %v516, %v740
        %v742 = vpop.f32.mrb[0].mxu0
        %743 = vmatprep.mubr.f32.mxu0 0.0
        %744 = vmatmul.mubr.f32.gmra.mrb[0].mxu0 %v558
        %v745 = vpop.f32.mrb[0].mxu0
        %v746 = vadd.f32 %v516, %v745
        %v747 = vpop.f32.mrb[0].mxu0
        %748 = vmatprep.mubr.f32.mxu0 0.0
        %749 = vmatmul.mubr.f32.gmra.mrb[0].mxu0 %v561
        %v750 = vpop.f32.mrb[0].mxu0
        %v751 = vadd.f32 %v516, %v750
        %v752 = vpop.f32.mrb[0].mxu0
        %753 = vmatprep.mubr.f32.mxu0 0.0
        %754 = vmatmul.mubr.f32.gmra.mrb[0].mxu0 %v564
        %v755 = vpop.f32.mrb[0].mxu0
        %v756 = vadd.f32 %v516, %v755
        %v757 = vpop.f32.mrb[0].mxu0
        %758 = vmatprep.mubr.f32.mxu0 0.0
        %759 = vmatmul.mubr.f32.gmra.mrb[0].mxu0 %v567
        %v760 = vpop.f32.mrb[0].mxu0
        %v761 = vadd.f32 %v516, %v760
        %v762 = vpop.f32.mrb[0].mxu0
        %763 = vmatprep.mubr.f32.mxu0 0.0
        %764 = vmatmul.mubr.f32.gmra.mrb[0].mxu0 %v570
        %v765 = vpop.f32.mrb[0].mxu0
        %v766 = vadd.f32 %v516, %v765
        %v767 = vpop.f32.mrb[0].mxu0
        %768 = vmatprep.mubr.f32.mxu0 0.0
        %769 = vmatmul.mubr.f32.gmra.mrb[0].mxu0 %v573
        %v770 = vpop.f32.mrb[0].mxu0
        %v771 = vadd.f32 %v516, %v770
        %v772 = vpop.f32.mrb[0].mxu0
        %773 = vmatprep.mubr.f32.mxu0 0.0
        %774 = vmatmul.mubr.f32.gmra.mrb[0].mxu0 %v576
        %v775 = vpop.f32.mrb[0].mxu0
        %v776 = vadd.f32 %v516, %v775
        %v777 = vpop.f32.mrb[0].mxu0
        %778 = vmatprep.mubr.f32.mxu0 0.0
        %779 = vmatmul.mubr.f32.gmra.mrb[0].mxu0 %v579
        %v780 = vpop.f32.mrb[0].mxu0
        %v781 = vadd.f32 %v516, %v780
        %v782 = vpop.f32.mrb[0].mxu0
        %783 = vmatprep.mubr.f32.mxu0 0.0
        %784 = vmatmul.mubr.f32.gmra.mrb[0].mxu0 %v582
        %v785 = vpop.f32.mrb[0].mxu0
        %v786 = vadd.f32 %v516, %v785
        %v787 = vpop.f32.mrb[0].mxu0
        %788 = vmatprep.mubr.f32.mxu0 0.0
        %789 = vmatmul.mubr.f32.gmra.mrb[0].mxu0 %v585
        %v790 = vpop.f32.mrb[0].mxu0
        %v791 = vadd.f32 %v516, %v790
        %v792 = vpop.f32.mrb[0].mxu0
        %793 = vmatprep.mubr.f32.mxu0 0.0
        %794 = vmatmul.mubr.f32.gmra.mrb[0].mxu0 %v588
        %v795 = vpop.f32.mrb[0].mxu0
        %v796 = vadd.f32 %v516, %v795
        %v797 = vpop.f32.mrb[0].mxu0
        %798 = vmatprep.mubr.f32.mxu0 0.0
        %799 = vmatmul.mubr.f32.gmra.mrb[0].mxu0 %v591
        %v800 = vpop.f32.mrb[0].mxu0
        %v801 = vadd.f32 %v516, %v800
        %v802 = vpop.f32.mrb[0].mxu0
        %803 = vmatprep.mubr.f32.mxu0 0.0
        %804 = vmatmul.mubr.f32.gmra.mrb[0].mxu0 %v594
        %v805 = vpop.f32.mrb[0].mxu0
        %v806 = vadd.f32 %v516, %v805
        %v807 = vpop.f32.mrb[0].mxu0
        %808 = vmatprep.mubr.f32.mxu0 0.0
        %809 = vmatmul.mubr.f32.gmra.mrb[0].mxu0 %v597
        %v810 = vpop.f32.mrb[0].mxu0
        %v811 = vadd.f32 %v516, %v810
        %v812 = vpop.f32.mrb[0].mxu0
        %813 = vmatprep.mubr.f32.mxu0 0.0
        %814 = vmatmul.mubr.f32.gmra.mrb[0].mxu0 %v600
        %v815 = vpop.f32.mrb[0].mxu0
        %v816 = vadd.f32 %v516, %v815
        %v817 = vpop.f32.mrb[0].mxu0
        %818 = vmatprep.mubr.f32.mxu0 0.0
        %819 = vmatmul.mubr.f32.gmra.mrb[0].mxu0 %v603
        %v820 = vpop.f32.mrb[0].mxu0
        %v821 = vadd.f32 %v516, %v820
        %v822 = vpop.f32.mrb[0].mxu0
        %823 = vmatprep.mubr.f32.mxu0 0.0
        %824 = vmatmul.mubr.f32.gmra.mrb[0].mxu0 %v606
        %v825 = vpop.f32.mrb[0].mxu0
        %v826 = vadd.f32 %v516, %v825
        %v827 = vpop.f32.mrb[0].mxu0
        %828 = vmatprep.mubr.f32.mxu0 0.0
        %829 = vmatmul.mubr.f32.gmra.mrb[0].mxu0 %v609
        %v830 = vpop.f32.mrb[0].mxu0
        %v831 = vadd.f32 %v516, %v830
        %v832 = vpop.f32.mrb[0].mxu0
        %833 = vmatprep.mubr.f32.mxu0 0.0
        %834 = vmatmul.mubr.f32.gmra.mrb[0].mxu0 %v612
        %v835 = vpop.f32.mrb[0].mxu0
        %v836 = vadd.f32 %v516, %v835
        %v837 = vpop.f32.mrb[0].mxu0
        %838 = vdwg.mxu0
        %v839 = vmax.f32 %v681, 0.0
        %v840 = vmax.f32 %v686, 0.0
        %v841 = vmax.f32 %v691, 0.0
        %v842 = vmax.f32 %v696, 0.0
        %v843 = vmax.f32 %v701, 0.0
        %v844 = vmax.f32 %v706, 0.0
        %v845 = vmax.f32 %v711, 0.0
        %v846 = vmax.f32 %v716, 0.0
        %v847 = vmax.f32 %v721, 0.0
        %v848 = vmax.f32 %v726, 0.0
        %v849 = vmax.f32 %v731, 0.0
        %v850 = vmax.f32 %v736, 0.0
        %v851 = vmax.f32 %v741, 0.0
        %v852 = vmax.f32 %v746, 0.0
        %v853 = vmax.f32 %v751, 0.0
        %v854 = vmax.f32 %v756, 0.0
        %v855 = vmax.f32 %v761, 0.0
        %v856 = vmax.f32 %v766, 0.0
        %v857 = vmax.f32 %v771, 0.0
        %v858 = vmax.f32 %v776, 0.0
        %v859 = vmax.f32 %v781, 0.0
        %v860 = vmax.f32 %v786, 0.0
        %v861 = vmax.f32 %v791, 0.0
        %v862 = vmax.f32 %v796, 0.0
        %v863 = vmax.f32 %v801, 0.0
        %v864 = vmax.f32 %v806, 0.0
        %v865 = vmax.f32 %v811, 0.0
        %v866 = vmax.f32 %v816, 0.0
        %v867 = vmax.f32 %v821, 0.0
        %v868 = vmax.f32 %v826, 0.0
        %v869 = vmax.f32 %v831, 0.0
        %v870 = vmax.f32 %v836, 0.0
        %871 = vst [vmem:[#allocation2] sm:$0xff] 0.0
        %872 = vst [vmem:[#allocation2 + $0x8] sm:$0xff] 0.0
        %873 = vst [vmem:[#allocation2 + $0x10] sm:$0x7] 0.0
        %874 = vst [vmem:[#allocation2 + $0x132] sm:$0xff] 0.0
        %875 = vst [vmem:[#allocation2 + $0x13a] sm:$0xff] 0.0
        %876 = vst [vmem:[#allocation2 + $0x142] sm:$0x3f] 0.0
        %877 = vst [vmem:[#allocation2 + $0x13] sm:$0xff] %v839
        %878 = vst [vmem:[#allocation2 + $0x1b] sm:$0xff] %v840
        %879 = vst [vmem:[#allocation2 + $0x23] sm:$0x3] 0.0
        %880 = vst [vmem:[#allocation2 + $0x25] sm:$0xff] %v841
        %881 = vst [vmem:[#allocation2 + $0x2d] sm:$0xff] %v842
        %882 = vst [vmem:[#allocation2 + $0x35] sm:$0x3] 0.0
        %883 = vst [vmem:[#allocation2 + $0x37] sm:$0xff] %v843
        %884 = vst [vmem:[#allocation2 + $0x3f] sm:$0xff] %v844
        %885 = vst [vmem:[#allocation2 + $0x47] sm:$0x3] 0.0
        %886 = vst [vmem:[#allocation2 + $0x49] sm:$0xff] %v845
        %887 = vst [vmem:[#allocation2 + $0x51] sm:$0xff] %v846
        %888 = vst [vmem:[#allocation2 + $0x59] sm:$0x3] 0.0
        %889 = vst [vmem:[#allocation2 + $0x5b] sm:$0xff] %v847
        %890 = vst [vmem:[#allocation2 + $0x63] sm:$0xff] %v848
        %891 = vst [vmem:[#allocation2 + $0x6b] sm:$0x3] 0.0
        %892 = vst [vmem:[#allocation2 + $0x6d] sm:$0xff] %v849
        %893 = vst [vmem:[#allocation2 + $0x75] sm:$0xff] %v850
        %894 = vst [vmem:[#allocation2 + $0x7d] sm:$0x3] 0.0
        %895 = vst [vmem:[#allocation2 + $0x7f] sm:$0xff] %v851
        %896 = vst [vmem:[#allocation2 + $0x87] sm:$0xff] %v852
        %897 = vst [vmem:[#allocation2 + $0x8f] sm:$0x3] 0.0
        %898 = vst [vmem:[#allocation2 + $0x91] sm:$0xff] %v853
        %899 = vst [vmem:[#allocation2 + $0x99] sm:$0xff] %v854
        %900 = vst [vmem:[#allocation2 + $0xa1] sm:$0x3] 0.0
        %901 = vst [vmem:[#allocation2 + $0xa3] sm:$0xff] %v855
        %902 = vst [vmem:[#allocation2 + $0xab] sm:$0xff] %v856
        %903 = vst [vmem:[#allocation2 + $0xb3] sm:$0x3] 0.0
        %904 = vst [vmem:[#allocation2 + $0xb5] sm:$0xff] %v857
        %905 = vst [vmem:[#allocation2 + $0xbd] sm:$0xff] %v858
        %906 = vst [vmem:[#allocation2 + $0xc5] sm:$0x3] 0.0
        %907 = vst [vmem:[#allocation2 + $0xc7] sm:$0xff] %v859
        %908 = vst [vmem:[#allocation2 + $0xcf] sm:$0xff] %v860
        %909 = vst [vmem:[#allocation2 + $0xd7] sm:$0x3] 0.0
        %910 = vst [vmem:[#allocation2 + $0xd9] sm:$0xff] %v861
        %911 = vst [vmem:[#allocation2 + $0xe1] sm:$0xff] %v862
        %912 = vst [vmem:[#allocation2 + $0xe9] sm:$0x3] 0.0
        %913 = vst [vmem:[#allocation2 + $0xeb] sm:$0xff] %v863
        %914 = vst [vmem:[#allocation2 + $0xf3] sm:$0xff] %v864
        %915 = vst [vmem:[#allocation2 + $0xfb] sm:$0x3] 0.0
        %916 = vst [vmem:[#allocation2 + $0xfd] sm:$0xff] %v865
        %917 = vst [vmem:[#allocation2 + $0x105] sm:$0xff] %v866
        %918 = vst [vmem:[#allocation2 + $0x10d] sm:$0x3] 0.0
        %919 = vst [vmem:[#allocation2 + $0x10f] sm:$0xff] %v867
        %920 = vst [vmem:[#allocation2 + $0x117] sm:$0xff] %v868
        %921 = vst [vmem:[#allocation2 + $0x11f] sm:$0x3] 0.0
        %922 = vst [vmem:[#allocation2 + $0x121] sm:$0xff] %v869
        %923 = vst [vmem:[#allocation2 + $0x129] sm:$0xff] %v870
        %924 = vst [vmem:[#allocation2 + $0x131] sm:$0x3] 0.0
        %v925 = vld [vmem:[#allocation2] sm:$0xff]
        %v926 = vld [vmem:[#allocation2 + $0x8] sm:$0xff]
        %v927 = vld [vmem:[#allocation2 + $0x10] sm:$0xff]
        %v928 = vld [vmem:[#allocation2 + $0x18] sm:$0xff]
        %v929 = vld [vmem:[#allocation2 + $0x20] sm:$0xff]
        %v930 = vld [vmem:[#allocation2 + $0x28] sm:$0xff]
        %v931 = vld [vmem:[#allocation2 + $0x30] sm:$0xff]
        %v932 = vld [vmem:[#allocation2 + $0x38] sm:$0xff]
        %v933 = vld [vmem:[#allocation2 + $0x40] sm:$0xff]
        %v934 = vld [vmem:[#allocation2 + $0x48] sm:$0xff]
        %v935 = vld [vmem:[#allocation2 + $0x50] sm:$0xff]
        %v936 = vld [vmem:[#allocation2 + $0x58] sm:$0xff]
        %v937 = vld [vmem:[#allocation2 + $0x60] sm:$0xff]
        %v938 = vld [vmem:[#allocation2 + $0x68] sm:$0xff]
        %v939 = vld [vmem:[#allocation2 + $0x70] sm:$0xff]
        %v940 = vld [vmem:[#allocation2 + $0x78] sm:$0xff]
        %v941 = vld [vmem:[#allocation2 + $0x80] sm:$0xff]
        %v942 = vld [vmem:[#allocation2 + $0x88] sm:$0xff]
        %v943 = vld [vmem:[#allocation2 + $0x90] sm:$0xff]
        %v944 = vld [vmem:[#allocation2 + $0x98] sm:$0xff]
        %v945 = vld [vmem:[#allocation2 + $0xa0] sm:$0xff]
        %v946 = vld [vmem:[#allocation2 + $0xa8] sm:$0xff]
        %v947 = vld [vmem:[#allocation2 + $0xb0] sm:$0xff]
        %v948 = vld [vmem:[#allocation2 + $0xb8] sm:$0xff]
        %v949 = vld [vmem:[#allocation2 + $0xc0] sm:$0xff]
        %v950 = vld [vmem:[#allocation2 + $0xc8] sm:$0xff]
        %v951 = vld [vmem:[#allocation2 + $0xd0] sm:$0xff]
        %v952 = vld [vmem:[#allocation2 + $0xd8] sm:$0xff]
        %v953 = vld [vmem:[#allocation2 + $0xe0] sm:$0xff]
        %v954 = vld [vmem:[#allocation2 + $0xe8] sm:$0xff]
        %v955 = vld [vmem:[#allocation2 + $0xf0] sm:$0xff]
        %v956 = vld [vmem:[#allocation2 + $0xf8] sm:$0xff]
        %v957 = vld [vmem:[#allocation2 + $0x100] sm:$0xff]
        %v958 = vld [vmem:[#allocation2 + $0x108] sm:$0xff]
        %v959 = vld [vmem:[#allocation2 + $0x110] sm:$0xff]
        %v960 = vld [vmem:[#allocation2 + $0x118] sm:$0xff]
        %v961 = vld [vmem:[#allocation13] sm:$0xff]
        %v962 = vld [vmem:[#allocation13 + $0x8] sm:$0xff]
        %v963 = vld [vmem:[#allocation13 + $0x10] sm:$0xff]
        %v964 = vld [vmem:[#allocation13 + $0x18] sm:$0xff]
        %v965 = vld [vmem:[#allocation13 + $0x20] sm:$0xff]
        %v966 = vld [vmem:[#allocation13 + $0x28] sm:$0xff]
        %v967 = vld [vmem:[#allocation13 + $0x30] sm:$0xff]
        %v968 = vld [vmem:[#allocation13 + $0x38] sm:$0xff]
        %v969 = vld [vmem:[#allocation13 + $0x40] sm:$0xff]
        %v970 = vld [vmem:[#allocation13 + $0x48] sm:$0xff]
        %v971 = vld [vmem:[#allocation13 + $0x50] sm:$0xff]
        %v972 = vld [vmem:[#allocation13 + $0x58] sm:$0xff]
        %v973 = vld [vmem:[#allocation13 + $0x60] sm:$0xff]
        %v974 = vld [vmem:[#allocation13 + $0x68] sm:$0xff]
        %v975 = vld [vmem:[#allocation13 + $0x70] sm:$0xff]
        %v976 = vld [vmem:[#allocation13 + $0x78] sm:$0xff]
        %977 = vmatprep.subr.mxu0 0.0
        %978 = vmatpush1.msra.mxu0 %v961
        %979 = vmatprep.subr.mxu0 0.0
        %980 = vmatpush1.msra.mxu0 %v962
        %981 = vmatprep.subr.mxu0 0.0
        %982 = vmatpush1.msra.mxu0 %v963
        %983 = vmatprep.subr.mxu0 0.0
        %984 = vmatpush1.msra.mxu0 %v964
        %985 = vmatprep.subr.mxu0 0.0
        %986 = vmatpush1.msra.mxu0 %v965
        %987 = vmatprep.subr.mxu0 0.0
        %988 = vmatpush1.msra.mxu0 %v966
        %989 = vmatprep.subr.mxu0 0.0
        %990 = vmatpush1.msra.mxu0 %v967
        %991 = vmatprep.subr.mxu0 0.0
        %992 = vmatpush1.msra.mxu0 %v968
        %993 = vmatprep.subr.mxu0 0.0
        %994 = vmatpush1.msra.mxu0 %v969
        %995 = vmatprep.subr.mxu0 0.0
        %996 = vmatpush1.msra.mxu0 %v970
        %997 = vmatprep.subr.mxu0 0.0
        %998 = vmatpush1.msra.mxu0 %v971
        %999 = vmatprep.subr.mxu0 0.0
        %1000 = vmatpush1.msra.mxu0 %v972
        %1001 = vmatprep.subr.mxu0 0.0
        %1002 = vmatpush1.msra.mxu0 %v973
        %1003 = vmatprep.subr.mxu0 0.0
        %1004 = vmatpush1.msra.mxu0 %v974
        %1005 = vmatprep.subr.mxu0 0.0
        %1006 = vmatpush1.msra.mxu0 %v975
        %1007 = vmatprep.subr.mxu0 0.0
        %1008 = vmatpush1.msra.mxu0 %v976
        %1009 = vmatprep.subr.mxu0 0.0
        %1010 = vmatpush1.msra.mxu0 0.0
        %1011 = vmatprep.subr.mxu0 0.0
        %1012 = vmatpush1.msra.mxu0 0.0
        %1013 = vmatprep.subr.mxu0 0.0
        %1014 = vmatpush1.msra.mxu0 0.0
        %1015 = vmatprep.subr.mxu0 0.0
        %1016 = vmatpush1.msra.mxu0 0.0
        %1017 = vmatprep.subr.mxu0 0.0
        %1018 = vmatpush1.msra.mxu0 0.0
        %1019 = vmatprep.subr.mxu0 0.0
        %1020 = vmatpush1.msra.mxu0 0.0
        %1021 = vmatprep.subr.mxu0 0.0
        %1022 = vmatpush1.msra.mxu0 0.0
        %1023 = vmatprep.subr.mxu0 0.0
        %1024 = vmatpush1.msra.mxu0 0.0
        %1025 = vmatprep.subr.mxu0 0.0
        %1026 = vmatpush1.msra.mxu0 0.0
        %1027 = vmatprep.subr.mxu0 0.0
        %1028 = vmatpush1.msra.mxu0 0.0
        %1029 = vmatprep.subr.mxu0 0.0
        %1030 = vmatpush1.msra.mxu0 0.0
        %1031 = vmatprep.subr.mxu0 0.0
        %1032 = vmatpush1.msra.mxu0 0.0
        %1033 = vmatprep.subr.mxu0 0.0
        %1034 = vmatpush1.msra.mxu0 0.0
        %1035 = vmatprep.subr.mxu0 0.0
        %1036 = vmatpush1.msra.mxu0 0.0
        %1037 = vmatprep.subr.mxu0 0.0
        %1038 = vmatpush1.msra.mxu0 0.0
        %1039 = vmatprep.subr.mxu0 0.0
        %1040 = vmatpush1.msra.mxu0 0.0
        %1041 = vmatprep.mubr.f32.mxu0 0.0
        %1042 = vmatmul.mubr.f32.gmra.mrb[0].mxu0 %v925
        %v1043 = vpop.f32.mrb[0].mxu0
        %v1044 = vadd.f32 0.0, %v1043
        %v1045 = vpop.f32.mrb[0].mxu0
        %1046 = vmatprep.mubr.f32.mxu0 0.0
        %1047 = vmatmul.mubr.f32.gmra.mrb[0].mxu0 %v926
        %v1048 = vpop.f32.mrb[0].mxu0
        %v1049 = vadd.f32 0.0, %v1048
        %v1050 = vpop.f32.mrb[0].mxu0
        %1051 = vmatprep.mubr.f32.mxu0 0.0
        %1052 = vmatmul.mubr.f32.gmra.mrb[0].mxu0 %v927
        %v1053 = vpop.f32.mrb[0].mxu0
        %v1054 = vadd.f32 0.0, %v1053
        %v1055 = vpop.f32.mrb[0].mxu0
        %1056 = vmatprep.mubr.f32.mxu0 0.0
        %1057 = vmatmul.mubr.f32.gmra.mrb[0].mxu0 %v928
        %v1058 = vpop.f32.mrb[0].mxu0
        %v1059 = vadd.f32 0.0, %v1058
        %v1060 = vpop.f32.mrb[0].mxu0
        %1061 = vmatprep.mubr.f32.mxu0 0.0
        %1062 = vmatmul.mubr.f32.gmra.mrb[0].mxu0 %v929
        %v1063 = vpop.f32.mrb[0].mxu0
        %v1064 = vadd.f32 0.0, %v1063
        %v1065 = vpop.f32.mrb[0].mxu0
        %1066 = vmatprep.mubr.f32.mxu0 0.0
        %1067 = vmatmul.mubr.f32.gmra.mrb[0].mxu0 %v930
        %v1068 = vpop.f32.mrb[0].mxu0
        %v1069 = vadd.f32 0.0, %v1068
        %v1070 = vpop.f32.mrb[0].mxu0
        %1071 = vmatprep.mubr.f32.mxu0 0.0
        %1072 = vmatmul.mubr.f32.gmra.mrb[0].mxu0 %v931
        %v1073 = vpop.f32.mrb[0].mxu0
        %v1074 = vadd.f32 0.0, %v1073
        %v1075 = vpop.f32.mrb[0].mxu0
        %1076 = vmatprep.mubr.f32.mxu0 0.0
        %1077 = vmatmul.mubr.f32.gmra.mrb[0].mxu0 %v932
        %v1078 = vpop.f32.mrb[0].mxu0
        %v1079 = vadd.f32 0.0, %v1078
        %v1080 = vpop.f32.mrb[0].mxu0
        %1081 = vmatprep.mubr.f32.mxu0 0.0
        %1082 = vmatmul.mubr.f32.gmra.mrb[0].mxu0 %v933
        %v1083 = vpop.f32.mrb[0].mxu0
        %v1084 = vadd.f32 0.0, %v1083
        %v1085 = vpop.f32.mrb[0].mxu0
        %1086 = vmatprep.mubr.f32.mxu0 0.0
        %1087 = vmatmul.mubr.f32.gmra.mrb[0].mxu0 %v934
        %v1088 = vpop.f32.mrb[0].mxu0
        %v1089 = vadd.f32 0.0, %v1088
        %v1090 = vpop.f32.mrb[0].mxu0
        %1091 = vmatprep.mubr.f32.mxu0 0.0
        %1092 = vmatmul.mubr.f32.gmra.mrb[0].mxu0 %v935
        %v1093 = vpop.f32.mrb[0].mxu0
        %v1094 = vadd.f32 0.0, %v1093
        %v1095 = vpop.f32.mrb[0].mxu0
        %1096 = vmatprep.mubr.f32.mxu0 0.0
        %1097 = vmatmul.mubr.f32.gmra.mrb[0].mxu0 %v936
        %v1098 = vpop.f32.mrb[0].mxu0
        %v1099 = vadd.f32 0.0, %v1098
        %v1100 = vpop.f32.mrb[0].mxu0
        %1101 = vmatprep.mubr.f32.mxu0 0.0
        %1102 = vmatmul.mubr.f32.gmra.mrb[0].mxu0 %v937
        %v1103 = vpop.f32.mrb[0].mxu0
        %v1104 = vadd.f32 0.0, %v1103
        %v1105 = vpop.f32.mrb[0].mxu0
        %1106 = vmatprep.mubr.f32.mxu0 0.0
        %1107 = vmatmul.mubr.f32.gmra.mrb[0].mxu0 %v938
        %v1108 = vpop.f32.mrb[0].mxu0
        %v1109 = vadd.f32 0.0, %v1108
        %v1110 = vpop.f32.mrb[0].mxu0
        %1111 = vmatprep.mubr.f32.mxu0 0.0
        %1112 = vmatmul.mubr.f32.gmra.mrb[0].mxu0 %v939
        %v1113 = vpop.f32.mrb[0].mxu0
        %v1114 = vadd.f32 0.0, %v1113
        %v1115 = vpop.f32.mrb[0].mxu0
        %1116 = vmatprep.mubr.f32.mxu0 0.0
        %1117 = vmatmul.mubr.f32.gmra.mrb[0].mxu0 %v940
        %v1118 = vpop.f32.mrb[0].mxu0
        %v1119 = vadd.f32 0.0, %v1118
        %v1120 = vpop.f32.mrb[0].mxu0
        %1121 = vmatprep.mubr.f32.mxu0 0.0
        %1122 = vmatmul.mubr.f32.gmra.mrb[0].mxu0 %v941
        %v1123 = vpop.f32.mrb[0].mxu0
        %v1124 = vadd.f32 0.0, %v1123
        %v1125 = vpop.f32.mrb[0].mxu0
        %1126 = vmatprep.mubr.f32.mxu0 0.0
        %1127 = vmatmul.mubr.f32.gmra.mrb[0].mxu0 %v942
        %v1128 = vpop.f32.mrb[0].mxu0
        %v1129 = vadd.f32 0.0, %v1128
        %v1130 = vpop.f32.mrb[0].mxu0
        %1131 = vmatprep.mubr.f32.mxu0 0.0
        %1132 = vmatmul.mubr.f32.gmra.mrb[0].mxu0 %v943
        %v1133 = vpop.f32.mrb[0].mxu0
        %v1134 = vadd.f32 0.0, %v1133
        %v1135 = vpop.f32.mrb[0].mxu0
        %1136 = vmatprep.mubr.f32.mxu0 0.0
        %1137 = vmatmul.mubr.f32.gmra.mrb[0].mxu0 %v944
        %v1138 = vpop.f32.mrb[0].mxu0
        %v1139 = vadd.f32 0.0, %v1138
        %v1140 = vpop.f32.mrb[0].mxu0
        %1141 = vmatprep.mubr.f32.mxu0 0.0
        %1142 = vmatmul.mubr.f32.gmra.mrb[0].mxu0 %v945
        %v1143 = vpop.f32.mrb[0].mxu0
        %v1144 = vadd.f32 0.0, %v1143
        %v1145 = vpop.f32.mrb[0].mxu0
        %1146 = vmatprep.mubr.f32.mxu0 0.0
        %1147 = vmatmul.mubr.f32.gmra.mrb[0].mxu0 %v946
        %v1148 = vpop.f32.mrb[0].mxu0
        %v1149 = vadd.f32 0.0, %v1148
        %v1150 = vpop.f32.mrb[0].mxu0
        %1151 = vmatprep.mubr.f32.mxu0 0.0
        %1152 = vmatmul.mubr.f32.gmra.mrb[0].mxu0 %v947
        %v1153 = vpop.f32.mrb[0].mxu0
        %v1154 = vadd.f32 0.0, %v1153
        %v1155 = vpop.f32.mrb[0].mxu0
        %1156 = vmatprep.mubr.f32.mxu0 0.0
        %1157 = vmatmul.mubr.f32.gmra.mrb[0].mxu0 %v948
        %v1158 = vpop.f32.mrb[0].mxu0
        %v1159 = vadd.f32 0.0, %v1158
        %v1160 = vpop.f32.mrb[0].mxu0
        %1161 = vmatprep.mubr.f32.mxu0 0.0
        %1162 = vmatmul.mubr.f32.gmra.mrb[0].mxu0 %v949
        %v1163 = vpop.f32.mrb[0].mxu0
        %v1164 = vadd.f32 0.0, %v1163
        %v1165 = vpop.f32.mrb[0].mxu0
        %1166 = vmatprep.mubr.f32.mxu0 0.0
        %1167 = vmatmul.mubr.f32.gmra.mrb[0].mxu0 %v950
        %v1168 = vpop.f32.mrb[0].mxu0
        %v1169 = vadd.f32 0.0, %v1168
        %v1170 = vpop.f32.mrb[0].mxu0
        %1171 = vmatprep.mubr.f32.mxu0 0.0
        %1172 = vmatmul.mubr.f32.gmra.mrb[0].mxu0 %v951
        %v1173 = vpop.f32.mrb[0].mxu0
        %v1174 = vadd.f32 0.0, %v1173
        %v1175 = vpop.f32.mrb[0].mxu0
        %1176 = vmatprep.mubr.f32.mxu0 0.0
        %1177 = vmatmul.mubr.f32.gmra.mrb[0].mxu0 %v952
        %v1178 = vpop.f32.mrb[0].mxu0
        %v1179 = vadd.f32 0.0, %v1178
        %v1180 = vpop.f32.mrb[0].mxu0
        %1181 = vmatprep.mubr.f32.mxu0 0.0
        %1182 = vmatmul.mubr.f32.gmra.mrb[0].mxu0 %v953
        %v1183 = vpop.f32.mrb[0].mxu0
        %v1184 = vadd.f32 0.0, %v1183
        %v1185 = vpop.f32.mrb[0].mxu0
        %1186 = vmatprep.mubr.f32.mxu0 0.0
        %1187 = vmatmul.mubr.f32.gmra.mrb[0].mxu0 %v954
        %v1188 = vpop.f32.mrb[0].mxu0
        %v1189 = vadd.f32 0.0, %v1188
        %v1190 = vpop.f32.mrb[0].mxu0
        %1191 = vmatprep.mubr.f32.mxu0 0.0
        %1192 = vmatmul.mubr.f32.gmra.mrb[0].mxu0 %v955
        %v1193 = vpop.f32.mrb[0].mxu0
        %v1194 = vadd.f32 0.0, %v1193
        %v1195 = vpop.f32.mrb[0].mxu0
        %1196 = vmatprep.mubr.f32.mxu0 0.0
        %1197 = vmatmul.mubr.f32.gmra.mrb[0].mxu0 %v956
        %v1198 = vpop.f32.mrb[0].mxu0
        %v1199 = vadd.f32 0.0, %v1198
        %v1200 = vpop.f32.mrb[0].mxu0
        %1201 = vmatprep.mubr.f32.mxu0 0.0
        %1202 = vmatmul.mubr.f32.gmra.mrb[0].mxu0 %v957
        %v1203 = vpop.f32.mrb[0].mxu0
        %v1204 = vadd.f32 0.0, %v1203
        %v1205 = vpop.f32.mrb[0].mxu0
        %1206 = vmatprep.mubr.f32.mxu0 0.0
        %1207 = vmatmul.mubr.f32.gmra.mrb[0].mxu0 %v958
        %v1208 = vpop.f32.mrb[0].mxu0
        %v1209 = vadd.f32 0.0, %v1208
        %v1210 = vpop.f32.mrb[0].mxu0
        %1211 = vmatprep.mubr.f32.mxu0 0.0
        %1212 = vmatmul.mubr.f32.gmra.mrb[0].mxu0 %v959
        %v1213 = vpop.f32.mrb[0].mxu0
        %v1214 = vadd.f32 0.0, %v1213
        %v1215 = vpop.f32.mrb[0].mxu0
        %1216 = vmatprep.mubr.f32.mxu0 0.0
        %1217 = vmatmul.mubr.f32.gmra.mrb[0].mxu0 %v960
        %v1218 = vpop.f32.mrb[0].mxu0
        %v1219 = vadd.f32 0.0, %v1218
        %v1220 = vpop.f32.mrb[0].mxu0
        %1221 = vdwg.mxu0
        %1222 = vst [vmem:[#allocation3] sm:$0xff] %v1044
        %1223 = vst [vmem:[#allocation3 + $0x8] sm:$0xff] %v1049
        %1224 = vst [vmem:[#allocation3 + $0x10] sm:$0xff] %v1054
        %1225 = vst [vmem:[#allocation3 + $0x18] sm:$0xff] %v1059
        %1226 = vst [vmem:[#allocation3 + $0x20] sm:$0xff] %v1064
        %1227 = vst [vmem:[#allocation3 + $0x28] sm:$0xff] %v1069
        %1228 = vst [vmem:[#allocation3 + $0x30] sm:$0xff] %v1074
        %1229 = vst [vmem:[#allocation3 + $0x38] sm:$0xff] %v1079
        %1230 = vst [vmem:[#allocation3 + $0x40] sm:$0xff] %v1084
        %1231 = vst [vmem:[#allocation3 + $0x48] sm:$0xff] %v1089
        %1232 = vst [vmem:[#allocation3 + $0x50] sm:$0xff] %v1094
        %1233 = vst [vmem:[#allocation3 + $0x58] sm:$0xff] %v1099
        %1234 = vst [vmem:[#allocation3 + $0x60] sm:$0xff] %v1104
        %1235 = vst [vmem:[#allocation3 + $0x68] sm:$0xff] %v1109
        %1236 = vst [vmem:[#allocation3 + $0x70] sm:$0xff] %v1114
        %1237 = vst [vmem:[#allocation3 + $0x78] sm:$0xff] %v1119
        %1238 = vst [vmem:[#allocation3 + $0x80] sm:$0xff] %v1124
        %1239 = vst [vmem:[#allocation3 + $0x88] sm:$0xff] %v1129
        %1240 = vst [vmem:[#allocation3 + $0x90] sm:$0xff] %v1134
        %1241 = vst [vmem:[#allocation3 + $0x98] sm:$0xff] %v1139
        %1242 = vst [vmem:[#allocation3 + $0xa0] sm:$0xff] %v1144
        %1243 = vst [vmem:[#allocation3 + $0xa8] sm:$0xff] %v1149
        %1244 = vst [vmem:[#allocation3 + $0xb0] sm:$0xff] %v1154
        %1245 = vst [vmem:[#allocation3 + $0xb8] sm:$0xff] %v1159
        %1246 = vst [vmem:[#allocation3 + $0xc0] sm:$0xff] %v1164
        %1247 = vst [vmem:[#allocation3 + $0xc8] sm:$0xff] %v1169
        %1248 = vst [vmem:[#allocation3 + $0xd0] sm:$0xff] %v1174
        %1249 = vst [vmem:[#allocation3 + $0xd8] sm:$0xff] %v1179
        %1250 = vst [vmem:[#allocation3 + $0xe0] sm:$0xff] %v1184
        %1251 = vst [vmem:[#allocation3 + $0xe8] sm:$0xff] %v1189
        %1252 = vst [vmem:[#allocation3 + $0xf0] sm:$0xff] %v1194
        %1253 = vst [vmem:[#allocation3 + $0xf8] sm:$0xff] %v1199
        %1254 = vst [vmem:[#allocation3 + $0x100] sm:$0xff] %v1204
        %1255 = vst [vmem:[#allocation3 + $0x108] sm:$0xff] %v1209
        %1256 = vst [vmem:[#allocation3 + $0x110] sm:$0xff] %v1214
        %1257 = vst [vmem:[#allocation3 + $0x118] sm:$0xff] %v1219
        %v1258 = vld [vmem:[#allocation2 + $0x1] sm:$0xff]
        %v1259 = vld [vmem:[#allocation2 + $0x9] sm:$0xff]
        %v1260 = vld [vmem:[#allocation2 + $0x11] sm:$0xff]
        %v1261 = vld [vmem:[#allocation2 + $0x19] sm:$0xff]
        %v1262 = vld [vmem:[#allocation2 + $0x21] sm:$0xff]
        %v1263 = vld [vmem:[#allocation2 + $0x29] sm:$0xff]
        %v1264 = vld [vmem:[#allocation2 + $0x31] sm:$0xff]
        %v1265 = vld [vmem:[#allocation2 + $0x39] sm:$0xff]
        %v1266 = vld [vmem:[#allocation2 + $0x41] sm:$0xff]
        %v1267 = vld [vmem:[#allocation2 + $0x49] sm:$0xff]
        %v1268 = vld [vmem:[#allocation2 + $0x51] sm:$0xff]
        %v1269 = vld [vmem:[#allocation2 + $0x59] sm:$0xff]
        %v1270 = vld [vmem:[#allocation2 + $0x61] sm:$0xff]
        %v1271 = vld [vmem:[#allocation2 + $0x69] sm:$0xff]
        %v1272 = vld [vmem:[#allocation2 + $0x71] sm:$0xff]
        %v1273 = vld [vmem:[#allocation2 + $0x79] sm:$0xff]
        %v1274 = vld [vmem:[#allocation2 + $0x81] sm:$0xff]
        %v1275 = vld [vmem:[#allocation2 + $0x89] sm:$0xff]
        %v1276 = vld [vmem:[#allocation2 + $0x91] sm:$0xff]
        %v1277 = vld [vmem:[#allocation2 + $0x99] sm:$0xff]
        %v1278 = vld [vmem:[#allocation2 + $0xa1] sm:$0xff]
        %v1279 = vld [vmem:[#allocation2 + $0xa9] sm:$0xff]
        %v1280 = vld [vmem:[#allocation2 + $0xb1] sm:$0xff]
        %v1281 = vld [vmem:[#allocation2 + $0xb9] sm:$0xff]
        %v1282 = vld [vmem:[#allocation2 + $0xc1] sm:$0xff]
        %v1283 = vld [vmem:[#allocation2 + $0xc9] sm:$0xff]
        %v1284 = vld [vmem:[#allocation2 + $0xd1] sm:$0xff]
        %v1285 = vld [vmem:[#allocation2 + $0xd9] sm:$0xff]
        %v1286 = vld [vmem:[#allocation2 + $0xe1] sm:$0xff]
        %v1287 = vld [vmem:[#allocation2 + $0xe9] sm:$0xff]
        %v1288 = vld [vmem:[#allocation2 + $0xf1] sm:$0xff]
        %v1289 = vld [vmem:[#allocation2 + $0xf9] sm:$0xff]
        %v1290 = vld [vmem:[#allocation2 + $0x101] sm:$0xff]
        %v1291 = vld [vmem:[#allocation2 + $0x109] sm:$0xff]
        %v1292 = vld [vmem:[#allocation2 + $0x111] sm:$0xff]
        %v1293 = vld [vmem:[#allocation2 + $0x119] sm:$0xff]
        %s1294 = scalar_lea.vmem [#allocation13], 128
        %v1295 = vld [vmem:[%s1294] sm:$0xff]
        %v1296 = vld [vmem:[%s1294 + $0x8] sm:$0xff]
        %v1297 = vld [vmem:[%s1294 + $0x10] sm:$0xff]
        %v1298 = vld [vmem:[%s1294 + $0x18] sm:$0xff]
        %v1299 = vld [vmem:[%s1294 + $0x20] sm:$0xff]
        %v1300 = vld [vmem:[%s1294 + $0x28] sm:$0xff]
        %v1301 = vld [vmem:[%s1294 + $0x30] sm:$0xff]
        %v1302 = vld [vmem:[%s1294 + $0x38] sm:$0xff]
        %v1303 = vld [vmem:[%s1294 + $0x40] sm:$0xff]
        %v1304 = vld [vmem:[%s1294 + $0x48] sm:$0xff]
        %v1305 = vld [vmem:[%s1294 + $0x50] sm:$0xff]
        %v1306 = vld [vmem:[%s1294 + $0x58] sm:$0xff]
        %v1307 = vld [vmem:[%s1294 + $0x60] sm:$0xff]
        %v1308 = vld [vmem:[%s1294 + $0x68] sm:$0xff]
        %v1309 = vld [vmem:[%s1294 + $0x70] sm:$0xff]
        %v1310 = vld [vmem:[%s1294 + $0x78] sm:$0xff]
        %1311 = vmatprep.subr.mxu0 0.0
        %1312 = vmatpush1.msra.mxu0 %v1295
        %1313 = vmatprep.subr.mxu0 0.0
        %1314 = vmatpush1.msra.mxu0 %v1296
        %1315 = vmatprep.subr.mxu0 0.0
        %1316 = vmatpush1.msra.mxu0 %v1297
        %1317 = vmatprep.subr.mxu0 0.0
        %1318 = vmatpush1.msra.mxu0 %v1298
        %1319 = vmatprep.subr.mxu0 0.0
        %1320 = vmatpush1.msra.mxu0 %v1299
        %1321 = vmatprep.subr.mxu0 0.0
        %1322 = vmatpush1.msra.mxu0 %v1300
        %1323 = vmatprep.subr.mxu0 0.0
        %1324 = vmatpush1.msra.mxu0 %v1301
        %1325 = vmatprep.subr.mxu0 0.0
        %1326 = vmatpush1.msra.mxu0 %v1302
        %1327 = vmatprep.subr.mxu0 0.0
        %1328 = vmatpush1.msra.mxu0 %v1303
        %1329 = vmatprep.subr.mxu0 0.0
        %1330 = vmatpush1.msra.mxu0 %v1304
        %1331 = vmatprep.subr.mxu0 0.0
        %1332 = vmatpush1.msra.mxu0 %v1305
        %1333 = vmatprep.subr.mxu0 0.0
        %1334 = vmatpush1.msra.mxu0 %v1306
        %1335 = vmatprep.subr.mxu0 0.0
        %1336 = vmatpush1.msra.mxu0 %v1307
        %1337 = vmatprep.subr.mxu0 0.0
        %1338 = vmatpush1.msra.mxu0 %v1308
        %1339 = vmatprep.subr.mxu0 0.0
        %1340 = vmatpush1.msra.mxu0 %v1309
        %1341 = vmatprep.subr.mxu0 0.0
        %1342 = vmatpush1.msra.mxu0 %v1310
        %1343 = vmatprep.subr.mxu0 0.0
        %1344 = vmatpush1.msra.mxu0 0.0
        %1345 = vmatprep.subr.mxu0 0.0
        %1346 = vmatpush1.msra.mxu0 0.0
        %1347 = vmatprep.subr.mxu0 0.0
        %1348 = vmatpush1.msra.mxu0 0.0
        %1349 = vmatprep.subr.mxu0 0.0
        %1350 = vmatpush1.msra.mxu0 0.0
        %1351 = vmatprep.subr.mxu0 0.0
        %1352 = vmatpush1.msra.mxu0 0.0
        %1353 = vmatprep.subr.mxu0 0.0
        %1354 = vmatpush1.msra.mxu0 0.0
        %1355 = vmatprep.subr.mxu0 0.0
        %1356 = vmatpush1.msra.mxu0 0.0
        %1357 = vmatprep.subr.mxu0 0.0
        %1358 = vmatpush1.msra.mxu0 0.0
        %1359 = vmatprep.subr.mxu0 0.0
        %1360 = vmatpush1.msra.mxu0 0.0
        %1361 = vmatprep.subr.mxu0 0.0
        %1362 = vmatpush1.msra.mxu0 0.0
        %1363 = vmatprep.subr.mxu0 0.0
        %1364 = vmatpush1.msra.mxu0 0.0
        %1365 = vmatprep.subr.mxu0 0.0
        %1366 = vmatpush1.msra.mxu0 0.0
        %1367 = vmatprep.subr.mxu0 0.0
        %1368 = vmatpush1.msra.mxu0 0.0
        %1369 = vmatprep.subr.mxu0 0.0
        %1370 = vmatpush1.msra.mxu0 0.0
        %1371 = vmatprep.subr.mxu0 0.0
        %1372 = vmatpush1.msra.mxu0 0.0
        %1373 = vmatprep.subr.mxu0 0.0
        %1374 = vmatpush1.msra.mxu0 0.0
        %1375 = vmatprep.mubr.f32.mxu0 0.0
        %1376 = vmatmul.mubr.f32.gmra.mrb[0].mxu0 %v1258
        %v1377 = vpop.f32.mrb[0].mxu0
        %v1378 = vadd.f32 0.0, %v1377
        %v1379 = vpop.f32.mrb[0].mxu0
        %1380 = vmatprep.mubr.f32.mxu0 0.0
        %1381 = vmatmul.mubr.f32.gmra.mrb[0].mxu0 %v1259
        %v1382 = vpop.f32.mrb[0].mxu0
        %v1383 = vadd.f32 0.0, %v1382
        %v1384 = vpop.f32.mrb[0].mxu0
        %1385 = vmatprep.mubr.f32.mxu0 0.0
        %1386 = vmatmul.mubr.f32.gmra.mrb[0].mxu0 %v1260
        %v1387 = vpop.f32.mrb[0].mxu0
        %v1388 = vadd.f32 0.0, %v1387
        %v1389 = vpop.f32.mrb[0].mxu0
        %1390 = vmatprep.mubr.f32.mxu0 0.0
        %1391 = vmatmul.mubr.f32.gmra.mrb[0].mxu0 %v1261
        %v1392 = vpop.f32.mrb[0].mxu0
        %v1393 = vadd.f32 0.0, %v1392
        %v1394 = vpop.f32.mrb[0].mxu0
        %1395 = vmatprep.mubr.f32.mxu0 0.0
        %1396 = vmatmul.mubr.f32.gmra.mrb[0].mxu0 %v1262
        %v1397 = vpop.f32.mrb[0].mxu0
        %v1398 = vadd.f32 0.0, %v1397
        %v1399 = vpop.f32.mrb[0].mxu0
        %1400 = vmatprep.mubr.f32.mxu0 0.0
        %1401 = vmatmul.mubr.f32.gmra.mrb[0].mxu0 %v1263
        %v1402 = vpop.f32.mrb[0].mxu0
        %v1403 = vadd.f32 0.0, %v1402
        %v1404 = vpop.f32.mrb[0].mxu0
        %1405 = vmatprep.mubr.f32.mxu0 0.0
        %1406 = vmatmul.mubr.f32.gmra.mrb[0].mxu0 %v1264
        %v1407 = vpop.f32.mrb[0].mxu0
        %v1408 = vadd.f32 0.0, %v1407
        %v1409 = vpop.f32.mrb[0].mxu0
        %1410 = vmatprep.mubr.f32.mxu0 0.0
        %1411 = vmatmul.mubr.f32.gmra.mrb[0].mxu0 %v1265
        %v1412 = vpop.f32.mrb[0].mxu0
        %v1413 = vadd.f32 0.0, %v1412
        %v1414 = vpop.f32.mrb[0].mxu0
        %1415 = vmatprep.mubr.f32.mxu0 0.0
        %1416 = vmatmul.mubr.f32.gmra.mrb[0].mxu0 %v1266
        %v1417 = vpop.f32.mrb[0].mxu0
        %v1418 = vadd.f32 0.0, %v1417
        %v1419 = vpop.f32.mrb[0].mxu0
        %1420 = vmatprep.mubr.f32.mxu0 0.0
        %1421 = vmatmul.mubr.f32.gmra.mrb[0].mxu0 %v1267
        %v1422 = vpop.f32.mrb[0].mxu0
        %v1423 = vadd.f32 0.0, %v1422
        %v1424 = vpop.f32.mrb[0].mxu0
        %1425 = vmatprep.mubr.f32.mxu0 0.0
        %1426 = vmatmul.mubr.f32.gmra.mrb[0].mxu0 %v1268
        %v1427 = vpop.f32.mrb[0].mxu0
        %v1428 = vadd.f32 0.0, %v1427
        %v1429 = vpop.f32.mrb[0].mxu0
        %1430 = vmatprep.mubr.f32.mxu0 0.0
        %1431 = vmatmul.mubr.f32.gmra.mrb[0].mxu0 %v1269
        %v1432 = vpop.f32.mrb[0].mxu0
        %v1433 = vadd.f32 0.0, %v1432
        %v1434 = vpop.f32.mrb[0].mxu0
        %1435 = vmatprep.mubr.f32.mxu0 0.0
        %1436 = vmatmul.mubr.f32.gmra.mrb[0].mxu0 %v1270
        %v1437 = vpop.f32.mrb[0].mxu0
        %v1438 = vadd.f32 0.0, %v1437
        %v1439 = vpop.f32.mrb[0].mxu0
        %1440 = vmatprep.mubr.f32.mxu0 0.0
        %1441 = vmatmul.mubr.f32.gmra.mrb[0].mxu0 %v1271
        %v1442 = vpop.f32.mrb[0].mxu0
        %v1443 = vadd.f32 0.0, %v1442
        %v1444 = vpop.f32.mrb[0].mxu0
        %1445 = vmatprep.mubr.f32.mxu0 0.0
        %1446 = vmatmul.mubr.f32.gmra.mrb[0].mxu0 %v1272
        %v1447 = vpop.f32.mrb[0].mxu0
        %v1448 = vadd.f32 0.0, %v1447
        %v1449 = vpop.f32.mrb[0].mxu0
        %1450 = vmatprep.mubr.f32.mxu0 0.0
        %1451 = vmatmul.mubr.f32.gmra.mrb[0].mxu0 %v1273
        %v1452 = vpop.f32.mrb[0].mxu0
        %v1453 = vadd.f32 0.0, %v1452
        %v1454 = vpop.f32.mrb[0].mxu0
        %1455 = vmatprep.mubr.f32.mxu0 0.0
        %1456 = vmatmul.mubr.f32.gmra.mrb[0].mxu0 %v1274
        %v1457 = vpop.f32.mrb[0].mxu0
        %v1458 = vadd.f32 0.0, %v1457
        %v1459 = vpop.f32.mrb[0].mxu0
        %1460 = vmatprep.mubr.f32.mxu0 0.0
        %1461 = vmatmul.mubr.f32.gmra.mrb[0].mxu0 %v1275
        %v1462 = vpop.f32.mrb[0].mxu0
        %v1463 = vadd.f32 0.0, %v1462
        %v1464 = vpop.f32.mrb[0].mxu0
        %1465 = vmatprep.mubr.f32.mxu0 0.0
        %1466 = vmatmul.mubr.f32.gmra.mrb[0].mxu0 %v1276
        %v1467 = vpop.f32.mrb[0].mxu0
        %v1468 = vadd.f32 0.0, %v1467
        %v1469 = vpop.f32.mrb[0].mxu0
        %1470 = vmatprep.mubr.f32.mxu0 0.0
        %1471 = vmatmul.mubr.f32.gmra.mrb[0].mxu0 %v1277
        %v1472 = vpop.f32.mrb[0].mxu0
        %v1473 = vadd.f32 0.0, %v1472
        %v1474 = vpop.f32.mrb[0].mxu0
        %1475 = vmatprep.mubr.f32.mxu0 0.0
        %1476 = vmatmul.mubr.f32.gmra.mrb[0].mxu0 %v1278
        %v1477 = vpop.f32.mrb[0].mxu0
        %v1478 = vadd.f32 0.0, %v1477
        %v1479 = vpop.f32.mrb[0].mxu0
        %1480 = vmatprep.mubr.f32.mxu0 0.0
        %1481 = vmatmul.mubr.f32.gmra.mrb[0].mxu0 %v1279
        %v1482 = vpop.f32.mrb[0].mxu0
        %v1483 = vadd.f32 0.0, %v1482
        %v1484 = vpop.f32.mrb[0].mxu0
        %1485 = vmatprep.mubr.f32.mxu0 0.0
        %1486 = vmatmul.mubr.f32.gmra.mrb[0].mxu0 %v1280
        %v1487 = vpop.f32.mrb[0].mxu0
        %v1488 = vadd.f32 0.0, %v1487
        %v1489 = vpop.f32.mrb[0].mxu0
        %1490 = vmatprep.mubr.f32.mxu0 0.0
        %1491 = vmatmul.mubr.f32.gmra.mrb[0].mxu0 %v1281
        %v1492 = vpop.f32.mrb[0].mxu0
        %v1493 = vadd.f32 0.0, %v1492
        %v1494 = vpop.f32.mrb[0].mxu0
        %1495 = vmatprep.mubr.f32.mxu0 0.0
        %1496 = vmatmul.mubr.f32.gmra.mrb[0].mxu0 %v1282
        %v1497 = vpop.f32.mrb[0].mxu0
        %v1498 = vadd.f32 0.0, %v1497
        %v1499 = vpop.f32.mrb[0].mxu0
        %1500 = vmatprep.mubr.f32.mxu0 0.0
        %1501 = vmatmul.mubr.f32.gmra.mrb[0].mxu0 %v1283
        %v1502 = vpop.f32.mrb[0].mxu0
        %v1503 = vadd.f32 0.0, %v1502
        %v1504 = vpop.f32.mrb[0].mxu0
        %1505 = vmatprep.mubr.f32.mxu0 0.0
        %1506 = vmatmul.mubr.f32.gmra.mrb[0].mxu0 %v1284
        %v1507 = vpop.f32.mrb[0].mxu0
        %v1508 = vadd.f32 0.0, %v1507
        %v1509 = vpop.f32.mrb[0].mxu0
        %1510 = vmatprep.mubr.f32.mxu0 0.0
        %1511 = vmatmul.mubr.f32.gmra.mrb[0].mxu0 %v1285
        %v1512 = vpop.f32.mrb[0].mxu0
        %v1513 = vadd.f32 0.0, %v1512
        %v1514 = vpop.f32.mrb[0].mxu0
        %1515 = vmatprep.mubr.f32.mxu0 0.0
        %1516 = vmatmul.mubr.f32.gmra.mrb[0].mxu0 %v1286
        %v1517 = vpop.f32.mrb[0].mxu0
        %v1518 = vadd.f32 0.0, %v1517
        %v1519 = vpop.f32.mrb[0].mxu0
        %1520 = vmatprep.mubr.f32.mxu0 0.0
        %1521 = vmatmul.mubr.f32.gmra.mrb[0].mxu0 %v1287
        %v1522 = vpop.f32.mrb[0].mxu0
        %v1523 = vadd.f32 0.0, %v1522
        %v1524 = vpop.f32.mrb[0].mxu0
        %1525 = vmatprep.mubr.f32.mxu0 0.0
        %1526 = vmatmul.mubr.f32.gmra.mrb[0].mxu0 %v1288
        %v1527 = vpop.f32.mrb[0].mxu0
        %v1528 = vadd.f32 0.0, %v1527
        %v1529 = vpop.f32.mrb[0].mxu0
        %1530 = vmatprep.mubr.f32.mxu0 0.0
        %1531 = vmatmul.mubr.f32.gmra.mrb[0].mxu0 %v1289
        %v1532 = vpop.f32.mrb[0].mxu0
        %v1533 = vadd.f32 0.0, %v1532
        %v1534 = vpop.f32.mrb[0].mxu0
        %1535 = vmatprep.mubr.f32.mxu0 0.0
        %1536 = vmatmul.mubr.f32.gmra.mrb[0].mxu0 %v1290
        %v1537 = vpop.f32.mrb[0].mxu0
        %v1538 = vadd.f32 0.0, %v1537
        %v1539 = vpop.f32.mrb[0].mxu0
        %1540 = vmatprep.mubr.f32.mxu0 0.0
        %1541 = vmatmul.mubr.f32.gmra.mrb[0].mxu0 %v1291
        %v1542 = vpop.f32.mrb[0].mxu0
        %v1543 = vadd.f32 0.0, %v1542
        %v1544 = vpop.f32.mrb[0].mxu0
        %1545 = vmatprep.mubr.f32.mxu0 0.0
        %1546 = vmatmul.mubr.f32.gmra.mrb[0].mxu0 %v1292
        %v1547 = vpop.f32.mrb[0].mxu0
        %v1548 = vadd.f32 0.0, %v1547
        %v1549 = vpop.f32.mrb[0].mxu0
        %1550 = vmatprep.mubr.f32.mxu0 0.0
        %1551 = vmatmul.mubr.f32.gmra.mrb[0].mxu0 %v1293
        %v1552 = vpop.f32.mrb[0].mxu0
        %v1553 = vadd.f32 0.0, %v1552
        %v1554 = vpop.f32.mrb[0].mxu0
        %1555 = vdwg.mxu0
        %v1556 = vld [vmem:[#allocation3] sm:$0xff]
        %v1557 = vld [vmem:[#allocation3 + $0x8] sm:$0xff]
        %v1558 = vld [vmem:[#allocation3 + $0x10] sm:$0xff]
        %v1559 = vld [vmem:[#allocation3 + $0x18] sm:$0xff]
        %v1560 = vld [vmem:[#allocation3 + $0x20] sm:$0xff]
        %v1561 = vld [vmem:[#allocation3 + $0x28] sm:$0xff]
        %v1562 = vld [vmem:[#allocation3 + $0x30] sm:$0xff]
        %v1563 = vld [vmem:[#allocation3 + $0x38] sm:$0xff]
        %v1564 = vld [vmem:[#allocation3 + $0x40] sm:$0xff]
        %v1565 = vld [vmem:[#allocation3 + $0x48] sm:$0xff]
        %v1566 = vld [vmem:[#allocation3 + $0x50] sm:$0xff]
        %v1567 = vld [vmem:[#allocation3 + $0x58] sm:$0xff]
        %v1568 = vld [vmem:[#allocation3 + $0x60] sm:$0xff]
        %v1569 = vld [vmem:[#allocation3 + $0x68] sm:$0xff]
        %v1570 = vld [vmem:[#allocation3 + $0x70] sm:$0xff]
        %v1571 = vld [vmem:[#allocation3 + $0x78] sm:$0xff]
        %v1572 = vld [vmem:[#allocation3 + $0x80] sm:$0xff]
        %v1573 = vld [vmem:[#allocation3 + $0x88] sm:$0xff]
        %v1574 = vld [vmem:[#allocation3 + $0x90] sm:$0xff]
        %v1575 = vld [vmem:[#allocation3 + $0x98] sm:$0xff]
        %v1576 = vld [vmem:[#allocation3 + $0xa0] sm:$0xff]
        %v1577 = vld [vmem:[#allocation3 + $0xa8] sm:$0xff]
        %v1578 = vld [vmem:[#allocation3 + $0xb0] sm:$0xff]
        %v1579 = vld [vmem:[#allocation3 + $0xb8] sm:$0xff]
        %v1580 = vld [vmem:[#allocation3 + $0xc0] sm:$0xff]
        %v1581 = vld [vmem:[#allocation3 + $0xc8] sm:$0xff]
        %v1582 = vld [vmem:[#allocation3 + $0xd0] sm:$0xff]
        %v1583 = vld [vmem:[#allocation3 + $0xd8] sm:$0xff]
        %v1584 = vld [vmem:[#allocation3 + $0xe0] sm:$0xff]
        %v1585 = vld [vmem:[#allocation3 + $0xe8] sm:$0xff]
        %v1586 = vld [vmem:[#allocation3 + $0xf0] sm:$0xff]
        %v1587 = vld [vmem:[#allocation3 + $0xf8] sm:$0xff]
        %v1588 = vld [vmem:[#allocation3 + $0x100] sm:$0xff]
        %v1589 = vld [vmem:[#allocation3 + $0x108] sm:$0xff]
        %v1590 = vld [vmem:[#allocation3 + $0x110] sm:$0xff]
        %v1591 = vld [vmem:[#allocation3 + $0x118] sm:$0xff]
        %v1592 = vadd.f32 %v1556, %v1378
        %v1593 = vadd.f32 %v1557, %v1383
        %v1594 = vadd.f32 %v1558, %v1388
        %v1595 = vadd.f32 %v1559, %v1393
        %v1596 = vadd.f32 %v1560, %v1398
        %v1597 = vadd.f32 %v1561, %v1403
        %v1598 = vadd.f32 %v1562, %v1408
        %v1599 = vadd.f32 %v1563, %v1413
        %v1600 = vadd.f32 %v1564, %v1418
        %v1601 = vadd.f32 %v1565, %v1423
        %v1602 = vadd.f32 %v1566, %v1428
        %v1603 = vadd.f32 %v1567, %v1433
        %v1604 = vadd.f32 %v1568, %v1438
        %v1605 = vadd.f32 %v1569, %v1443
        %v1606 = vadd.f32 %v1570, %v1448
        %v1607 = vadd.f32 %v1571, %v1453
        %v1608 = vadd.f32 %v1572, %v1458
        %v1609 = vadd.f32 %v1573, %v1463
        %v1610 = vadd.f32 %v1574, %v1468
        %v1611 = vadd.f32 %v1575, %v1473
        %v1612 = vadd.f32 %v1576, %v1478
        %v1613 = vadd.f32 %v1577, %v1483
        %v1614 = vadd.f32 %v1578, %v1488
        %v1615 = vadd.f32 %v1579, %v1493
        %v1616 = vadd.f32 %v1580, %v1498
        %v1617 = vadd.f32 %v1581, %v1503
        %v1618 = vadd.f32 %v1582, %v1508
        %v1619 = vadd.f32 %v1583, %v1513
        %v1620 = vadd.f32 %v1584, %v1518
        %v1621 = vadd.f32 %v1585, %v1523
        %v1622 = vadd.f32 %v1586, %v1528
        %v1623 = vadd.f32 %v1587, %v1533
        %v1624 = vadd.f32 %v1588, %v1538
        %v1625 = vadd.f32 %v1589, %v1543
        %v1626 = vadd.f32 %v1590, %v1548
        %v1627 = vadd.f32 %v1591, %v1553
        %1628 = vst [vmem:[#allocation3] sm:$0xff] %v1592
        %1629 = vst [vmem:[#allocation3 + $0x8] sm:$0xff] %v1593
        %1630 = vst [vmem:[#allocation3 + $0x10] sm:$0xff] %v1594
        %1631 = vst [vmem:[#allocation3 + $0x18] sm:$0xff] %v1595
        %1632 = vst [vmem:[#allocation3 + $0x20] sm:$0xff] %v1596
        %1633 = vst [vmem:[#allocation3 + $0x28] sm:$0xff] %v1597
        %1634 = vst [vmem:[#allocation3 + $0x30] sm:$0xff] %v1598
        %1635 = vst [vmem:[#allocation3 + $0x38] sm:$0xff] %v1599
        %1636 = vst [vmem:[#allocation3 + $0x40] sm:$0xff] %v1600
        %1637 = vst [vmem:[#allocation3 + $0x48] sm:$0xff] %v1601
        %1638 = vst [vmem:[#allocation3 + $0x50] sm:$0xff] %v1602
        %1639 = vst [vmem:[#allocation3 + $0x58] sm:$0xff] %v1603
        %1640 = vst [vmem:[#allocation3 + $0x60] sm:$0xff] %v1604
        %1641 = vst [vmem:[#allocation3 + $0x68] sm:$0xff] %v1605
        %1642 = vst [vmem:[#allocation3 + $0x70] sm:$0xff] %v1606
        %1643 = vst [vmem:[#allocation3 + $0x78] sm:$0xff] %v1607
        %1644 = vst [vmem:[#allocation3 + $0x80] sm:$0xff] %v1608
        %1645 = vst [vmem:[#allocation3 + $0x88] sm:$0xff] %v1609
        %1646 = vst [vmem:[#allocation3 + $0x90] sm:$0xff] %v1610
        %1647 = vst [vmem:[#allocation3 + $0x98] sm:$0xff] %v1611
        %1648 = vst [vmem:[#allocation3 + $0xa0] sm:$0xff] %v1612
        %1649 = vst [vmem:[#allocation3 + $0xa8] sm:$0xff] %v1613
        %1650 = vst [vmem:[#allocation3 + $0xb0] sm:$0xff] %v1614
        %1651 = vst [vmem:[#allocation3 + $0xb8] sm:$0xff] %v1615
        %1652 = vst [vmem:[#allocation3 + $0xc0] sm:$0xff] %v1616
        %1653 = vst [vmem:[#allocation3 + $0xc8] sm:$0xff] %v1617
        %1654 = vst [vmem:[#allocation3 + $0xd0] sm:$0xff] %v1618
        %1655 = vst [vmem:[#allocation3 + $0xd8] sm:$0xff] %v1619
        %1656 = vst [vmem:[#allocation3 + $0xe0] sm:$0xff] %v1620
        %1657 = vst [vmem:[#allocation3 + $0xe8] sm:$0xff] %v1621
        %1658 = vst [vmem:[#allocation3 + $0xf0] sm:$0xff] %v1622
        %1659 = vst [vmem:[#allocation3 + $0xf8] sm:$0xff] %v1623
        %1660 = vst [vmem:[#allocation3 + $0x100] sm:$0xff] %v1624
        %1661 = vst [vmem:[#allocation3 + $0x108] sm:$0xff] %v1625
        %1662 = vst [vmem:[#allocation3 + $0x110] sm:$0xff] %v1626
        %1663 = vst [vmem:[#allocation3 + $0x118] sm:$0xff] %v1627
        %v1664 = vld [vmem:[#allocation2 + $0x2] sm:$0xff]
        %v1665 = vld [vmem:[#allocation2 + $0xa] sm:$0xff]
        %v1666 = vld [vmem:[#allocation2 + $0x12] sm:$0xff]
        %v1667 = vld [vmem:[#allocation2 + $0x1a] sm:$0xff]
        %v1668 = vld [vmem:[#allocation2 + $0x22] sm:$0xff]
        %v1669 = vld [vmem:[#allocation2 + $0x2a] sm:$0xff]
        %v1670 = vld [vmem:[#allocation2 + $0x32] sm:$0xff]
        %v1671 = vld [vmem:[#allocation2 + $0x3a] sm:$0xff]
        %v1672 = vld [vmem:[#allocation2 + $0x42] sm:$0xff]
        %v1673 = vld [vmem:[#allocation2 + $0x4a] sm:$0xff]
        %v1674 = vld [vmem:[#allocation2 + $0x52] sm:$0xff]
        %v1675 = vld [vmem:[#allocation2 + $0x5a] sm:$0xff]
        %v1676 = vld [vmem:[#allocation2 + $0x62] sm:$0xff]
        %v1677 = vld [vmem:[#allocation2 + $0x6a] sm:$0xff]
        %v1678 = vld [vmem:[#allocation2 + $0x72] sm:$0xff]
        %v1679 = vld [vmem:[#allocation2 + $0x7a] sm:$0xff]
        %v1680 = vld [vmem:[#allocation2 + $0x82] sm:$0xff]
        %v1681 = vld [vmem:[#allocation2 + $0x8a] sm:$0xff]
        %v1682 = vld [vmem:[#allocation2 + $0x92] sm:$0xff]
        %v1683 = vld [vmem:[#allocation2 + $0x9a] sm:$0xff]
        %v1684 = vld [vmem:[#allocation2 + $0xa2] sm:$0xff]
        %v1685 = vld [vmem:[#allocation2 + $0xaa] sm:$0xff]
        %v1686 = vld [vmem:[#allocation2 + $0xb2] sm:$0xff]
        %v1687 = vld [vmem:[#allocation2 + $0xba] sm:$0xff]
        %v1688 = vld [vmem:[#allocation2 + $0xc2] sm:$0xff]
        %v1689 = vld [vmem:[#allocation2 + $0xca] sm:$0xff]
        %v1690 = vld [vmem:[#allocation2 + $0xd2] sm:$0xff]
        %v1691 = vld [vmem:[#allocation2 + $0xda] sm:$0xff]
        %v1692 = vld [vmem:[#allocation2 + $0xe2] sm:$0xff]
        %v1693 = vld [vmem:[#allocation2 + $0xea] sm:$0xff]
        %v1694 = vld [vmem:[#allocation2 + $0xf2] sm:$0xff]
        %v1695 = vld [vmem:[#allocation2 + $0xfa] sm:$0xff]
        %v1696 = vld [vmem:[#allocation2 + $0x102] sm:$0xff]
        %v1697 = vld [vmem:[#allocation2 + $0x10a] sm:$0xff]
        %v1698 = vld [vmem:[#allocation2 + $0x112] sm:$0xff]
        %v1699 = vld [vmem:[#allocation2 + $0x11a] sm:$0xff]
        %s1700 = scalar_lea.vmem [#allocation13], 256
        %v1701 = vld [vmem:[%s1700] sm:$0xff]
        %v1702 = vld [vmem:[%s1700 + $0x8] sm:$0xff]
        %v1703 = vld [vmem:[%s1700 + $0x10] sm:$0xff]
        %v1704 = vld [vmem:[%s1700 + $0x18] sm:$0xff]
        %v1705 = vld [vmem:[%s1700 + $0x20] sm:$0xff]
        %v1706 = vld [vmem:[%s1700 + $0x28] sm:$0xff]
        %v1707 = vld [vmem:[%s1700 + $0x30] sm:$0xff]
        %v1708 = vld [vmem:[%s1700 + $0x38] sm:$0xff]
        %v1709 = vld [vmem:[%s1700 + $0x40] sm:$0xff]
        %v1710 = vld [vmem:[%s1700 + $0x48] sm:$0xff]
        %v1711 = vld [vmem:[%s1700 + $0x50] sm:$0xff]
        %v1712 = vld [vmem:[%s1700 + $0x58] sm:$0xff]
        %v1713 = vld [vmem:[%s1700 + $0x60] sm:$0xff]
        %v1714 = vld [vmem:[%s1700 + $0x68] sm:$0xff]
        %v1715 = vld [vmem:[%s1700 + $0x70] sm:$0xff]
        %v1716 = vld [vmem:[%s1700 + $0x78] sm:$0xff]
        %1717 = vmatprep.subr.mxu0 0.0
        %1718 = vmatpush1.msra.mxu0 %v1701
        %1719 = vmatprep.subr.mxu0 0.0
        %1720 = vmatpush1.msra.mxu0 %v1702
        %1721 = vmatprep.subr.mxu0 0.0
        %1722 = vmatpush1.msra.mxu0 %v1703
        %1723 = vmatprep.subr.mxu0 0.0
        %1724 = vmatpush1.msra.mxu0 %v1704
        %1725 = vmatprep.subr.mxu0 0.0
        %1726 = vmatpush1.msra.mxu0 %v1705
        %1727 = vmatprep.subr.mxu0 0.0
        %1728 = vmatpush1.msra.mxu0 %v1706
        %1729 = vmatprep.subr.mxu0 0.0
        %1730 = vmatpush1.msra.mxu0 %v1707
        %1731 = vmatprep.subr.mxu0 0.0
        %1732 = vmatpush1.msra.mxu0 %v1708
        %1733 = vmatprep.subr.mxu0 0.0
        %1734 = vmatpush1.msra.mxu0 %v1709
        %1735 = vmatprep.subr.mxu0 0.0
        %1736 = vmatpush1.msra.mxu0 %v1710
        %1737 = vmatprep.subr.mxu0 0.0
        %1738 = vmatpush1.msra.mxu0 %v1711
        %1739 = vmatprep.subr.mxu0 0.0
        %1740 = vmatpush1.msra.mxu0 %v1712
        %1741 = vmatprep.subr.mxu0 0.0
        %1742 = vmatpush1.msra.mxu0 %v1713
        %1743 = vmatprep.subr.mxu0 0.0
        %1744 = vmatpush1.msra.mxu0 %v1714
        %1745 = vmatprep.subr.mxu0 0.0
        %1746 = vmatpush1.msra.mxu0 %v1715
        %1747 = vmatprep.subr.mxu0 0.0
        %1748 = vmatpush1.msra.mxu0 %v1716
        %1749 = vmatprep.subr.mxu0 0.0
        %1750 = vmatpush1.msra.mxu0 0.0
        %1751 = vmatprep.subr.mxu0 0.0
        %1752 = vmatpush1.msra.mxu0 0.0
        %1753 = vmatprep.subr.mxu0 0.0
        %1754 = vmatpush1.msra.mxu0 0.0
        %1755 = vmatprep.subr.mxu0 0.0
        %1756 = vmatpush1.msra.mxu0 0.0
        %1757 = vmatprep.subr.mxu0 0.0
        %1758 = vmatpush1.msra.mxu0 0.0
        %1759 = vmatprep.subr.mxu0 0.0
        %1760 = vmatpush1.msra.mxu0 0.0
        %1761 = vmatprep.subr.mxu0 0.0
        %1762 = vmatpush1.msra.mxu0 0.0
        %1763 = vmatprep.subr.mxu0 0.0
        %1764 = vmatpush1.msra.mxu0 0.0
        %1765 = vmatprep.subr.mxu0 0.0
        %1766 = vmatpush1.msra.mxu0 0.0
        %1767 = vmatprep.subr.mxu0 0.0
        %1768 = vmatpush1.msra.mxu0 0.0
        %1769 = vmatprep.subr.mxu0 0.0
        %1770 = vmatpush1.msra.mxu0 0.0
        %1771 = vmatprep.subr.mxu0 0.0
        %1772 = vmatpush1.msra.mxu0 0.0
        %1773 = vmatprep.subr.mxu0 0.0
        %1774 = vmatpush1.msra.mxu0 0.0
        %1775 = vmatprep.subr.mxu0 0.0
        %1776 = vmatpush1.msra.mxu0 0.0
        %1777 = vmatprep.subr.mxu0 0.0
        %1778 = vmatpush1.msra.mxu0 0.0
        %1779 = vmatprep.subr.mxu0 0.0
        %1780 = vmatpush1.msra.mxu0 0.0
        %1781 = vmatprep.mubr.f32.mxu0 0.0
        %1782 = vmatmul.mubr.f32.gmra.mrb[0].mxu0 %v1664
        %v1783 = vpop.f32.mrb[0].mxu0
        %v1784 = vadd.f32 0.0, %v1783
        %v1785 = vpop.f32.mrb[0].mxu0
        %1786 = vmatprep.mubr.f32.mxu0 0.0
        %1787 = vmatmul.mubr.f32.gmra.mrb[0].mxu0 %v1665
        %v1788 = vpop.f32.mrb[0].mxu0
        %v1789 = vadd.f32 0.0, %v1788
        %v1790 = vpop.f32.mrb[0].mxu0
        %1791 = vmatprep.mubr.f32.mxu0 0.0
        %1792 = vmatmul.mubr.f32.gmra.mrb[0].mxu0 %v1666
        %v1793 = vpop.f32.mrb[0].mxu0
        %v1794 = vadd.f32 0.0, %v1793
        %v1795 = vpop.f32.mrb[0].mxu0
        %1796 = vmatprep.mubr.f32.mxu0 0.0
        %1797 = vmatmul.mubr.f32.gmra.mrb[0].mxu0 %v1667
        %v1798 = vpop.f32.mrb[0].mxu0
        %v1799 = vadd.f32 0.0, %v1798
        %v1800 = vpop.f32.mrb[0].mxu0
        %1801 = vmatprep.mubr.f32.mxu0 0.0
        %1802 = vmatmul.mubr.f32.gmra.mrb[0].mxu0 %v1668
        %v1803 = vpop.f32.mrb[0].mxu0
        %v1804 = vadd.f32 0.0, %v1803
        %v1805 = vpop.f32.mrb[0].mxu0
        %1806 = vmatprep.mubr.f32.mxu0 0.0
        %1807 = vmatmul.mubr.f32.gmra.mrb[0].mxu0 %v1669
        %v1808 = vpop.f32.mrb[0].mxu0
        %v1809 = vadd.f32 0.0, %v1808
        %v1810 = vpop.f32.mrb[0].mxu0
        %1811 = vmatprep.mubr.f32.mxu0 0.0
        %1812 = vmatmul.mubr.f32.gmra.mrb[0].mxu0 %v1670
        %v1813 = vpop.f32.mrb[0].mxu0
        %v1814 = vadd.f32 0.0, %v1813
        %v1815 = vpop.f32.mrb[0].mxu0
        %1816 = vmatprep.mubr.f32.mxu0 0.0
        %1817 = vmatmul.mubr.f32.gmra.mrb[0].mxu0 %v1671
        %v1818 = vpop.f32.mrb[0].mxu0
        %v1819 = vadd.f32 0.0, %v1818
        %v1820 = vpop.f32.mrb[0].mxu0
        %1821 = vmatprep.mubr.f32.mxu0 0.0
        %1822 = vmatmul.mubr.f32.gmra.mrb[0].mxu0 %v1672
        %v1823 = vpop.f32.mrb[0].mxu0
        %v1824 = vadd.f32 0.0, %v1823
        %v1825 = vpop.f32.mrb[0].mxu0
        %1826 = vmatprep.mubr.f32.mxu0 0.0
        %1827 = vmatmul.mubr.f32.gmra.mrb[0].mxu0 %v1673
        %v1828 = vpop.f32.mrb[0].mxu0
        %v1829 = vadd.f32 0.0, %v1828
        %v1830 = vpop.f32.mrb[0].mxu0
        %1831 = vmatprep.mubr.f32.mxu0 0.0
        %1832 = vmatmul.mubr.f32.gmra.mrb[0].mxu0 %v1674
        %v1833 = vpop.f32.mrb[0].mxu0
        %v1834 = vadd.f32 0.0, %v1833
        %v1835 = vpop.f32.mrb[0].mxu0
        %1836 = vmatprep.mubr.f32.mxu0 0.0
        %1837 = vmatmul.mubr.f32.gmra.mrb[0].mxu0 %v1675
        %v1838 = vpop.f32.mrb[0].mxu0
        %v1839 = vadd.f32 0.0, %v1838
        %v1840 = vpop.f32.mrb[0].mxu0
        %1841 = vmatprep.mubr.f32.mxu0 0.0
        %1842 = vmatmul.mubr.f32.gmra.mrb[0].mxu0 %v1676
        %v1843 = vpop.f32.mrb[0].mxu0
        %v1844 = vadd.f32 0.0, %v1843
        %v1845 = vpop.f32.mrb[0].mxu0
        %1846 = vmatprep.mubr.f32.mxu0 0.0
        %1847 = vmatmul.mubr.f32.gmra.mrb[0].mxu0 %v1677
        %v1848 = vpop.f32.mrb[0].mxu0
        %v1849 = vadd.f32 0.0, %v1848
        %v1850 = vpop.f32.mrb[0].mxu0
        %1851 = vmatprep.mubr.f32.mxu0 0.0
        %1852 = vmatmul.mubr.f32.gmra.mrb[0].mxu0 %v1678
        %v1853 = vpop.f32.mrb[0].mxu0
        %v1854 = vadd.f32 0.0, %v1853
        %v1855 = vpop.f32.mrb[0].mxu0
        %1856 = vmatprep.mubr.f32.mxu0 0.0
        %1857 = vmatmul.mubr.f32.gmra.mrb[0].mxu0 %v1679
        %v1858 = vpop.f32.mrb[0].mxu0
        %v1859 = vadd.f32 0.0, %v1858
        %v1860 = vpop.f32.mrb[0].mxu0
        %1861 = vmatprep.mubr.f32.mxu0 0.0
        %1862 = vmatmul.mubr.f32.gmra.mrb[0].mxu0 %v1680
        %v1863 = vpop.f32.mrb[0].mxu0
        %v1864 = vadd.f32 0.0, %v1863
        %v1865 = vpop.f32.mrb[0].mxu0
        %1866 = vmatprep.mubr.f32.mxu0 0.0
        %1867 = vmatmul.mubr.f32.gmra.mrb[0].mxu0 %v1681
        %v1868 = vpop.f32.mrb[0].mxu0
        %v1869 = vadd.f32 0.0, %v1868
        %v1870 = vpop.f32.mrb[0].mxu0
        %1871 = vmatprep.mubr.f32.mxu0 0.0
        %1872 = vmatmul.mubr.f32.gmra.mrb[0].mxu0 %v1682
        %v1873 = vpop.f32.mrb[0].mxu0
        %v1874 = vadd.f32 0.0, %v1873
        %v1875 = vpop.f32.mrb[0].mxu0
        %1876 = vmatprep.mubr.f32.mxu0 0.0
        %1877 = vmatmul.mubr.f32.gmra.mrb[0].mxu0 %v1683
        %v1878 = vpop.f32.mrb[0].mxu0
        %v1879 = vadd.f32 0.0, %v1878
        %v1880 = vpop.f32.mrb[0].mxu0
        %1881 = vmatprep.mubr.f32.mxu0 0.0
        %1882 = vmatmul.mubr.f32.gmra.mrb[0].mxu0 %v1684
        %v1883 = vpop.f32.mrb[0].mxu0
        %v1884 = vadd.f32 0.0, %v1883
        %v1885 = vpop.f32.mrb[0].mxu0
        %1886 = vmatprep.mubr.f32.mxu0 0.0
        %1887 = vmatmul.mubr.f32.gmra.mrb[0].mxu0 %v1685
        %v1888 = vpop.f32.mrb[0].mxu0
        %v1889 = vadd.f32 0.0, %v1888
        %v1890 = vpop.f32.mrb[0].mxu0
        %1891 = vmatprep.mubr.f32.mxu0 0.0
        %1892 = vmatmul.mubr.f32.gmra.mrb[0].mxu0 %v1686
        %v1893 = vpop.f32.mrb[0].mxu0
        %v1894 = vadd.f32 0.0, %v1893
        %v1895 = vpop.f32.mrb[0].mxu0
        %1896 = vmatprep.mubr.f32.mxu0 0.0
        %1897 = vmatmul.mubr.f32.gmra.mrb[0].mxu0 %v1687
        %v1898 = vpop.f32.mrb[0].mxu0
        %v1899 = vadd.f32 0.0, %v1898
        %v1900 = vpop.f32.mrb[0].mxu0
        %1901 = vmatprep.mubr.f32.mxu0 0.0
        %1902 = vmatmul.mubr.f32.gmra.mrb[0].mxu0 %v1688
        %v1903 = vpop.f32.mrb[0].mxu0
        %v1904 = vadd.f32 0.0, %v1903
        %v1905 = vpop.f32.mrb[0].mxu0
        %1906 = vmatprep.mubr.f32.mxu0 0.0
        %1907 = vmatmul.mubr.f32.gmra.mrb[0].mxu0 %v1689
        %v1908 = vpop.f32.mrb[0].mxu0
        %v1909 = vadd.f32 0.0, %v1908
        %v1910 = vpop.f32.mrb[0].mxu0
        %1911 = vmatprep.mubr.f32.mxu0 0.0
        %1912 = vmatmul.mubr.f32.gmra.mrb[0].mxu0 %v1690
        %v1913 = vpop.f32.mrb[0].mxu0
        %v1914 = vadd.f32 0.0, %v1913
        %v1915 = vpop.f32.mrb[0].mxu0
        %1916 = vmatprep.mubr.f32.mxu0 0.0
        %1917 = vmatmul.mubr.f32.gmra.mrb[0].mxu0 %v1691
        %v1918 = vpop.f32.mrb[0].mxu0
        %v1919 = vadd.f32 0.0, %v1918
        %v1920 = vpop.f32.mrb[0].mxu0
        %1921 = vmatprep.mubr.f32.mxu0 0.0
        %1922 = vmatmul.mubr.f32.gmra.mrb[0].mxu0 %v1692
        %v1923 = vpop.f32.mrb[0].mxu0
        %v1924 = vadd.f32 0.0, %v1923
        %v1925 = vpop.f32.mrb[0].mxu0
        %1926 = vmatprep.mubr.f32.mxu0 0.0
        %1927 = vmatmul.mubr.f32.gmra.mrb[0].mxu0 %v1693
        %v1928 = vpop.f32.mrb[0].mxu0
        %v1929 = vadd.f32 0.0, %v1928
        %v1930 = vpop.f32.mrb[0].mxu0
        %1931 = vmatprep.mubr.f32.mxu0 0.0
        %1932 = vmatmul.mubr.f32.gmra.mrb[0].mxu0 %v1694
        %v1933 = vpop.f32.mrb[0].mxu0
        %v1934 = vadd.f32 0.0, %v1933
        %v1935 = vpop.f32.mrb[0].mxu0
        %1936 = vmatprep.mubr.f32.mxu0 0.0
        %1937 = vmatmul.mubr.f32.gmra.mrb[0].mxu0 %v1695
        %v1938 = vpop.f32.mrb[0].mxu0
        %v1939 = vadd.f32 0.0, %v1938
        %v1940 = vpop.f32.mrb[0].mxu0
        %1941 = vmatprep.mubr.f32.mxu0 0.0
        %1942 = vmatmul.mubr.f32.gmra.mrb[0].mxu0 %v1696
        %v1943 = vpop.f32.mrb[0].mxu0
        %v1944 = vadd.f32 0.0, %v1943
        %v1945 = vpop.f32.mrb[0].mxu0
        %1946 = vmatprep.mubr.f32.mxu0 0.0
        %1947 = vmatmul.mubr.f32.gmra.mrb[0].mxu0 %v1697
        %v1948 = vpop.f32.mrb[0].mxu0
        %v1949 = vadd.f32 0.0, %v1948
        %v1950 = vpop.f32.mrb[0].mxu0
        %1951 = vmatprep.mubr.f32.mxu0 0.0
        %1952 = vmatmul.mubr.f32.gmra.mrb[0].mxu0 %v1698
        %v1953 = vpop.f32.mrb[0].mxu0
        %v1954 = vadd.f32 0.0, %v1953
        %v1955 = vpop.f32.mrb[0].mxu0
        %1956 = vmatprep.mubr.f32.mxu0 0.0
        %1957 = vmatmul.mubr.f32.gmra.mrb[0].mxu0 %v1699
        %v1958 = vpop.f32.mrb[0].mxu0
        %v1959 = vadd.f32 0.0, %v1958
        %v1960 = vpop.f32.mrb[0].mxu0
        %1961 = vdwg.mxu0
        %v1962 = vld [vmem:[#allocation3] sm:$0xff]
        %v1963 = vld [vmem:[#allocation3 + $0x8] sm:$0xff]
        %v1964 = vld [vmem:[#allocation3 + $0x10] sm:$0xff]
        %v1965 = vld [vmem:[#allocation3 + $0x18] sm:$0xff]
        %v1966 = vld [vmem:[#allocation3 + $0x20] sm:$0xff]
        %v1967 = vld [vmem:[#allocation3 + $0x28] sm:$0xff]
        %v1968 = vld [vmem:[#allocation3 + $0x30] sm:$0xff]
        %v1969 = vld [vmem:[#allocation3 + $0x38] sm:$0xff]
        %v1970 = vld [vmem:[#allocation3 + $0x40] sm:$0xff]
        %v1971 = vld [vmem:[#allocation3 + $0x48] sm:$0xff]
        %v1972 = vld [vmem:[#allocation3 + $0x50] sm:$0xff]
        %v1973 = vld [vmem:[#allocation3 + $0x58] sm:$0xff]
        %v1974 = vld [vmem:[#allocation3 + $0x60] sm:$0xff]
        %v1975 = vld [vmem:[#allocation3 + $0x68] sm:$0xff]
        %v1976 = vld [vmem:[#allocation3 + $0x70] sm:$0xff]
        %v1977 = vld [vmem:[#allocation3 + $0x78] sm:$0xff]
        %v1978 = vld [vmem:[#allocation3 + $0x80] sm:$0xff]
        %v1979 = vld [vmem:[#allocation3 + $0x88] sm:$0xff]
        %v1980 = vld [vmem:[#allocation3 + $0x90] sm:$0xff]
        %v1981 = vld [vmem:[#allocation3 + $0x98] sm:$0xff]
        %v1982 = vld [vmem:[#allocation3 + $0xa0] sm:$0xff]
        %v1983 = vld [vmem:[#allocation3 + $0xa8] sm:$0xff]
        %v1984 = vld [vmem:[#allocation3 + $0xb0] sm:$0xff]
        %v1985 = vld [vmem:[#allocation3 + $0xb8] sm:$0xff]
        %v1986 = vld [vmem:[#allocation3 + $0xc0] sm:$0xff]
        %v1987 = vld [vmem:[#allocation3 + $0xc8] sm:$0xff]
        %v1988 = vld [vmem:[#allocation3 + $0xd0] sm:$0xff]
        %v1989 = vld [vmem:[#allocation3 + $0xd8] sm:$0xff]
        %v1990 = vld [vmem:[#allocation3 + $0xe0] sm:$0xff]
        %v1991 = vld [vmem:[#allocation3 + $0xe8] sm:$0xff]
        %v1992 = vld [vmem:[#allocation3 + $0xf0] sm:$0xff]
        %v1993 = vld [vmem:[#allocation3 + $0xf8] sm:$0xff]
        %v1994 = vld [vmem:[#allocation3 + $0x100] sm:$0xff]
        %v1995 = vld [vmem:[#allocation3 + $0x108] sm:$0xff]
        %v1996 = vld [vmem:[#allocation3 + $0x110] sm:$0xff]
        %v1997 = vld [vmem:[#allocation3 + $0x118] sm:$0xff]
        %v1998 = vadd.f32 %v1962, %v1784
        %v1999 = vadd.f32 %v1963, %v1789
        %v2000 = vadd.f32 %v1964, %v1794
        %v2001 = vadd.f32 %v1965, %v1799
        %v2002 = vadd.f32 %v1966, %v1804
        %v2003 = vadd.f32 %v1967, %v1809
        %v2004 = vadd.f32 %v1968, %v1814
        %v2005 = vadd.f32 %v1969, %v1819
        %v2006 = vadd.f32 %v1970, %v1824
        %v2007 = vadd.f32 %v1971, %v1829
        %v2008 = vadd.f32 %v1972, %v1834
        %v2009 = vadd.f32 %v1973, %v1839
        %v2010 = vadd.f32 %v1974, %v1844
        %v2011 = vadd.f32 %v1975, %v1849
        %v2012 = vadd.f32 %v1976, %v1854
        %v2013 = vadd.f32 %v1977, %v1859
        %v2014 = vadd.f32 %v1978, %v1864
        %v2015 = vadd.f32 %v1979, %v1869
        %v2016 = vadd.f32 %v1980, %v1874
        %v2017 = vadd.f32 %v1981, %v1879
        %v2018 = vadd.f32 %v1982, %v1884
        %v2019 = vadd.f32 %v1983, %v1889
        %v2020 = vadd.f32 %v1984, %v1894
        %v2021 = vadd.f32 %v1985, %v1899
        %v2022 = vadd.f32 %v1986, %v1904
        %v2023 = vadd.f32 %v1987, %v1909
        %v2024 = vadd.f32 %v1988, %v1914
        %v2025 = vadd.f32 %v1989, %v1919
        %v2026 = vadd.f32 %v1990, %v1924
        %v2027 = vadd.f32 %v1991, %v1929
        %v2028 = vadd.f32 %v1992, %v1934
        %v2029 = vadd.f32 %v1993, %v1939
        %v2030 = vadd.f32 %v1994, %v1944
        %v2031 = vadd.f32 %v1995, %v1949
        %v2032 = vadd.f32 %v1996, %v1954
        %v2033 = vadd.f32 %v1997, %v1959
        %2034 = vst [vmem:[#allocation3] sm:$0xff] %v1998
        %2035 = vst [vmem:[#allocation3 + $0x8] sm:$0xff] %v1999
        %2036 = vst [vmem:[#allocation3 + $0x10] sm:$0xff] %v2000
        %2037 = vst [vmem:[#allocation3 + $0x18] sm:$0xff] %v2001
        %2038 = vst [vmem:[#allocation3 + $0x20] sm:$0xff] %v2002
        %2039 = vst [vmem:[#allocation3 + $0x28] sm:$0xff] %v2003
        %2040 = vst [vmem:[#allocation3 + $0x30] sm:$0xff] %v2004
        %2041 = vst [vmem:[#allocation3 + $0x38] sm:$0xff] %v2005
        %2042 = vst [vmem:[#allocation3 + $0x40] sm:$0xff] %v2006
        %2043 = vst [vmem:[#allocation3 + $0x48] sm:$0xff] %v2007
        %2044 = vst [vmem:[#allocation3 + $0x50] sm:$0xff] %v2008
        %2045 = vst [vmem:[#allocation3 + $0x58] sm:$0xff] %v2009
        %2046 = vst [vmem:[#allocation3 + $0x60] sm:$0xff] %v2010
        %2047 = vst [vmem:[#allocation3 + $0x68] sm:$0xff] %v2011
        %2048 = vst [vmem:[#allocation3 + $0x70] sm:$0xff] %v2012
        %2049 = vst [vmem:[#allocation3 + $0x78] sm:$0xff] %v2013
        %2050 = vst [vmem:[#allocation3 + $0x80] sm:$0xff] %v2014
        %2051 = vst [vmem:[#allocation3 + $0x88] sm:$0xff] %v2015
        %2052 = vst [vmem:[#allocation3 + $0x90] sm:$0xff] %v2016
        %2053 = vst [vmem:[#allocation3 + $0x98] sm:$0xff] %v2017
        %2054 = vst [vmem:[#allocation3 + $0xa0] sm:$0xff] %v2018
        %2055 = vst [vmem:[#allocation3 + $0xa8] sm:$0xff] %v2019
        %2056 = vst [vmem:[#allocation3 + $0xb0] sm:$0xff] %v2020
        %2057 = vst [vmem:[#allocation3 + $0xb8] sm:$0xff] %v2021
        %2058 = vst [vmem:[#allocation3 + $0xc0] sm:$0xff] %v2022
        %2059 = vst [vmem:[#allocation3 + $0xc8] sm:$0xff] %v2023
        %2060 = vst [vmem:[#allocation3 + $0xd0] sm:$0xff] %v2024
        %2061 = vst [vmem:[#allocation3 + $0xd8] sm:$0xff] %v2025
        %2062 = vst [vmem:[#allocation3 + $0xe0] sm:$0xff] %v2026
        %2063 = vst [vmem:[#allocation3 + $0xe8] sm:$0xff] %v2027
        %2064 = vst [vmem:[#allocation3 + $0xf0] sm:$0xff] %v2028
        %2065 = vst [vmem:[#allocation3 + $0xf8] sm:$0xff] %v2029
        %2066 = vst [vmem:[#allocation3 + $0x100] sm:$0xff] %v2030
        %2067 = vst [vmem:[#allocation3 + $0x108] sm:$0xff] %v2031
        %2068 = vst [vmem:[#allocation3 + $0x110] sm:$0xff] %v2032
        %2069 = vst [vmem:[#allocation3 + $0x118] sm:$0xff] %v2033
        %v2070 = vld [vmem:[#allocation2 + $0x12] sm:$0xff]
        %v2071 = vld [vmem:[#allocation2 + $0x1a] sm:$0xff]
        %v2072 = vld [vmem:[#allocation2 + $0x22] sm:$0xff]
        %v2073 = vld [vmem:[#allocation2 + $0x2a] sm:$0xff]
        %v2074 = vld [vmem:[#allocation2 + $0x32] sm:$0xff]
        %v2075 = vld [vmem:[#allocation2 + $0x3a] sm:$0xff]
        %v2076 = vld [vmem:[#allocation2 + $0x42] sm:$0xff]
        %v2077 = vld [vmem:[#allocation2 + $0x4a] sm:$0xff]
        %v2078 = vld [vmem:[#allocation2 + $0x52] sm:$0xff]
        %v2079 = vld [vmem:[#allocation2 + $0x5a] sm:$0xff]
        %v2080 = vld [vmem:[#allocation2 + $0x62] sm:$0xff]
        %v2081 = vld [vmem:[#allocation2 + $0x6a] sm:$0xff]
        %v2082 = vld [vmem:[#allocation2 + $0x72] sm:$0xff]
        %v2083 = vld [vmem:[#allocation2 + $0x7a] sm:$0xff]
        %v2084 = vld [vmem:[#allocation2 + $0x82] sm:$0xff]
        %v2085 = vld [vmem:[#allocation2 + $0x8a] sm:$0xff]
        %v2086 = vld [vmem:[#allocation2 + $0x92] sm:$0xff]
        %v2087 = vld [vmem:[#allocation2 + $0x9a] sm:$0xff]
        %v2088 = vld [vmem:[#allocation2 + $0xa2] sm:$0xff]
        %v2089 = vld [vmem:[#allocation2 + $0xaa] sm:$0xff]
        %v2090 = vld [vmem:[#allocation2 + $0xb2] sm:$0xff]
        %v2091 = vld [vmem:[#allocation2 + $0xba] sm:$0xff]
        %v2092 = vld [vmem:[#allocation2 + $0xc2] sm:$0xff]
        %v2093 = vld [vmem:[#allocation2 + $0xca] sm:$0xff]
        %v2094 = vld [vmem:[#allocation2 + $0xd2] sm:$0xff]
        %v2095 = vld [vmem:[#allocation2 + $0xda] sm:$0xff]
        %v2096 = vld [vmem:[#allocation2 + $0xe2] sm:$0xff]
        %v2097 = vld [vmem:[#allocation2 + $0xea] sm:$0xff]
        %v2098 = vld [vmem:[#allocation2 + $0xf2] sm:$0xff]
        %v2099 = vld [vmem:[#allocation2 + $0xfa] sm:$0xff]
        %v2100 = vld [vmem:[#allocation2 + $0x102] sm:$0xff]
        %v2101 = vld [vmem:[#allocation2 + $0x10a] sm:$0xff]
        %v2102 = vld [vmem:[#allocation2 + $0x112] sm:$0xff]
        %v2103 = vld [vmem:[#allocation2 + $0x11a] sm:$0xff]
        %v2104 = vld [vmem:[#allocation2 + $0x122] sm:$0xff]
        %v2105 = vld [vmem:[#allocation2 + $0x12a] sm:$0xff]
        %s2106 = scalar_lea.vmem [#allocation13], 384
        %v2107 = vld [vmem:[%s2106] sm:$0xff]
        %v2108 = vld [vmem:[%s2106 + $0x8] sm:$0xff]
        %v2109 = vld [vmem:[%s2106 + $0x10] sm:$0xff]
        %v2110 = vld [vmem:[%s2106 + $0x18] sm:$0xff]
        %v2111 = vld [vmem:[%s2106 + $0x20] sm:$0xff]
        %v2112 = vld [vmem:[%s2106 + $0x28] sm:$0xff]
        %v2113 = vld [vmem:[%s2106 + $0x30] sm:$0xff]
        %v2114 = vld [vmem:[%s2106 + $0x38] sm:$0xff]
        %v2115 = vld [vmem:[%s2106 + $0x40] sm:$0xff]
        %v2116 = vld [vmem:[%s2106 + $0x48] sm:$0xff]
        %v2117 = vld [vmem:[%s2106 + $0x50] sm:$0xff]
        %v2118 = vld [vmem:[%s2106 + $0x58] sm:$0xff]
        %v2119 = vld [vmem:[%s2106 + $0x60] sm:$0xff]
        %v2120 = vld [vmem:[%s2106 + $0x68] sm:$0xff]
        %v2121 = vld [vmem:[%s2106 + $0x70] sm:$0xff]
        %v2122 = vld [vmem:[%s2106 + $0x78] sm:$0xff]
        %2123 = vmatprep.subr.mxu0 0.0
        %2124 = vmatpush1.msra.mxu0 %v2107
        %2125 = vmatprep.subr.mxu0 0.0
        %2126 = vmatpush1.msra.mxu0 %v2108
        %2127 = vmatprep.subr.mxu0 0.0
        %2128 = vmatpush1.msra.mxu0 %v2109
        %2129 = vmatprep.subr.mxu0 0.0
        %2130 = vmatpush1.msra.mxu0 %v2110
        %2131 = vmatprep.subr.mxu0 0.0
        %2132 = vmatpush1.msra.mxu0 %v2111
        %2133 = vmatprep.subr.mxu0 0.0
        %2134 = vmatpush1.msra.mxu0 %v2112
        %2135 = vmatprep.subr.mxu0 0.0
        %2136 = vmatpush1.msra.mxu0 %v2113
        %2137 = vmatprep.subr.mxu0 0.0
        %2138 = vmatpush1.msra.mxu0 %v2114
        %2139 = vmatprep.subr.mxu0 0.0
        %2140 = vmatpush1.msra.mxu0 %v2115
        %2141 = vmatprep.subr.mxu0 0.0
        %2142 = vmatpush1.msra.mxu0 %v2116
        %2143 = vmatprep.subr.mxu0 0.0
        %2144 = vmatpush1.msra.mxu0 %v2117
        %2145 = vmatprep.subr.mxu0 0.0
        %2146 = vmatpush1.msra.mxu0 %v2118
        %2147 = vmatprep.subr.mxu0 0.0
        %2148 = vmatpush1.msra.mxu0 %v2119
        %2149 = vmatprep.subr.mxu0 0.0
        %2150 = vmatpush1.msra.mxu0 %v2120
        %2151 = vmatprep.subr.mxu0 0.0
        %2152 = vmatpush1.msra.mxu0 %v2121
        %2153 = vmatprep.subr.mxu0 0.0
        %2154 = vmatpush1.msra.mxu0 %v2122
        %2155 = vmatprep.subr.mxu0 0.0
        %2156 = vmatpush1.msra.mxu0 0.0
        %2157 = vmatprep.subr.mxu0 0.0
        %2158 = vmatpush1.msra.mxu0 0.0
        %2159 = vmatprep.subr.mxu0 0.0
        %2160 = vmatpush1.msra.mxu0 0.0
        %2161 = vmatprep.subr.mxu0 0.0
        %2162 = vmatpush1.msra.mxu0 0.0
        %2163 = vmatprep.subr.mxu0 0.0
        %2164 = vmatpush1.msra.mxu0 0.0
        %2165 = vmatprep.subr.mxu0 0.0
        %2166 = vmatpush1.msra.mxu0 0.0
        %2167 = vmatprep.subr.mxu0 0.0
        %2168 = vmatpush1.msra.mxu0 0.0
        %2169 = vmatprep.subr.mxu0 0.0
        %2170 = vmatpush1.msra.mxu0 0.0
        %2171 = vmatprep.subr.mxu0 0.0
        %2172 = vmatpush1.msra.mxu0 0.0
        %2173 = vmatprep.subr.mxu0 0.0
        %2174 = vmatpush1.msra.mxu0 0.0
        %2175 = vmatprep.subr.mxu0 0.0
        %2176 = vmatpush1.msra.mxu0 0.0
        %2177 = vmatprep.subr.mxu0 0.0
        %2178 = vmatpush1.msra.mxu0 0.0
        %2179 = vmatprep.subr.mxu0 0.0
        %2180 = vmatpush1.msra.mxu0 0.0
        %2181 = vmatprep.subr.mxu0 0.0
        %2182 = vmatpush1.msra.mxu0 0.0
        %2183 = vmatprep.subr.mxu0 0.0
        %2184 = vmatpush1.msra.mxu0 0.0
        %2185 = vmatprep.subr.mxu0 0.0
        %2186 = vmatpush1.msra.mxu0 0.0
        %2187 = vmatprep.mubr.f32.mxu0 0.0
        %2188 = vmatmul.mubr.f32.gmra.mrb[0].mxu0 %v2070
        %v2189 = vpop.f32.mrb[0].mxu0
        %v2190 = vadd.f32 0.0, %v2189
        %v2191 = vpop.f32.mrb[0].mxu0
        %2192 = vmatprep.mubr.f32.mxu0 0.0
        %2193 = vmatmul.mubr.f32.gmra.mrb[0].mxu0 %v2071
        %v2194 = vpop.f32.mrb[0].mxu0
        %v2195 = vadd.f32 0.0, %v2194
        %v2196 = vpop.f32.mrb[0].mxu0
        %2197 = vmatprep.mubr.f32.mxu0 0.0
        %2198 = vmatmul.mubr.f32.gmra.mrb[0].mxu0 %v2072
        %v2199 = vpop.f32.mrb[0].mxu0
        %v2200 = vadd.f32 0.0, %v2199
        %v2201 = vpop.f32.mrb[0].mxu0
        %2202 = vmatprep.mubr.f32.mxu0 0.0
        %2203 = vmatmul.mubr.f32.gmra.mrb[0].mxu0 %v2073
        %v2204 = vpop.f32.mrb[0].mxu0
        %v2205 = vadd.f32 0.0, %v2204
        %v2206 = vpop.f32.mrb[0].mxu0
        %2207 = vmatprep.mubr.f32.mxu0 0.0
        %2208 = vmatmul.mubr.f32.gmra.mrb[0].mxu0 %v2074
        %v2209 = vpop.f32.mrb[0].mxu0
        %v2210 = vadd.f32 0.0, %v2209
        %v2211 = vpop.f32.mrb[0].mxu0
        %2212 = vmatprep.mubr.f32.mxu0 0.0
        %2213 = vmatmul.mubr.f32.gmra.mrb[0].mxu0 %v2075
        %v2214 = vpop.f32.mrb[0].mxu0
        %v2215 = vadd.f32 0.0, %v2214
        %v2216 = vpop.f32.mrb[0].mxu0
        %2217 = vmatprep.mubr.f32.mxu0 0.0
        %2218 = vmatmul.mubr.f32.gmra.mrb[0].mxu0 %v2076
        %v2219 = vpop.f32.mrb[0].mxu0
        %v2220 = vadd.f32 0.0, %v2219
        %v2221 = vpop.f32.mrb[0].mxu0
        %2222 = vmatprep.mubr.f32.mxu0 0.0
        %2223 = vmatmul.mubr.f32.gmra.mrb[0].mxu0 %v2077
        %v2224 = vpop.f32.mrb[0].mxu0
        %v2225 = vadd.f32 0.0, %v2224
        %v2226 = vpop.f32.mrb[0].mxu0
        %2227 = vmatprep.mubr.f32.mxu0 0.0
        %2228 = vmatmul.mubr.f32.gmra.mrb[0].mxu0 %v2078
        %v2229 = vpop.f32.mrb[0].mxu0
        %v2230 = vadd.f32 0.0, %v2229
        %v2231 = vpop.f32.mrb[0].mxu0
        %2232 = vmatprep.mubr.f32.mxu0 0.0
        %2233 = vmatmul.mubr.f32.gmra.mrb[0].mxu0 %v2079
        %v2234 = vpop.f32.mrb[0].mxu0
        %v2235 = vadd.f32 0.0, %v2234
        %v2236 = vpop.f32.mrb[0].mxu0
        %2237 = vmatprep.mubr.f32.mxu0 0.0
        %2238 = vmatmul.mubr.f32.gmra.mrb[0].mxu0 %v2080
        %v2239 = vpop.f32.mrb[0].mxu0
        %v2240 = vadd.f32 0.0, %v2239
        %v2241 = vpop.f32.mrb[0].mxu0
        %2242 = vmatprep.mubr.f32.mxu0 0.0
        %2243 = vmatmul.mubr.f32.gmra.mrb[0].mxu0 %v2081
        %v2244 = vpop.f32.mrb[0].mxu0
        %v2245 = vadd.f32 0.0, %v2244
        %v2246 = vpop.f32.mrb[0].mxu0
        %2247 = vmatprep.mubr.f32.mxu0 0.0
        %2248 = vmatmul.mubr.f32.gmra.mrb[0].mxu0 %v2082
        %v2249 = vpop.f32.mrb[0].mxu0
        %v2250 = vadd.f32 0.0, %v2249
        %v2251 = vpop.f32.mrb[0].mxu0
        %2252 = vmatprep.mubr.f32.mxu0 0.0
        %2253 = vmatmul.mubr.f32.gmra.mrb[0].mxu0 %v2083
        %v2254 = vpop.f32.mrb[0].mxu0
        %v2255 = vadd.f32 0.0, %v2254
        %v2256 = vpop.f32.mrb[0].mxu0
        %2257 = vmatprep.mubr.f32.mxu0 0.0
        %2258 = vmatmul.mubr.f32.gmra.mrb[0].mxu0 %v2084
        %v2259 = vpop.f32.mrb[0].mxu0
        %v2260 = vadd.f32 0.0, %v2259
        %v2261 = vpop.f32.mrb[0].mxu0
        %2262 = vmatprep.mubr.f32.mxu0 0.0
        %2263 = vmatmul.mubr.f32.gmra.mrb[0].mxu0 %v2085
        %v2264 = vpop.f32.mrb[0].mxu0
        %v2265 = vadd.f32 0.0, %v2264
        %v2266 = vpop.f32.mrb[0].mxu0
        %2267 = vmatprep.mubr.f32.mxu0 0.0
        %2268 = vmatmul.mubr.f32.gmra.mrb[0].mxu0 %v2086
        %v2269 = vpop.f32.mrb[0].mxu0
        %v2270 = vadd.f32 0.0, %v2269
        %v2271 = vpop.f32.mrb[0].mxu0
        %2272 = vmatprep.mubr.f32.mxu0 0.0
        %2273 = vmatmul.mubr.f32.gmra.mrb[0].mxu0 %v2087
        %v2274 = vpop.f32.mrb[0].mxu0
        %v2275 = vadd.f32 0.0, %v2274
        %v2276 = vpop.f32.mrb[0].mxu0
        %2277 = vmatprep.mubr.f32.mxu0 0.0
        %2278 = vmatmul.mubr.f32.gmra.mrb[0].mxu0 %v2088
        %v2279 = vpop.f32.mrb[0].mxu0
        %v2280 = vadd.f32 0.0, %v2279
        %v2281 = vpop.f32.mrb[0].mxu0
        %2282 = vmatprep.mubr.f32.mxu0 0.0
        %2283 = vmatmul.mubr.f32.gmra.mrb[0].mxu0 %v2089
        %v2284 = vpop.f32.mrb[0].mxu0
        %v2285 = vadd.f32 0.0, %v2284
        %v2286 = vpop.f32.mrb[0].mxu0
        %2287 = vmatprep.mubr.f32.mxu0 0.0
        %2288 = vmatmul.mubr.f32.gmra.mrb[0].mxu0 %v2090
        %v2289 = vpop.f32.mrb[0].mxu0
        %v2290 = vadd.f32 0.0, %v2289
        %v2291 = vpop.f32.mrb[0].mxu0
        %2292 = vmatprep.mubr.f32.mxu0 0.0
        %2293 = vmatmul.mubr.f32.gmra.mrb[0].mxu0 %v2091
        %v2294 = vpop.f32.mrb[0].mxu0
        %v2295 = vadd.f32 0.0, %v2294
        %v2296 = vpop.f32.mrb[0].mxu0
        %2297 = vmatprep.mubr.f32.mxu0 0.0
        %2298 = vmatmul.mubr.f32.gmra.mrb[0].mxu0 %v2092
        %v2299 = vpop.f32.mrb[0].mxu0
        %v2300 = vadd.f32 0.0, %v2299
        %v2301 = vpop.f32.mrb[0].mxu0
        %2302 = vmatprep.mubr.f32.mxu0 0.0
        %2303 = vmatmul.mubr.f32.gmra.mrb[0].mxu0 %v2093
        %v2304 = vpop.f32.mrb[0].mxu0
        %v2305 = vadd.f32 0.0, %v2304
        %v2306 = vpop.f32.mrb[0].mxu0
        %2307 = vmatprep.mubr.f32.mxu0 0.0
        %2308 = vmatmul.mubr.f32.gmra.mrb[0].mxu0 %v2094
        %v2309 = vpop.f32.mrb[0].mxu0
        %v2310 = vadd.f32 0.0, %v2309
        %v2311 = vpop.f32.mrb[0].mxu0
        %2312 = vmatprep.mubr.f32.mxu0 0.0
        %2313 = vmatmul.mubr.f32.gmra.mrb[0].mxu0 %v2095
        %v2314 = vpop.f32.mrb[0].mxu0
        %v2315 = vadd.f32 0.0, %v2314
        %v2316 = vpop.f32.mrb[0].mxu0
        %2317 = vmatprep.mubr.f32.mxu0 0.0
        %2318 = vmatmul.mubr.f32.gmra.mrb[0].mxu0 %v2096
        %v2319 = vpop.f32.mrb[0].mxu0
        %v2320 = vadd.f32 0.0, %v2319
        %v2321 = vpop.f32.mrb[0].mxu0
        %2322 = vmatprep.mubr.f32.mxu0 0.0
        %2323 = vmatmul.mubr.f32.gmra.mrb[0].mxu0 %v2097
        %v2324 = vpop.f32.mrb[0].mxu0
        %v2325 = vadd.f32 0.0, %v2324
        %v2326 = vpop.f32.mrb[0].mxu0
        %2327 = vmatprep.mubr.f32.mxu0 0.0
        %2328 = vmatmul.mubr.f32.gmra.mrb[0].mxu0 %v2098
        %v2329 = vpop.f32.mrb[0].mxu0
        %v2330 = vadd.f32 0.0, %v2329
        %v2331 = vpop.f32.mrb[0].mxu0
        %2332 = vmatprep.mubr.f32.mxu0 0.0
        %2333 = vmatmul.mubr.f32.gmra.mrb[0].mxu0 %v2099
        %v2334 = vpop.f32.mrb[0].mxu0
        %v2335 = vadd.f32 0.0, %v2334
        %v2336 = vpop.f32.mrb[0].mxu0
        %2337 = vmatprep.mubr.f32.mxu0 0.0
        %2338 = vmatmul.mubr.f32.gmra.mrb[0].mxu0 %v2100
        %v2339 = vpop.f32.mrb[0].mxu0
        %v2340 = vadd.f32 0.0, %v2339
        %v2341 = vpop.f32.mrb[0].mxu0
        %2342 = vmatprep.mubr.f32.mxu0 0.0
        %2343 = vmatmul.mubr.f32.gmra.mrb[0].mxu0 %v2101
        %v2344 = vpop.f32.mrb[0].mxu0
        %v2345 = vadd.f32 0.0, %v2344
        %v2346 = vpop.f32.mrb[0].mxu0
        %2347 = vmatprep.mubr.f32.mxu0 0.0
        %2348 = vmatmul.mubr.f32.gmra.mrb[0].mxu0 %v2102
        %v2349 = vpop.f32.mrb[0].mxu0
        %v2350 = vadd.f32 0.0, %v2349
        %v2351 = vpop.f32.mrb[0].mxu0
        %2352 = vmatprep.mubr.f32.mxu0 0.0
        %2353 = vmatmul.mubr.f32.gmra.mrb[0].mxu0 %v2103
        %v2354 = vpop.f32.mrb[0].mxu0
        %v2355 = vadd.f32 0.0, %v2354
        %v2356 = vpop.f32.mrb[0].mxu0
        %2357 = vmatprep.mubr.f32.mxu0 0.0
        %2358 = vmatmul.mubr.f32.gmra.mrb[0].mxu0 %v2104
        %v2359 = vpop.f32.mrb[0].mxu0
        %v2360 = vadd.f32 0.0, %v2359
        %v2361 = vpop.f32.mrb[0].mxu0
        %2362 = vmatprep.mubr.f32.mxu0 0.0
        %2363 = vmatmul.mubr.f32.gmra.mrb[0].mxu0 %v2105
        %v2364 = vpop.f32.mrb[0].mxu0
        %v2365 = vadd.f32 0.0, %v2364
        %v2366 = vpop.f32.mrb[0].mxu0
        %2367 = vdwg.mxu0
        %v2368 = vld [vmem:[#allocation3] sm:$0xff]
        %v2369 = vld [vmem:[#allocation3 + $0x8] sm:$0xff]
        %v2370 = vld [vmem:[#allocation3 + $0x10] sm:$0xff]
        %v2371 = vld [vmem:[#allocation3 + $0x18] sm:$0xff]
        %v2372 = vld [vmem:[#allocation3 + $0x20] sm:$0xff]
        %v2373 = vld [vmem:[#allocation3 + $0x28] sm:$0xff]
        %v2374 = vld [vmem:[#allocation3 + $0x30] sm:$0xff]
        %v2375 = vld [vmem:[#allocation3 + $0x38] sm:$0xff]
        %v2376 = vld [vmem:[#allocation3 + $0x40] sm:$0xff]
        %v2377 = vld [vmem:[#allocation3 + $0x48] sm:$0xff]
        %v2378 = vld [vmem:[#allocation3 + $0x50] sm:$0xff]
        %v2379 = vld [vmem:[#allocation3 + $0x58] sm:$0xff]
        %v2380 = vld [vmem:[#allocation3 + $0x60] sm:$0xff]
        %v2381 = vld [vmem:[#allocation3 + $0x68] sm:$0xff]
        %v2382 = vld [vmem:[#allocation3 + $0x70] sm:$0xff]
        %v2383 = vld [vmem:[#allocation3 + $0x78] sm:$0xff]
        %v2384 = vld [vmem:[#allocation3 + $0x80] sm:$0xff]
        %v2385 = vld [vmem:[#allocation3 + $0x88] sm:$0xff]
        %v2386 = vld [vmem:[#allocation3 + $0x90] sm:$0xff]
        %v2387 = vld [vmem:[#allocation3 + $0x98] sm:$0xff]
        %v2388 = vld [vmem:[#allocation3 + $0xa0] sm:$0xff]
        %v2389 = vld [vmem:[#allocation3 + $0xa8] sm:$0xff]
        %v2390 = vld [vmem:[#allocation3 + $0xb0] sm:$0xff]
        %v2391 = vld [vmem:[#allocation3 + $0xb8] sm:$0xff]
        %v2392 = vld [vmem:[#allocation3 + $0xc0] sm:$0xff]
        %v2393 = vld [vmem:[#allocation3 + $0xc8] sm:$0xff]
        %v2394 = vld [vmem:[#allocation3 + $0xd0] sm:$0xff]
        %v2395 = vld [vmem:[#allocation3 + $0xd8] sm:$0xff]
        %v2396 = vld [vmem:[#allocation3 + $0xe0] sm:$0xff]
        %v2397 = vld [vmem:[#allocation3 + $0xe8] sm:$0xff]
        %v2398 = vld [vmem:[#allocation3 + $0xf0] sm:$0xff]
        %v2399 = vld [vmem:[#allocation3 + $0xf8] sm:$0xff]
        %v2400 = vld [vmem:[#allocation3 + $0x100] sm:$0xff]
        %v2401 = vld [vmem:[#allocation3 + $0x108] sm:$0xff]
        %v2402 = vld [vmem:[#allocation3 + $0x110] sm:$0xff]
        %v2403 = vld [vmem:[#allocation3 + $0x118] sm:$0xff]
        %v2404 = vadd.f32 %v2368, %v2190
        %v2405 = vadd.f32 %v2369, %v2195
        %v2406 = vadd.f32 %v2370, %v2200
        %v2407 = vadd.f32 %v2371, %v2205
        %v2408 = vadd.f32 %v2372, %v2210
        %v2409 = vadd.f32 %v2373, %v2215
        %v2410 = vadd.f32 %v2374, %v2220
        %v2411 = vadd.f32 %v2375, %v2225
        %v2412 = vadd.f32 %v2376, %v2230
        %v2413 = vadd.f32 %v2377, %v2235
        %v2414 = vadd.f32 %v2378, %v2240
        %v2415 = vadd.f32 %v2379, %v2245
        %v2416 = vadd.f32 %v2380, %v2250
        %v2417 = vadd.f32 %v2381, %v2255
        %v2418 = vadd.f32 %v2382, %v2260
        %v2419 = vadd.f32 %v2383, %v2265
        %v2420 = vadd.f32 %v2384, %v2270
        %v2421 = vadd.f32 %v2385, %v2275
        %v2422 = vadd.f32 %v2386, %v2280
        %v2423 = vadd.f32 %v2387, %v2285
        %v2424 = vadd.f32 %v2388, %v2290
        %v2425 = vadd.f32 %v2389, %v2295
        %v2426 = vadd.f32 %v2390, %v2300
        %v2427 = vadd.f32 %v2391, %v2305
        %v2428 = vadd.f32 %v2392, %v2310
        %v2429 = vadd.f32 %v2393, %v2315
        %v2430 = vadd.f32 %v2394, %v2320
        %v2431 = vadd.f32 %v2395, %v2325
        %v2432 = vadd.f32 %v2396, %v2330
        %v2433 = vadd.f32 %v2397, %v2335
        %v2434 = vadd.f32 %v2398, %v2340
        %v2435 = vadd.f32 %v2399, %v2345
        %v2436 = vadd.f32 %v2400, %v2350
        %v2437 = vadd.f32 %v2401, %v2355
        %v2438 = vadd.f32 %v2402, %v2360
        %v2439 = vadd.f32 %v2403, %v2365
        %2440 = vst [vmem:[#allocation3] sm:$0xff] %v2404
        %2441 = vst [vmem:[#allocation3 + $0x8] sm:$0xff] %v2405
        %2442 = vst [vmem:[#allocation3 + $0x10] sm:$0xff] %v2406
        %2443 = vst [vmem:[#allocation3 + $0x18] sm:$0xff] %v2407
        %2444 = vst [vmem:[#allocation3 + $0x20] sm:$0xff] %v2408
        %2445 = vst [vmem:[#allocation3 + $0x28] sm:$0xff] %v2409
        %2446 = vst [vmem:[#allocation3 + $0x30] sm:$0xff] %v2410
        %2447 = vst [vmem:[#allocation3 + $0x38] sm:$0xff] %v2411
        %2448 = vst [vmem:[#allocation3 + $0x40] sm:$0xff] %v2412
        %2449 = vst [vmem:[#allocation3 + $0x48] sm:$0xff] %v2413
        %2450 = vst [vmem:[#allocation3 + $0x50] sm:$0xff] %v2414
        %2451 = vst [vmem:[#allocation3 + $0x58] sm:$0xff] %v2415
        %2452 = vst [vmem:[#allocation3 + $0x60] sm:$0xff] %v2416
        %2453 = vst [vmem:[#allocation3 + $0x68] sm:$0xff] %v2417
        %2454 = vst [vmem:[#allocation3 + $0x70] sm:$0xff] %v2418
        %2455 = vst [vmem:[#allocation3 + $0x78] sm:$0xff] %v2419
        %2456 = vst [vmem:[#allocation3 + $0x80] sm:$0xff] %v2420
        %2457 = vst [vmem:[#allocation3 + $0x88] sm:$0xff] %v2421
        %2458 = vst [vmem:[#allocation3 + $0x90] sm:$0xff] %v2422
        %2459 = vst [vmem:[#allocation3 + $0x98] sm:$0xff] %v2423
        %2460 = vst [vmem:[#allocation3 + $0xa0] sm:$0xff] %v2424
        %2461 = vst [vmem:[#allocation3 + $0xa8] sm:$0xff] %v2425
        %2462 = vst [vmem:[#allocation3 + $0xb0] sm:$0xff] %v2426
        %2463 = vst [vmem:[#allocation3 + $0xb8] sm:$0xff] %v2427
        %2464 = vst [vmem:[#allocation3 + $0xc0] sm:$0xff] %v2428
        %2465 = vst [vmem:[#allocation3 + $0xc8] sm:$0xff] %v2429
        %2466 = vst [vmem:[#allocation3 + $0xd0] sm:$0xff] %v2430
        %2467 = vst [vmem:[#allocation3 + $0xd8] sm:$0xff] %v2431
        %2468 = vst [vmem:[#allocation3 + $0xe0] sm:$0xff] %v2432
        %2469 = vst [vmem:[#allocation3 + $0xe8] sm:$0xff] %v2433
        %2470 = vst [vmem:[#allocation3 + $0xf0] sm:$0xff] %v2434
        %2471 = vst [vmem:[#allocation3 + $0xf8] sm:$0xff] %v2435
        %2472 = vst [vmem:[#allocation3 + $0x100] sm:$0xff] %v2436
        %2473 = vst [vmem:[#allocation3 + $0x108] sm:$0xff] %v2437
        %2474 = vst [vmem:[#allocation3 + $0x110] sm:$0xff] %v2438
        %2475 = vst [vmem:[#allocation3 + $0x118] sm:$0xff] %v2439
        %v2476 = vld [vmem:[#allocation2 + $0x13] sm:$0xff]
        %v2477 = vld [vmem:[#allocation2 + $0x1b] sm:$0xff]
        %v2478 = vld [vmem:[#allocation2 + $0x23] sm:$0xff]
        %v2479 = vld [vmem:[#allocation2 + $0x2b] sm:$0xff]
        %v2480 = vld [vmem:[#allocation2 + $0x33] sm:$0xff]
        %v2481 = vld [vmem:[#allocation2 + $0x3b] sm:$0xff]
        %v2482 = vld [vmem:[#allocation2 + $0x43] sm:$0xff]
        %v2483 = vld [vmem:[#allocation2 + $0x4b] sm:$0xff]
        %v2484 = vld [vmem:[#allocation2 + $0x53] sm:$0xff]
        %v2485 = vld [vmem:[#allocation2 + $0x5b] sm:$0xff]
        %v2486 = vld [vmem:[#allocation2 + $0x63] sm:$0xff]
        %v2487 = vld [vmem:[#allocation2 + $0x6b] sm:$0xff]
        %v2488 = vld [vmem:[#allocation2 + $0x73] sm:$0xff]
        %v2489 = vld [vmem:[#allocation2 + $0x7b] sm:$0xff]
        %v2490 = vld [vmem:[#allocation2 + $0x83] sm:$0xff]
        %v2491 = vld [vmem:[#allocation2 + $0x8b] sm:$0xff]
        %v2492 = vld [vmem:[#allocation2 + $0x93] sm:$0xff]
        %v2493 = vld [vmem:[#allocation2 + $0x9b] sm:$0xff]
        %v2494 = vld [vmem:[#allocation2 + $0xa3] sm:$0xff]
        %v2495 = vld [vmem:[#allocation2 + $0xab] sm:$0xff]
        %v2496 = vld [vmem:[#allocation2 + $0xb3] sm:$0xff]
        %v2497 = vld [vmem:[#allocation2 + $0xbb] sm:$0xff]
        %v2498 = vld [vmem:[#allocation2 + $0xc3] sm:$0xff]
        %v2499 = vld [vmem:[#allocation2 + $0xcb] sm:$0xff]
        %v2500 = vld [vmem:[#allocation2 + $0xd3] sm:$0xff]
        %v2501 = vld [vmem:[#allocation2 + $0xdb] sm:$0xff]
        %v2502 = vld [vmem:[#allocation2 + $0xe3] sm:$0xff]
        %v2503 = vld [vmem:[#allocation2 + $0xeb] sm:$0xff]
        %v2504 = vld [vmem:[#allocation2 + $0xf3] sm:$0xff]
        %v2505 = vld [vmem:[#allocation2 + $0xfb] sm:$0xff]
        %v2506 = vld [vmem:[#allocation2 + $0x103] sm:$0xff]
        %v2507 = vld [vmem:[#allocation2 + $0x10b] sm:$0xff]
        %v2508 = vld [vmem:[#allocation2 + $0x113] sm:$0xff]
        %v2509 = vld [vmem:[#allocation2 + $0x11b] sm:$0xff]
        %v2510 = vld [vmem:[#allocation2 + $0x123] sm:$0xff]
        %v2511 = vld [vmem:[#allocation2 + $0x12b] sm:$0xff]
        %s2512 = scalar_lea.vmem [#allocation13], 512
        %v2513 = vld [vmem:[%s2512] sm:$0xff]
        %v2514 = vld [vmem:[%s2512 + $0x8] sm:$0xff]
        %v2515 = vld [vmem:[%s2512 + $0x10] sm:$0xff]
        %v2516 = vld [vmem:[%s2512 + $0x18] sm:$0xff]
        %v2517 = vld [vmem:[%s2512 + $0x20] sm:$0xff]
        %v2518 = vld [vmem:[%s2512 + $0x28] sm:$0xff]
        %v2519 = vld [vmem:[%s2512 + $0x30] sm:$0xff]
        %v2520 = vld [vmem:[%s2512 + $0x38] sm:$0xff]
        %v2521 = vld [vmem:[%s2512 + $0x40] sm:$0xff]
        %v2522 = vld [vmem:[%s2512 + $0x48] sm:$0xff]
        %v2523 = vld [vmem:[%s2512 + $0x50] sm:$0xff]
        %v2524 = vld [vmem:[%s2512 + $0x58] sm:$0xff]
        %v2525 = vld [vmem:[%s2512 + $0x60] sm:$0xff]
        %v2526 = vld [vmem:[%s2512 + $0x68] sm:$0xff]
        %v2527 = vld [vmem:[%s2512 + $0x70] sm:$0xff]
        %v2528 = vld [vmem:[%s2512 + $0x78] sm:$0xff]
        %2529 = vmatprep.subr.mxu0 0.0
        %2530 = vmatpush1.msra.mxu0 %v2513
        %2531 = vmatprep.subr.mxu0 0.0
        %2532 = vmatpush1.msra.mxu0 %v2514
        %2533 = vmatprep.subr.mxu0 0.0
        %2534 = vmatpush1.msra.mxu0 %v2515
        %2535 = vmatprep.subr.mxu0 0.0
        %2536 = vmatpush1.msra.mxu0 %v2516
        %2537 = vmatprep.subr.mxu0 0.0
        %2538 = vmatpush1.msra.mxu0 %v2517
        %2539 = vmatprep.subr.mxu0 0.0
        %2540 = vmatpush1.msra.mxu0 %v2518
        %2541 = vmatprep.subr.mxu0 0.0
        %2542 = vmatpush1.msra.mxu0 %v2519
        %2543 = vmatprep.subr.mxu0 0.0
        %2544 = vmatpush1.msra.mxu0 %v2520
        %2545 = vmatprep.subr.mxu0 0.0
        %2546 = vmatpush1.msra.mxu0 %v2521
        %2547 = vmatprep.subr.mxu0 0.0
        %2548 = vmatpush1.msra.mxu0 %v2522
        %2549 = vmatprep.subr.mxu0 0.0
        %2550 = vmatpush1.msra.mxu0 %v2523
        %2551 = vmatprep.subr.mxu0 0.0
        %2552 = vmatpush1.msra.mxu0 %v2524
        %2553 = vmatprep.subr.mxu0 0.0
        %2554 = vmatpush1.msra.mxu0 %v2525
        %2555 = vmatprep.subr.mxu0 0.0
        %2556 = vmatpush1.msra.mxu0 %v2526
        %2557 = vmatprep.subr.mxu0 0.0
        %2558 = vmatpush1.msra.mxu0 %v2527
        %2559 = vmatprep.subr.mxu0 0.0
        %2560 = vmatpush1.msra.mxu0 %v2528
        %2561 = vmatprep.subr.mxu0 0.0
        %2562 = vmatpush1.msra.mxu0 0.0
        %2563 = vmatprep.subr.mxu0 0.0
        %2564 = vmatpush1.msra.mxu0 0.0
        %2565 = vmatprep.subr.mxu0 0.0
        %2566 = vmatpush1.msra.mxu0 0.0
        %2567 = vmatprep.subr.mxu0 0.0
        %2568 = vmatpush1.msra.mxu0 0.0
        %2569 = vmatprep.subr.mxu0 0.0
        %2570 = vmatpush1.msra.mxu0 0.0
        %2571 = vmatprep.subr.mxu0 0.0
        %2572 = vmatpush1.msra.mxu0 0.0
        %2573 = vmatprep.subr.mxu0 0.0
        %2574 = vmatpush1.msra.mxu0 0.0
        %2575 = vmatprep.subr.mxu0 0.0
        %2576 = vmatpush1.msra.mxu0 0.0
        %2577 = vmatprep.subr.mxu0 0.0
        %2578 = vmatpush1.msra.mxu0 0.0
        %2579 = vmatprep.subr.mxu0 0.0
        %2580 = vmatpush1.msra.mxu0 0.0
        %2581 = vmatprep.subr.mxu0 0.0
        %2582 = vmatpush1.msra.mxu0 0.0
        %2583 = vmatprep.subr.mxu0 0.0
        %2584 = vmatpush1.msra.mxu0 0.0
        %2585 = vmatprep.subr.mxu0 0.0
        %2586 = vmatpush1.msra.mxu0 0.0
        %2587 = vmatprep.subr.mxu0 0.0
        %2588 = vmatpush1.msra.mxu0 0.0
        %2589 = vmatprep.subr.mxu0 0.0
        %2590 = vmatpush1.msra.mxu0 0.0
        %2591 = vmatprep.subr.mxu0 0.0
        %2592 = vmatpush1.msra.mxu0 0.0
        %2593 = vmatprep.mubr.f32.mxu0 0.0
        %2594 = vmatmul.mubr.f32.gmra.mrb[0].mxu0 %v2476
        %v2595 = vpop.f32.mrb[0].mxu0
        %v2596 = vadd.f32 0.0, %v2595
        %v2597 = vpop.f32.mrb[0].mxu0
        %2598 = vmatprep.mubr.f32.mxu0 0.0
        %2599 = vmatmul.mubr.f32.gmra.mrb[0].mxu0 %v2477
        %v2600 = vpop.f32.mrb[0].mxu0
        %v2601 = vadd.f32 0.0, %v2600
        %v2602 = vpop.f32.mrb[0].mxu0
        %2603 = vmatprep.mubr.f32.mxu0 0.0
        %2604 = vmatmul.mubr.f32.gmra.mrb[0].mxu0 %v2478
        %v2605 = vpop.f32.mrb[0].mxu0
        %v2606 = vadd.f32 0.0, %v2605
        %v2607 = vpop.f32.mrb[0].mxu0
        %2608 = vmatprep.mubr.f32.mxu0 0.0
        %2609 = vmatmul.mubr.f32.gmra.mrb[0].mxu0 %v2479
        %v2610 = vpop.f32.mrb[0].mxu0
        %v2611 = vadd.f32 0.0, %v2610
        %v2612 = vpop.f32.mrb[0].mxu0
        %2613 = vmatprep.mubr.f32.mxu0 0.0
        %2614 = vmatmul.mubr.f32.gmra.mrb[0].mxu0 %v2480
        %v2615 = vpop.f32.mrb[0].mxu0
        %v2616 = vadd.f32 0.0, %v2615
        %v2617 = vpop.f32.mrb[0].mxu0
        %2618 = vmatprep.mubr.f32.mxu0 0.0
        %2619 = vmatmul.mubr.f32.gmra.mrb[0].mxu0 %v2481
        %v2620 = vpop.f32.mrb[0].mxu0
        %v2621 = vadd.f32 0.0, %v2620
        %v2622 = vpop.f32.mrb[0].mxu0
        %2623 = vmatprep.mubr.f32.mxu0 0.0
        %2624 = vmatmul.mubr.f32.gmra.mrb[0].mxu0 %v2482
        %v2625 = vpop.f32.mrb[0].mxu0
        %v2626 = vadd.f32 0.0, %v2625
        %v2627 = vpop.f32.mrb[0].mxu0
        %2628 = vmatprep.mubr.f32.mxu0 0.0
        %2629 = vmatmul.mubr.f32.gmra.mrb[0].mxu0 %v2483
        %v2630 = vpop.f32.mrb[0].mxu0
        %v2631 = vadd.f32 0.0, %v2630
        %v2632 = vpop.f32.mrb[0].mxu0
        %2633 = vmatprep.mubr.f32.mxu0 0.0
        %2634 = vmatmul.mubr.f32.gmra.mrb[0].mxu0 %v2484
        %v2635 = vpop.f32.mrb[0].mxu0
        %v2636 = vadd.f32 0.0, %v2635
        %v2637 = vpop.f32.mrb[0].mxu0
        %2638 = vmatprep.mubr.f32.mxu0 0.0
        %2639 = vmatmul.mubr.f32.gmra.mrb[0].mxu0 %v2485
        %v2640 = vpop.f32.mrb[0].mxu0
        %v2641 = vadd.f32 0.0, %v2640
        %v2642 = vpop.f32.mrb[0].mxu0
        %2643 = vmatprep.mubr.f32.mxu0 0.0
        %2644 = vmatmul.mubr.f32.gmra.mrb[0].mxu0 %v2486
        %v2645 = vpop.f32.mrb[0].mxu0
        %v2646 = vadd.f32 0.0, %v2645
        %v2647 = vpop.f32.mrb[0].mxu0
        %2648 = vmatprep.mubr.f32.mxu0 0.0
        %2649 = vmatmul.mubr.f32.gmra.mrb[0].mxu0 %v2487
        %v2650 = vpop.f32.mrb[0].mxu0
        %v2651 = vadd.f32 0.0, %v2650
        %v2652 = vpop.f32.mrb[0].mxu0
        %2653 = vmatprep.mubr.f32.mxu0 0.0
        %2654 = vmatmul.mubr.f32.gmra.mrb[0].mxu0 %v2488
        %v2655 = vpop.f32.mrb[0].mxu0
        %v2656 = vadd.f32 0.0, %v2655
        %v2657 = vpop.f32.mrb[0].mxu0
        %2658 = vmatprep.mubr.f32.mxu0 0.0
        %2659 = vmatmul.mubr.f32.gmra.mrb[0].mxu0 %v2489
        %v2660 = vpop.f32.mrb[0].mxu0
        %v2661 = vadd.f32 0.0, %v2660
        %v2662 = vpop.f32.mrb[0].mxu0
        %2663 = vmatprep.mubr.f32.mxu0 0.0
        %2664 = vmatmul.mubr.f32.gmra.mrb[0].mxu0 %v2490
        %v2665 = vpop.f32.mrb[0].mxu0
        %v2666 = vadd.f32 0.0, %v2665
        %v2667 = vpop.f32.mrb[0].mxu0
        %2668 = vmatprep.mubr.f32.mxu0 0.0
        %2669 = vmatmul.mubr.f32.gmra.mrb[0].mxu0 %v2491
        %v2670 = vpop.f32.mrb[0].mxu0
        %v2671 = vadd.f32 0.0, %v2670
        %v2672 = vpop.f32.mrb[0].mxu0
        %2673 = vmatprep.mubr.f32.mxu0 0.0
        %2674 = vmatmul.mubr.f32.gmra.mrb[0].mxu0 %v2492
        %v2675 = vpop.f32.mrb[0].mxu0
        %v2676 = vadd.f32 0.0, %v2675
        %v2677 = vpop.f32.mrb[0].mxu0
        %2678 = vmatprep.mubr.f32.mxu0 0.0
        %2679 = vmatmul.mubr.f32.gmra.mrb[0].mxu0 %v2493
        %v2680 = vpop.f32.mrb[0].mxu0
        %v2681 = vadd.f32 0.0, %v2680
        %v2682 = vpop.f32.mrb[0].mxu0
        %2683 = vmatprep.mubr.f32.mxu0 0.0
        %2684 = vmatmul.mubr.f32.gmra.mrb[0].mxu0 %v2494
        %v2685 = vpop.f32.mrb[0].mxu0
        %v2686 = vadd.f32 0.0, %v2685
        %v2687 = vpop.f32.mrb[0].mxu0
        %2688 = vmatprep.mubr.f32.mxu0 0.0
        %2689 = vmatmul.mubr.f32.gmra.mrb[0].mxu0 %v2495
        %v2690 = vpop.f32.mrb[0].mxu0
        %v2691 = vadd.f32 0.0, %v2690
        %v2692 = vpop.f32.mrb[0].mxu0
        %2693 = vmatprep.mubr.f32.mxu0 0.0
        %2694 = vmatmul.mubr.f32.gmra.mrb[0].mxu0 %v2496
        %v2695 = vpop.f32.mrb[0].mxu0
        %v2696 = vadd.f32 0.0, %v2695
        %v2697 = vpop.f32.mrb[0].mxu0
        %2698 = vmatprep.mubr.f32.mxu0 0.0
        %2699 = vmatmul.mubr.f32.gmra.mrb[0].mxu0 %v2497
        %v2700 = vpop.f32.mrb[0].mxu0
        %v2701 = vadd.f32 0.0, %v2700
        %v2702 = vpop.f32.mrb[0].mxu0
        %2703 = vmatprep.mubr.f32.mxu0 0.0
        %2704 = vmatmul.mubr.f32.gmra.mrb[0].mxu0 %v2498
        %v2705 = vpop.f32.mrb[0].mxu0
        %v2706 = vadd.f32 0.0, %v2705
        %v2707 = vpop.f32.mrb[0].mxu0
        %2708 = vmatprep.mubr.f32.mxu0 0.0
        %2709 = vmatmul.mubr.f32.gmra.mrb[0].mxu0 %v2499
        %v2710 = vpop.f32.mrb[0].mxu0
        %v2711 = vadd.f32 0.0, %v2710
        %v2712 = vpop.f32.mrb[0].mxu0
        %2713 = vmatprep.mubr.f32.mxu0 0.0
        %2714 = vmatmul.mubr.f32.gmra.mrb[0].mxu0 %v2500
        %v2715 = vpop.f32.mrb[0].mxu0
        %v2716 = vadd.f32 0.0, %v2715
        %v2717 = vpop.f32.mrb[0].mxu0
        %2718 = vmatprep.mubr.f32.mxu0 0.0
        %2719 = vmatmul.mubr.f32.gmra.mrb[0].mxu0 %v2501
        %v2720 = vpop.f32.mrb[0].mxu0
        %v2721 = vadd.f32 0.0, %v2720
        %v2722 = vpop.f32.mrb[0].mxu0
        %2723 = vmatprep.mubr.f32.mxu0 0.0
        %2724 = vmatmul.mubr.f32.gmra.mrb[0].mxu0 %v2502
        %v2725 = vpop.f32.mrb[0].mxu0
        %v2726 = vadd.f32 0.0, %v2725
        %v2727 = vpop.f32.mrb[0].mxu0
        %2728 = vmatprep.mubr.f32.mxu0 0.0
        %2729 = vmatmul.mubr.f32.gmra.mrb[0].mxu0 %v2503
        %v2730 = vpop.f32.mrb[0].mxu0
        %v2731 = vadd.f32 0.0, %v2730
        %v2732 = vpop.f32.mrb[0].mxu0
        %2733 = vmatprep.mubr.f32.mxu0 0.0
        %2734 = vmatmul.mubr.f32.gmra.mrb[0].mxu0 %v2504
        %v2735 = vpop.f32.mrb[0].mxu0
        %v2736 = vadd.f32 0.0, %v2735
        %v2737 = vpop.f32.mrb[0].mxu0
        %2738 = vmatprep.mubr.f32.mxu0 0.0
        %2739 = vmatmul.mubr.f32.gmra.mrb[0].mxu0 %v2505
        %v2740 = vpop.f32.mrb[0].mxu0
        %v2741 = vadd.f32 0.0, %v2740
        %v2742 = vpop.f32.mrb[0].mxu0
        %2743 = vmatprep.mubr.f32.mxu0 0.0
        %2744 = vmatmul.mubr.f32.gmra.mrb[0].mxu0 %v2506
        %v2745 = vpop.f32.mrb[0].mxu0
        %v2746 = vadd.f32 0.0, %v2745
        %v2747 = vpop.f32.mrb[0].mxu0
        %2748 = vmatprep.mubr.f32.mxu0 0.0
        %2749 = vmatmul.mubr.f32.gmra.mrb[0].mxu0 %v2507
        %v2750 = vpop.f32.mrb[0].mxu0
        %v2751 = vadd.f32 0.0, %v2750
        %v2752 = vpop.f32.mrb[0].mxu0
        %2753 = vmatprep.mubr.f32.mxu0 0.0
        %2754 = vmatmul.mubr.f32.gmra.mrb[0].mxu0 %v2508
        %v2755 = vpop.f32.mrb[0].mxu0
        %v2756 = vadd.f32 0.0, %v2755
        %v2757 = vpop.f32.mrb[0].mxu0
        %2758 = vmatprep.mubr.f32.mxu0 0.0
        %2759 = vmatmul.mubr.f32.gmra.mrb[0].mxu0 %v2509
        %v2760 = vpop.f32.mrb[0].mxu0
        %v2761 = vadd.f32 0.0, %v2760
        %v2762 = vpop.f32.mrb[0].mxu0
        %2763 = vmatprep.mubr.f32.mxu0 0.0
        %2764 = vmatmul.mubr.f32.gmra.mrb[0].mxu0 %v2510
        %v2765 = vpop.f32.mrb[0].mxu0
        %v2766 = vadd.f32 0.0, %v2765
        %v2767 = vpop.f32.mrb[0].mxu0
        %2768 = vmatprep.mubr.f32.mxu0 0.0
        %2769 = vmatmul.mubr.f32.gmra.mrb[0].mxu0 %v2511
        %v2770 = vpop.f32.mrb[0].mxu0
        %v2771 = vadd.f32 0.0, %v2770
        %v2772 = vpop.f32.mrb[0].mxu0
        %2773 = vdwg.mxu0
        %v2774 = vld [vmem:[#allocation3] sm:$0xff]
        %v2775 = vld [vmem:[#allocation3 + $0x8] sm:$0xff]
        %v2776 = vld [vmem:[#allocation3 + $0x10] sm:$0xff]
        %v2777 = vld [vmem:[#allocation3 + $0x18] sm:$0xff]
        %v2778 = vld [vmem:[#allocation3 + $0x20] sm:$0xff]
        %v2779 = vld [vmem:[#allocation3 + $0x28] sm:$0xff]
        %v2780 = vld [vmem:[#allocation3 + $0x30] sm:$0xff]
        %v2781 = vld [vmem:[#allocation3 + $0x38] sm:$0xff]
        %v2782 = vld [vmem:[#allocation3 + $0x40] sm:$0xff]
        %v2783 = vld [vmem:[#allocation3 + $0x48] sm:$0xff]
        %v2784 = vld [vmem:[#allocation3 + $0x50] sm:$0xff]
        %v2785 = vld [vmem:[#allocation3 + $0x58] sm:$0xff]
        %v2786 = vld [vmem:[#allocation3 + $0x60] sm:$0xff]
        %v2787 = vld [vmem:[#allocation3 + $0x68] sm:$0xff]
        %v2788 = vld [vmem:[#allocation3 + $0x70] sm:$0xff]
        %v2789 = vld [vmem:[#allocation3 + $0x78] sm:$0xff]
        %v2790 = vld [vmem:[#allocation3 + $0x80] sm:$0xff]
        %v2791 = vld [vmem:[#allocation3 + $0x88] sm:$0xff]
        %v2792 = vld [vmem:[#allocation3 + $0x90] sm:$0xff]
        %v2793 = vld [vmem:[#allocation3 + $0x98] sm:$0xff]
        %v2794 = vld [vmem:[#allocation3 + $0xa0] sm:$0xff]
        %v2795 = vld [vmem:[#allocation3 + $0xa8] sm:$0xff]
        %v2796 = vld [vmem:[#allocation3 + $0xb0] sm:$0xff]
        %v2797 = vld [vmem:[#allocation3 + $0xb8] sm:$0xff]
        %v2798 = vld [vmem:[#allocation3 + $0xc0] sm:$0xff]
        %v2799 = vld [vmem:[#allocation3 + $0xc8] sm:$0xff]
        %v2800 = vld [vmem:[#allocation3 + $0xd0] sm:$0xff]
        %v2801 = vld [vmem:[#allocation3 + $0xd8] sm:$0xff]
        %v2802 = vld [vmem:[#allocation3 + $0xe0] sm:$0xff]
        %v2803 = vld [vmem:[#allocation3 + $0xe8] sm:$0xff]
        %v2804 = vld [vmem:[#allocation3 + $0xf0] sm:$0xff]
        %v2805 = vld [vmem:[#allocation3 + $0xf8] sm:$0xff]
        %v2806 = vld [vmem:[#allocation3 + $0x100] sm:$0xff]
        %v2807 = vld [vmem:[#allocation3 + $0x108] sm:$0xff]
        %v2808 = vld [vmem:[#allocation3 + $0x110] sm:$0xff]
        %v2809 = vld [vmem:[#allocation3 + $0x118] sm:$0xff]
        %v2810 = vadd.f32 %v2774, %v2596
        %v2811 = vadd.f32 %v2775, %v2601
        %v2812 = vadd.f32 %v2776, %v2606
        %v2813 = vadd.f32 %v2777, %v2611
        %v2814 = vadd.f32 %v2778, %v2616
        %v2815 = vadd.f32 %v2779, %v2621
        %v2816 = vadd.f32 %v2780, %v2626
        %v2817 = vadd.f32 %v2781, %v2631
        %v2818 = vadd.f32 %v2782, %v2636
        %v2819 = vadd.f32 %v2783, %v2641
        %v2820 = vadd.f32 %v2784, %v2646
        %v2821 = vadd.f32 %v2785, %v2651
        %v2822 = vadd.f32 %v2786, %v2656
        %v2823 = vadd.f32 %v2787, %v2661
        %v2824 = vadd.f32 %v2788, %v2666
        %v2825 = vadd.f32 %v2789, %v2671
        %v2826 = vadd.f32 %v2790, %v2676
        %v2827 = vadd.f32 %v2791, %v2681
        %v2828 = vadd.f32 %v2792, %v2686
        %v2829 = vadd.f32 %v2793, %v2691
        %v2830 = vadd.f32 %v2794, %v2696
        %v2831 = vadd.f32 %v2795, %v2701
        %v2832 = vadd.f32 %v2796, %v2706
        %v2833 = vadd.f32 %v2797, %v2711
        %v2834 = vadd.f32 %v2798, %v2716
        %v2835 = vadd.f32 %v2799, %v2721
        %v2836 = vadd.f32 %v2800, %v2726
        %v2837 = vadd.f32 %v2801, %v2731
        %v2838 = vadd.f32 %v2802, %v2736
        %v2839 = vadd.f32 %v2803, %v2741
        %v2840 = vadd.f32 %v2804, %v2746
        %v2841 = vadd.f32 %v2805, %v2751
        %v2842 = vadd.f32 %v2806, %v2756
        %v2843 = vadd.f32 %v2807, %v2761
        %v2844 = vadd.f32 %v2808, %v2766
        %v2845 = vadd.f32 %v2809, %v2771
        %2846 = vst [vmem:[#allocation3] sm:$0xff] %v2810
        %2847 = vst [vmem:[#allocation3 + $0x8] sm:$0xff] %v2811
        %2848 = vst [vmem:[#allocation3 + $0x10] sm:$0xff] %v2812
        %2849 = vst [vmem:[#allocation3 + $0x18] sm:$0xff] %v2813
        %2850 = vst [vmem:[#allocation3 + $0x20] sm:$0xff] %v2814
        %2851 = vst [vmem:[#allocation3 + $0x28] sm:$0xff] %v2815
        %2852 = vst [vmem:[#allocation3 + $0x30] sm:$0xff] %v2816
        %2853 = vst [vmem:[#allocation3 + $0x38] sm:$0xff] %v2817
        %2854 = vst [vmem:[#allocation3 + $0x40] sm:$0xff] %v2818
        %2855 = vst [vmem:[#allocation3 + $0x48] sm:$0xff] %v2819
        %2856 = vst [vmem:[#allocation3 + $0x50] sm:$0xff] %v2820
        %2857 = vst [vmem:[#allocation3 + $0x58] sm:$0xff] %v2821
        %2858 = vst [vmem:[#allocation3 + $0x60] sm:$0xff] %v2822
        %2859 = vst [vmem:[#allocation3 + $0x68] sm:$0xff] %v2823
        %2860 = vst [vmem:[#allocation3 + $0x70] sm:$0xff] %v2824
        %2861 = vst [vmem:[#allocation3 + $0x78] sm:$0xff] %v2825
        %2862 = vst [vmem:[#allocation3 + $0x80] sm:$0xff] %v2826
        %2863 = vst [vmem:[#allocation3 + $0x88] sm:$0xff] %v2827
        %2864 = vst [vmem:[#allocation3 + $0x90] sm:$0xff] %v2828
        %2865 = vst [vmem:[#allocation3 + $0x98] sm:$0xff] %v2829
        %2866 = vst [vmem:[#allocation3 + $0xa0] sm:$0xff] %v2830
        %2867 = vst [vmem:[#allocation3 + $0xa8] sm:$0xff] %v2831
        %2868 = vst [vmem:[#allocation3 + $0xb0] sm:$0xff] %v2832
        %2869 = vst [vmem:[#allocation3 + $0xb8] sm:$0xff] %v2833
        %2870 = vst [vmem:[#allocation3 + $0xc0] sm:$0xff] %v2834
        %2871 = vst [vmem:[#allocation3 + $0xc8] sm:$0xff] %v2835
        %2872 = vst [vmem:[#allocation3 + $0xd0] sm:$0xff] %v2836
        %2873 = vst [vmem:[#allocation3 + $0xd8] sm:$0xff] %v2837
        %2874 = vst [vmem:[#allocation3 + $0xe0] sm:$0xff] %v2838
        %2875 = vst [vmem:[#allocation3 + $0xe8] sm:$0xff] %v2839
        %2876 = vst [vmem:[#allocation3 + $0xf0] sm:$0xff] %v2840
        %2877 = vst [vmem:[#allocation3 + $0xf8] sm:$0xff] %v2841
        %2878 = vst [vmem:[#allocation3 + $0x100] sm:$0xff] %v2842
        %2879 = vst [vmem:[#allocation3 + $0x108] sm:$0xff] %v2843
        %2880 = vst [vmem:[#allocation3 + $0x110] sm:$0xff] %v2844
        %2881 = vst [vmem:[#allocation3 + $0x118] sm:$0xff] %v2845
        %v2882 = vld [vmem:[#allocation2 + $0x14] sm:$0xff]
        %v2883 = vld [vmem:[#allocation2 + $0x1c] sm:$0xff]
        %v2884 = vld [vmem:[#allocation2 + $0x24] sm:$0xff]
        %v2885 = vld [vmem:[#allocation2 + $0x2c] sm:$0xff]
        %v2886 = vld [vmem:[#allocation2 + $0x34] sm:$0xff]
        %v2887 = vld [vmem:[#allocation2 + $0x3c] sm:$0xff]
        %v2888 = vld [vmem:[#allocation2 + $0x44] sm:$0xff]
        %v2889 = vld [vmem:[#allocation2 + $0x4c] sm:$0xff]
        %v2890 = vld [vmem:[#allocation2 + $0x54] sm:$0xff]
        %v2891 = vld [vmem:[#allocation2 + $0x5c] sm:$0xff]
        %v2892 = vld [vmem:[#allocation2 + $0x64] sm:$0xff]
        %v2893 = vld [vmem:[#allocation2 + $0x6c] sm:$0xff]
        %v2894 = vld [vmem:[#allocation2 + $0x74] sm:$0xff]
        %v2895 = vld [vmem:[#allocation2 + $0x7c] sm:$0xff]
        %v2896 = vld [vmem:[#allocation2 + $0x84] sm:$0xff]
        %v2897 = vld [vmem:[#allocation2 + $0x8c] sm:$0xff]
        %v2898 = vld [vmem:[#allocation2 + $0x94] sm:$0xff]
        %v2899 = vld [vmem:[#allocation2 + $0x9c] sm:$0xff]
        %v2900 = vld [vmem:[#allocation2 + $0xa4] sm:$0xff]
        %v2901 = vld [vmem:[#allocation2 + $0xac] sm:$0xff]
        %v2902 = vld [vmem:[#allocation2 + $0xb4] sm:$0xff]
        %v2903 = vld [vmem:[#allocation2 + $0xbc] sm:$0xff]
        %v2904 = vld [vmem:[#allocation2 + $0xc4] sm:$0xff]
        %v2905 = vld [vmem:[#allocation2 + $0xcc] sm:$0xff]
        %v2906 = vld [vmem:[#allocation2 + $0xd4] sm:$0xff]
        %v2907 = vld [vmem:[#allocation2 + $0xdc] sm:$0xff]
        %v2908 = vld [vmem:[#allocation2 + $0xe4] sm:$0xff]
        %v2909 = vld [vmem:[#allocation2 + $0xec] sm:$0xff]
        %v2910 = vld [vmem:[#allocation2 + $0xf4] sm:$0xff]
        %v2911 = vld [vmem:[#allocation2 + $0xfc] sm:$0xff]
        %v2912 = vld [vmem:[#allocation2 + $0x104] sm:$0xff]
        %v2913 = vld [vmem:[#allocation2 + $0x10c] sm:$0xff]
        %v2914 = vld [vmem:[#allocation2 + $0x114] sm:$0xff]
        %v2915 = vld [vmem:[#allocation2 + $0x11c] sm:$0xff]
        %v2916 = vld [vmem:[#allocation2 + $0x124] sm:$0xff]
        %v2917 = vld [vmem:[#allocation2 + $0x12c] sm:$0xff]
        %s2918 = scalar_lea.vmem [#allocation13], 640
        %v2919 = vld [vmem:[%s2918] sm:$0xff]
        %v2920 = vld [vmem:[%s2918 + $0x8] sm:$0xff]
        %v2921 = vld [vmem:[%s2918 + $0x10] sm:$0xff]
        %v2922 = vld [vmem:[%s2918 + $0x18] sm:$0xff]
        %v2923 = vld [vmem:[%s2918 + $0x20] sm:$0xff]
        %v2924 = vld [vmem:[%s2918 + $0x28] sm:$0xff]
        %v2925 = vld [vmem:[%s2918 + $0x30] sm:$0xff]
        %v2926 = vld [vmem:[%s2918 + $0x38] sm:$0xff]
        %v2927 = vld [vmem:[%s2918 + $0x40] sm:$0xff]
        %v2928 = vld [vmem:[%s2918 + $0x48] sm:$0xff]
        %v2929 = vld [vmem:[%s2918 + $0x50] sm:$0xff]
        %v2930 = vld [vmem:[%s2918 + $0x58] sm:$0xff]
        %v2931 = vld [vmem:[%s2918 + $0x60] sm:$0xff]
        %v2932 = vld [vmem:[%s2918 + $0x68] sm:$0xff]
        %v2933 = vld [vmem:[%s2918 + $0x70] sm:$0xff]
        %v2934 = vld [vmem:[%s2918 + $0x78] sm:$0xff]
        %2935 = vmatprep.subr.mxu0 0.0
        %2936 = vmatpush1.msra.mxu0 %v2919
        %2937 = vmatprep.subr.mxu0 0.0
        %2938 = vmatpush1.msra.mxu0 %v2920
        %2939 = vmatprep.subr.mxu0 0.0
        %2940 = vmatpush1.msra.mxu0 %v2921
        %2941 = vmatprep.subr.mxu0 0.0
        %2942 = vmatpush1.msra.mxu0 %v2922
        %2943 = vmatprep.subr.mxu0 0.0
        %2944 = vmatpush1.msra.mxu0 %v2923
        %2945 = vmatprep.subr.mxu0 0.0
        %2946 = vmatpush1.msra.mxu0 %v2924
        %2947 = vmatprep.subr.mxu0 0.0
        %2948 = vmatpush1.msra.mxu0 %v2925
        %2949 = vmatprep.subr.mxu0 0.0
        %2950 = vmatpush1.msra.mxu0 %v2926
        %2951 = vmatprep.subr.mxu0 0.0
        %2952 = vmatpush1.msra.mxu0 %v2927
        %2953 = vmatprep.subr.mxu0 0.0
        %2954 = vmatpush1.msra.mxu0 %v2928
        %2955 = vmatprep.subr.mxu0 0.0
        %2956 = vmatpush1.msra.mxu0 %v2929
        %2957 = vmatprep.subr.mxu0 0.0
        %2958 = vmatpush1.msra.mxu0 %v2930
        %2959 = vmatprep.subr.mxu0 0.0
        %2960 = vmatpush1.msra.mxu0 %v2931
        %2961 = vmatprep.subr.mxu0 0.0
        %2962 = vmatpush1.msra.mxu0 %v2932
        %2963 = vmatprep.subr.mxu0 0.0
        %2964 = vmatpush1.msra.mxu0 %v2933
        %2965 = vmatprep.subr.mxu0 0.0
        %2966 = vmatpush1.msra.mxu0 %v2934
        %2967 = vmatprep.subr.mxu0 0.0
        %2968 = vmatpush1.msra.mxu0 0.0
        %2969 = vmatprep.subr.mxu0 0.0
        %2970 = vmatpush1.msra.mxu0 0.0
        %2971 = vmatprep.subr.mxu0 0.0
        %2972 = vmatpush1.msra.mxu0 0.0
        %2973 = vmatprep.subr.mxu0 0.0
        %2974 = vmatpush1.msra.mxu0 0.0
        %2975 = vmatprep.subr.mxu0 0.0
        %2976 = vmatpush1.msra.mxu0 0.0
        %2977 = vmatprep.subr.mxu0 0.0
        %2978 = vmatpush1.msra.mxu0 0.0
        %2979 = vmatprep.subr.mxu0 0.0
        %2980 = vmatpush1.msra.mxu0 0.0
        %2981 = vmatprep.subr.mxu0 0.0
        %2982 = vmatpush1.msra.mxu0 0.0
        %2983 = vmatprep.subr.mxu0 0.0
        %2984 = vmatpush1.msra.mxu0 0.0
        %2985 = vmatprep.subr.mxu0 0.0
        %2986 = vmatpush1.msra.mxu0 0.0
        %2987 = vmatprep.subr.mxu0 0.0
        %2988 = vmatpush1.msra.mxu0 0.0
        %2989 = vmatprep.subr.mxu0 0.0
        %2990 = vmatpush1.msra.mxu0 0.0
        %2991 = vmatprep.subr.mxu0 0.0
        %2992 = vmatpush1.msra.mxu0 0.0
        %2993 = vmatprep.subr.mxu0 0.0
        %2994 = vmatpush1.msra.mxu0 0.0
        %2995 = vmatprep.subr.mxu0 0.0
        %2996 = vmatpush1.msra.mxu0 0.0
        %2997 = vmatprep.subr.mxu0 0.0
        %2998 = vmatpush1.msra.mxu0 0.0
        %2999 = vmatprep.mubr.f32.mxu0 0.0
        %3000 = vmatmul.mubr.f32.gmra.mrb[0].mxu0 %v2882
        %v3001 = vpop.f32.mrb[0].mxu0
        %v3002 = vadd.f32 0.0, %v3001
        %v3003 = vpop.f32.mrb[0].mxu0
        %3004 = vmatprep.mubr.f32.mxu0 0.0
        %3005 = vmatmul.mubr.f32.gmra.mrb[0].mxu0 %v2883
        %v3006 = vpop.f32.mrb[0].mxu0
        %v3007 = vadd.f32 0.0, %v3006
        %v3008 = vpop.f32.mrb[0].mxu0
        %3009 = vmatprep.mubr.f32.mxu0 0.0
        %3010 = vmatmul.mubr.f32.gmra.mrb[0].mxu0 %v2884
        %v3011 = vpop.f32.mrb[0].mxu0
        %v3012 = vadd.f32 0.0, %v3011
        %v3013 = vpop.f32.mrb[0].mxu0
        %3014 = vmatprep.mubr.f32.mxu0 0.0
        %3015 = vmatmul.mubr.f32.gmra.mrb[0].mxu0 %v2885
        %v3016 = vpop.f32.mrb[0].mxu0
        %v3017 = vadd.f32 0.0, %v3016
        %v3018 = vpop.f32.mrb[0].mxu0
        %3019 = vmatprep.mubr.f32.mxu0 0.0
        %3020 = vmatmul.mubr.f32.gmra.mrb[0].mxu0 %v2886
        %v3021 = vpop.f32.mrb[0].mxu0
        %v3022 = vadd.f32 0.0, %v3021
        %v3023 = vpop.f32.mrb[0].mxu0
        %3024 = vmatprep.mubr.f32.mxu0 0.0
        %3025 = vmatmul.mubr.f32.gmra.mrb[0].mxu0 %v2887
        %v3026 = vpop.f32.mrb[0].mxu0
        %v3027 = vadd.f32 0.0, %v3026
        %v3028 = vpop.f32.mrb[0].mxu0
        %3029 = vmatprep.mubr.f32.mxu0 0.0
        %3030 = vmatmul.mubr.f32.gmra.mrb[0].mxu0 %v2888
        %v3031 = vpop.f32.mrb[0].mxu0
        %v3032 = vadd.f32 0.0, %v3031
        %v3033 = vpop.f32.mrb[0].mxu0
        %3034 = vmatprep.mubr.f32.mxu0 0.0
        %3035 = vmatmul.mubr.f32.gmra.mrb[0].mxu0 %v2889
        %v3036 = vpop.f32.mrb[0].mxu0
        %v3037 = vadd.f32 0.0, %v3036
        %v3038 = vpop.f32.mrb[0].mxu0
        %3039 = vmatprep.mubr.f32.mxu0 0.0
        %3040 = vmatmul.mubr.f32.gmra.mrb[0].mxu0 %v2890
        %v3041 = vpop.f32.mrb[0].mxu0
        %v3042 = vadd.f32 0.0, %v3041
        %v3043 = vpop.f32.mrb[0].mxu0
        %3044 = vmatprep.mubr.f32.mxu0 0.0
        %3045 = vmatmul.mubr.f32.gmra.mrb[0].mxu0 %v2891
        %v3046 = vpop.f32.mrb[0].mxu0
        %v3047 = vadd.f32 0.0, %v3046
        %v3048 = vpop.f32.mrb[0].mxu0
        %3049 = vmatprep.mubr.f32.mxu0 0.0
        %3050 = vmatmul.mubr.f32.gmra.mrb[0].mxu0 %v2892
        %v3051 = vpop.f32.mrb[0].mxu0
        %v3052 = vadd.f32 0.0, %v3051
        %v3053 = vpop.f32.mrb[0].mxu0
        %3054 = vmatprep.mubr.f32.mxu0 0.0
        %3055 = vmatmul.mubr.f32.gmra.mrb[0].mxu0 %v2893
        %v3056 = vpop.f32.mrb[0].mxu0
        %v3057 = vadd.f32 0.0, %v3056
        %v3058 = vpop.f32.mrb[0].mxu0
        %3059 = vmatprep.mubr.f32.mxu0 0.0
        %3060 = vmatmul.mubr.f32.gmra.mrb[0].mxu0 %v2894
        %v3061 = vpop.f32.mrb[0].mxu0
        %v3062 = vadd.f32 0.0, %v3061
        %v3063 = vpop.f32.mrb[0].mxu0
        %3064 = vmatprep.mubr.f32.mxu0 0.0
        %3065 = vmatmul.mubr.f32.gmra.mrb[0].mxu0 %v2895
        %v3066 = vpop.f32.mrb[0].mxu0
        %v3067 = vadd.f32 0.0, %v3066
        %v3068 = vpop.f32.mrb[0].mxu0
        %3069 = vmatprep.mubr.f32.mxu0 0.0
        %3070 = vmatmul.mubr.f32.gmra.mrb[0].mxu0 %v2896
        %v3071 = vpop.f32.mrb[0].mxu0
        %v3072 = vadd.f32 0.0, %v3071
        %v3073 = vpop.f32.mrb[0].mxu0
        %3074 = vmatprep.mubr.f32.mxu0 0.0
        %3075 = vmatmul.mubr.f32.gmra.mrb[0].mxu0 %v2897
        %v3076 = vpop.f32.mrb[0].mxu0
        %v3077 = vadd.f32 0.0, %v3076
        %v3078 = vpop.f32.mrb[0].mxu0
        %3079 = vmatprep.mubr.f32.mxu0 0.0
        %3080 = vmatmul.mubr.f32.gmra.mrb[0].mxu0 %v2898
        %v3081 = vpop.f32.mrb[0].mxu0
        %v3082 = vadd.f32 0.0, %v3081
        %v3083 = vpop.f32.mrb[0].mxu0
        %3084 = vmatprep.mubr.f32.mxu0 0.0
        %3085 = vmatmul.mubr.f32.gmra.mrb[0].mxu0 %v2899
        %v3086 = vpop.f32.mrb[0].mxu0
        %v3087 = vadd.f32 0.0, %v3086
        %v3088 = vpop.f32.mrb[0].mxu0
        %3089 = vmatprep.mubr.f32.mxu0 0.0
        %3090 = vmatmul.mubr.f32.gmra.mrb[0].mxu0 %v2900
        %v3091 = vpop.f32.mrb[0].mxu0
        %v3092 = vadd.f32 0.0, %v3091
        %v3093 = vpop.f32.mrb[0].mxu0
        %3094 = vmatprep.mubr.f32.mxu0 0.0
        %3095 = vmatmul.mubr.f32.gmra.mrb[0].mxu0 %v2901
        %v3096 = vpop.f32.mrb[0].mxu0
        %v3097 = vadd.f32 0.0, %v3096
        %v3098 = vpop.f32.mrb[0].mxu0
        %3099 = vmatprep.mubr.f32.mxu0 0.0
        %3100 = vmatmul.mubr.f32.gmra.mrb[0].mxu0 %v2902
        %v3101 = vpop.f32.mrb[0].mxu0
        %v3102 = vadd.f32 0.0, %v3101
        %v3103 = vpop.f32.mrb[0].mxu0
        %3104 = vmatprep.mubr.f32.mxu0 0.0
        %3105 = vmatmul.mubr.f32.gmra.mrb[0].mxu0 %v2903
        %v3106 = vpop.f32.mrb[0].mxu0
        %v3107 = vadd.f32 0.0, %v3106
        %v3108 = vpop.f32.mrb[0].mxu0
        %3109 = vmatprep.mubr.f32.mxu0 0.0
        %3110 = vmatmul.mubr.f32.gmra.mrb[0].mxu0 %v2904
        %v3111 = vpop.f32.mrb[0].mxu0
        %v3112 = vadd.f32 0.0, %v3111
        %v3113 = vpop.f32.mrb[0].mxu0
        %3114 = vmatprep.mubr.f32.mxu0 0.0
        %3115 = vmatmul.mubr.f32.gmra.mrb[0].mxu0 %v2905
        %v3116 = vpop.f32.mrb[0].mxu0
        %v3117 = vadd.f32 0.0, %v3116
        %v3118 = vpop.f32.mrb[0].mxu0
        %3119 = vmatprep.mubr.f32.mxu0 0.0
        %3120 = vmatmul.mubr.f32.gmra.mrb[0].mxu0 %v2906
        %v3121 = vpop.f32.mrb[0].mxu0
        %v3122 = vadd.f32 0.0, %v3121
        %v3123 = vpop.f32.mrb[0].mxu0
        %3124 = vmatprep.mubr.f32.mxu0 0.0
        %3125 = vmatmul.mubr.f32.gmra.mrb[0].mxu0 %v2907
        %v3126 = vpop.f32.mrb[0].mxu0
        %v3127 = vadd.f32 0.0, %v3126
        %v3128 = vpop.f32.mrb[0].mxu0
        %3129 = vmatprep.mubr.f32.mxu0 0.0
        %3130 = vmatmul.mubr.f32.gmra.mrb[0].mxu0 %v2908
        %v3131 = vpop.f32.mrb[0].mxu0
        %v3132 = vadd.f32 0.0, %v3131
        %v3133 = vpop.f32.mrb[0].mxu0
        %3134 = vmatprep.mubr.f32.mxu0 0.0
        %3135 = vmatmul.mubr.f32.gmra.mrb[0].mxu0 %v2909
        %v3136 = vpop.f32.mrb[0].mxu0
        %v3137 = vadd.f32 0.0, %v3136
        %v3138 = vpop.f32.mrb[0].mxu0
        %3139 = vmatprep.mubr.f32.mxu0 0.0
        %3140 = vmatmul.mubr.f32.gmra.mrb[0].mxu0 %v2910
        %v3141 = vpop.f32.mrb[0].mxu0
        %v3142 = vadd.f32 0.0, %v3141
        %v3143 = vpop.f32.mrb[0].mxu0
        %3144 = vmatprep.mubr.f32.mxu0 0.0
        %3145 = vmatmul.mubr.f32.gmra.mrb[0].mxu0 %v2911
        %v3146 = vpop.f32.mrb[0].mxu0
        %v3147 = vadd.f32 0.0, %v3146
        %v3148 = vpop.f32.mrb[0].mxu0
        %3149 = vmatprep.mubr.f32.mxu0 0.0
        %3150 = vmatmul.mubr.f32.gmra.mrb[0].mxu0 %v2912
        %v3151 = vpop.f32.mrb[0].mxu0
        %v3152 = vadd.f32 0.0, %v3151
        %v3153 = vpop.f32.mrb[0].mxu0
        %3154 = vmatprep.mubr.f32.mxu0 0.0
        %3155 = vmatmul.mubr.f32.gmra.mrb[0].mxu0 %v2913
        %v3156 = vpop.f32.mrb[0].mxu0
        %v3157 = vadd.f32 0.0, %v3156
        %v3158 = vpop.f32.mrb[0].mxu0
        %3159 = vmatprep.mubr.f32.mxu0 0.0
        %3160 = vmatmul.mubr.f32.gmra.mrb[0].mxu0 %v2914
        %v3161 = vpop.f32.mrb[0].mxu0
        %v3162 = vadd.f32 0.0, %v3161
        %v3163 = vpop.f32.mrb[0].mxu0
        %3164 = vmatprep.mubr.f32.mxu0 0.0
        %3165 = vmatmul.mubr.f32.gmra.mrb[0].mxu0 %v2915
        %v3166 = vpop.f32.mrb[0].mxu0
        %v3167 = vadd.f32 0.0, %v3166
        %v3168 = vpop.f32.mrb[0].mxu0
        %3169 = vmatprep.mubr.f32.mxu0 0.0
        %3170 = vmatmul.mubr.f32.gmra.mrb[0].mxu0 %v2916
        %v3171 = vpop.f32.mrb[0].mxu0
        %v3172 = vadd.f32 0.0, %v3171
        %v3173 = vpop.f32.mrb[0].mxu0
        %3174 = vmatprep.mubr.f32.mxu0 0.0
        %3175 = vmatmul.mubr.f32.gmra.mrb[0].mxu0 %v2917
        %v3176 = vpop.f32.mrb[0].mxu0
        %v3177 = vadd.f32 0.0, %v3176
        %v3178 = vpop.f32.mrb[0].mxu0
        %3179 = vdwg.mxu0
        %v3180 = vld [vmem:[#allocation3] sm:$0xff]
        %v3181 = vld [vmem:[#allocation3 + $0x8] sm:$0xff]
        %v3182 = vld [vmem:[#allocation3 + $0x10] sm:$0xff]
        %v3183 = vld [vmem:[#allocation3 + $0x18] sm:$0xff]
        %v3184 = vld [vmem:[#allocation3 + $0x20] sm:$0xff]
        %v3185 = vld [vmem:[#allocation3 + $0x28] sm:$0xff]
        %v3186 = vld [vmem:[#allocation3 + $0x30] sm:$0xff]
        %v3187 = vld [vmem:[#allocation3 + $0x38] sm:$0xff]
        %v3188 = vld [vmem:[#allocation3 + $0x40] sm:$0xff]
        %v3189 = vld [vmem:[#allocation3 + $0x48] sm:$0xff]
        %v3190 = vld [vmem:[#allocation3 + $0x50] sm:$0xff]
        %v3191 = vld [vmem:[#allocation3 + $0x58] sm:$0xff]
        %v3192 = vld [vmem:[#allocation3 + $0x60] sm:$0xff]
        %v3193 = vld [vmem:[#allocation3 + $0x68] sm:$0xff]
        %v3194 = vld [vmem:[#allocation3 + $0x70] sm:$0xff]
        %v3195 = vld [vmem:[#allocation3 + $0x78] sm:$0xff]
        %v3196 = vld [vmem:[#allocation3 + $0x80] sm:$0xff]
        %v3197 = vld [vmem:[#allocation3 + $0x88] sm:$0xff]
        %v3198 = vld [vmem:[#allocation3 + $0x90] sm:$0xff]
        %v3199 = vld [vmem:[#allocation3 + $0x98] sm:$0xff]
        %v3200 = vld [vmem:[#allocation3 + $0xa0] sm:$0xff]
        %v3201 = vld [vmem:[#allocation3 + $0xa8] sm:$0xff]
        %v3202 = vld [vmem:[#allocation3 + $0xb0] sm:$0xff]
        %v3203 = vld [vmem:[#allocation3 + $0xb8] sm:$0xff]
        %v3204 = vld [vmem:[#allocation3 + $0xc0] sm:$0xff]
        %v3205 = vld [vmem:[#allocation3 + $0xc8] sm:$0xff]
        %v3206 = vld [vmem:[#allocation3 + $0xd0] sm:$0xff]
        %v3207 = vld [vmem:[#allocation3 + $0xd8] sm:$0xff]
        %v3208 = vld [vmem:[#allocation3 + $0xe0] sm:$0xff]
        %v3209 = vld [vmem:[#allocation3 + $0xe8] sm:$0xff]
        %v3210 = vld [vmem:[#allocation3 + $0xf0] sm:$0xff]
        %v3211 = vld [vmem:[#allocation3 + $0xf8] sm:$0xff]
        %v3212 = vld [vmem:[#allocation3 + $0x100] sm:$0xff]
        %v3213 = vld [vmem:[#allocation3 + $0x108] sm:$0xff]
        %v3214 = vld [vmem:[#allocation3 + $0x110] sm:$0xff]
        %v3215 = vld [vmem:[#allocation3 + $0x118] sm:$0xff]
        %v3216 = vadd.f32 %v3180, %v3002
        %v3217 = vadd.f32 %v3181, %v3007
        %v3218 = vadd.f32 %v3182, %v3012
        %v3219 = vadd.f32 %v3183, %v3017
        %v3220 = vadd.f32 %v3184, %v3022
        %v3221 = vadd.f32 %v3185, %v3027
        %v3222 = vadd.f32 %v3186, %v3032
        %v3223 = vadd.f32 %v3187, %v3037
        %v3224 = vadd.f32 %v3188, %v3042
        %v3225 = vadd.f32 %v3189, %v3047
        %v3226 = vadd.f32 %v3190, %v3052
        %v3227 = vadd.f32 %v3191, %v3057
        %v3228 = vadd.f32 %v3192, %v3062
        %v3229 = vadd.f32 %v3193, %v3067
        %v3230 = vadd.f32 %v3194, %v3072
        %v3231 = vadd.f32 %v3195, %v3077
        %v3232 = vadd.f32 %v3196, %v3082
        %v3233 = vadd.f32 %v3197, %v3087
        %v3234 = vadd.f32 %v3198, %v3092
        %v3235 = vadd.f32 %v3199, %v3097
        %v3236 = vadd.f32 %v3200, %v3102
        %v3237 = vadd.f32 %v3201, %v3107
        %v3238 = vadd.f32 %v3202, %v3112
        %v3239 = vadd.f32 %v3203, %v3117
        %v3240 = vadd.f32 %v3204, %v3122
        %v3241 = vadd.f32 %v3205, %v3127
        %v3242 = vadd.f32 %v3206, %v3132
        %v3243 = vadd.f32 %v3207, %v3137
        %v3244 = vadd.f32 %v3208, %v3142
        %v3245 = vadd.f32 %v3209, %v3147
        %v3246 = vadd.f32 %v3210, %v3152
        %v3247 = vadd.f32 %v3211, %v3157
        %v3248 = vadd.f32 %v3212, %v3162
        %v3249 = vadd.f32 %v3213, %v3167
        %v3250 = vadd.f32 %v3214, %v3172
        %v3251 = vadd.f32 %v3215, %v3177
        %3252 = vst [vmem:[#allocation3] sm:$0xff] %v3216
        %3253 = vst [vmem:[#allocation3 + $0x8] sm:$0xff] %v3217
        %3254 = vst [vmem:[#allocation3 + $0x10] sm:$0xff] %v3218
        %3255 = vst [vmem:[#allocation3 + $0x18] sm:$0xff] %v3219
        %3256 = vst [vmem:[#allocation3 + $0x20] sm:$0xff] %v3220
        %3257 = vst [vmem:[#allocation3 + $0x28] sm:$0xff] %v3221
        %3258 = vst [vmem:[#allocation3 + $0x30] sm:$0xff] %v3222
        %3259 = vst [vmem:[#allocation3 + $0x38] sm:$0xff] %v3223
        %3260 = vst [vmem:[#allocation3 + $0x40] sm:$0xff] %v3224
        %3261 = vst [vmem:[#allocation3 + $0x48] sm:$0xff] %v3225
        %3262 = vst [vmem:[#allocation3 + $0x50] sm:$0xff] %v3226
        %3263 = vst [vmem:[#allocation3 + $0x58] sm:$0xff] %v3227
        %3264 = vst [vmem:[#allocation3 + $0x60] sm:$0xff] %v3228
        %3265 = vst [vmem:[#allocation3 + $0x68] sm:$0xff] %v3229
        %3266 = vst [vmem:[#allocation3 + $0x70] sm:$0xff] %v3230
        %3267 = vst [vmem:[#allocation3 + $0x78] sm:$0xff] %v3231
        %3268 = vst [vmem:[#allocation3 + $0x80] sm:$0xff] %v3232
        %3269 = vst [vmem:[#allocation3 + $0x88] sm:$0xff] %v3233
        %3270 = vst [vmem:[#allocation3 + $0x90] sm:$0xff] %v3234
        %3271 = vst [vmem:[#allocation3 + $0x98] sm:$0xff] %v3235
        %3272 = vst [vmem:[#allocation3 + $0xa0] sm:$0xff] %v3236
        %3273 = vst [vmem:[#allocation3 + $0xa8] sm:$0xff] %v3237
        %3274 = vst [vmem:[#allocation3 + $0xb0] sm:$0xff] %v3238
        %3275 = vst [vmem:[#allocation3 + $0xb8] sm:$0xff] %v3239
        %3276 = vst [vmem:[#allocation3 + $0xc0] sm:$0xff] %v3240
        %3277 = vst [vmem:[#allocation3 + $0xc8] sm:$0xff] %v3241
        %3278 = vst [vmem:[#allocation3 + $0xd0] sm:$0xff] %v3242
        %3279 = vst [vmem:[#allocation3 + $0xd8] sm:$0xff] %v3243
        %3280 = vst [vmem:[#allocation3 + $0xe0] sm:$0xff] %v3244
        %3281 = vst [vmem:[#allocation3 + $0xe8] sm:$0xff] %v3245
        %3282 = vst [vmem:[#allocation3 + $0xf0] sm:$0xff] %v3246
        %3283 = vst [vmem:[#allocation3 + $0xf8] sm:$0xff] %v3247
        %3284 = vst [vmem:[#allocation3 + $0x100] sm:$0xff] %v3248
        %3285 = vst [vmem:[#allocation3 + $0x108] sm:$0xff] %v3249
        %3286 = vst [vmem:[#allocation3 + $0x110] sm:$0xff] %v3250
        %3287 = vst [vmem:[#allocation3 + $0x118] sm:$0xff] %v3251
        %v3288 = vld [vmem:[#allocation2 + $0x24] sm:$0xff]
        %v3289 = vld [vmem:[#allocation2 + $0x2c] sm:$0xff]
        %v3290 = vld [vmem:[#allocation2 + $0x34] sm:$0xff]
        %v3291 = vld [vmem:[#allocation2 + $0x3c] sm:$0xff]
        %v3292 = vld [vmem:[#allocation2 + $0x44] sm:$0xff]
        %v3293 = vld [vmem:[#allocation2 + $0x4c] sm:$0xff]
        %v3294 = vld [vmem:[#allocation2 + $0x54] sm:$0xff]
        %v3295 = vld [vmem:[#allocation2 + $0x5c] sm:$0xff]
        %v3296 = vld [vmem:[#allocation2 + $0x64] sm:$0xff]
        %v3297 = vld [vmem:[#allocation2 + $0x6c] sm:$0xff]
        %v3298 = vld [vmem:[#allocation2 + $0x74] sm:$0xff]
        %v3299 = vld [vmem:[#allocation2 + $0x7c] sm:$0xff]
        %v3300 = vld [vmem:[#allocation2 + $0x84] sm:$0xff]
        %v3301 = vld [vmem:[#allocation2 + $0x8c] sm:$0xff]
        %v3302 = vld [vmem:[#allocation2 + $0x94] sm:$0xff]
        %v3303 = vld [vmem:[#allocation2 + $0x9c] sm:$0xff]
        %v3304 = vld [vmem:[#allocation2 + $0xa4] sm:$0xff]
        %v3305 = vld [vmem:[#allocation2 + $0xac] sm:$0xff]
        %v3306 = vld [vmem:[#allocation2 + $0xb4] sm:$0xff]
        %v3307 = vld [vmem:[#allocation2 + $0xbc] sm:$0xff]
        %v3308 = vld [vmem:[#allocation2 + $0xc4] sm:$0xff]
        %v3309 = vld [vmem:[#allocation2 + $0xcc] sm:$0xff]
        %v3310 = vld [vmem:[#allocation2 + $0xd4] sm:$0xff]
        %v3311 = vld [vmem:[#allocation2 + $0xdc] sm:$0xff]
        %v3312 = vld [vmem:[#allocation2 + $0xe4] sm:$0xff]
        %v3313 = vld [vmem:[#allocation2 + $0xec] sm:$0xff]
        %v3314 = vld [vmem:[#allocation2 + $0xf4] sm:$0xff]
        %v3315 = vld [vmem:[#allocation2 + $0xfc] sm:$0xff]
        %v3316 = vld [vmem:[#allocation2 + $0x104] sm:$0xff]
        %v3317 = vld [vmem:[#allocation2 + $0x10c] sm:$0xff]
        %v3318 = vld [vmem:[#allocation2 + $0x114] sm:$0xff]
        %v3319 = vld [vmem:[#allocation2 + $0x11c] sm:$0xff]
        %v3320 = vld [vmem:[#allocation2 + $0x124] sm:$0xff]
        %v3321 = vld [vmem:[#allocation2 + $0x12c] sm:$0xff]
        %v3322 = vld [vmem:[#allocation2 + $0x134] sm:$0xff]
        %v3323 = vld [vmem:[#allocation2 + $0x13c] sm:$0xff]
        %s3324 = scalar_lea.vmem [#allocation13], 768
        %v3325 = vld [vmem:[%s3324] sm:$0xff]
        %v3326 = vld [vmem:[%s3324 + $0x8] sm:$0xff]
        %v3327 = vld [vmem:[%s3324 + $0x10] sm:$0xff]
        %v3328 = vld [vmem:[%s3324 + $0x18] sm:$0xff]
        %v3329 = vld [vmem:[%s3324 + $0x20] sm:$0xff]
        %v3330 = vld [vmem:[%s3324 + $0x28] sm:$0xff]
        %v3331 = vld [vmem:[%s3324 + $0x30] sm:$0xff]
        %v3332 = vld [vmem:[%s3324 + $0x38] sm:$0xff]
        %v3333 = vld [vmem:[%s3324 + $0x40] sm:$0xff]
        %v3334 = vld [vmem:[%s3324 + $0x48] sm:$0xff]
        %v3335 = vld [vmem:[%s3324 + $0x50] sm:$0xff]
        %v3336 = vld [vmem:[%s3324 + $0x58] sm:$0xff]
        %v3337 = vld [vmem:[%s3324 + $0x60] sm:$0xff]
        %v3338 = vld [vmem:[%s3324 + $0x68] sm:$0xff]
        %v3339 = vld [vmem:[%s3324 + $0x70] sm:$0xff]
        %v3340 = vld [vmem:[%s3324 + $0x78] sm:$0xff]
        %3341 = vmatprep.subr.mxu0 0.0
        %3342 = vmatpush1.msra.mxu0 %v3325
        %3343 = vmatprep.subr.mxu0 0.0
        %3344 = vmatpush1.msra.mxu0 %v3326
        %3345 = vmatprep.subr.mxu0 0.0
        %3346 = vmatpush1.msra.mxu0 %v3327
        %3347 = vmatprep.subr.mxu0 0.0
        %3348 = vmatpush1.msra.mxu0 %v3328
        %3349 = vmatprep.subr.mxu0 0.0
        %3350 = vmatpush1.msra.mxu0 %v3329
        %3351 = vmatprep.subr.mxu0 0.0
        %3352 = vmatpush1.msra.mxu0 %v3330
        %3353 = vmatprep.subr.mxu0 0.0
        %3354 = vmatpush1.msra.mxu0 %v3331
        %3355 = vmatprep.subr.mxu0 0.0
        %3356 = vmatpush1.msra.mxu0 %v3332
        %3357 = vmatprep.subr.mxu0 0.0
        %3358 = vmatpush1.msra.mxu0 %v3333
        %3359 = vmatprep.subr.mxu0 0.0
        %3360 = vmatpush1.msra.mxu0 %v3334
        %3361 = vmatprep.subr.mxu0 0.0
        %3362 = vmatpush1.msra.mxu0 %v3335
        %3363 = vmatprep.subr.mxu0 0.0
        %3364 = vmatpush1.msra.mxu0 %v3336
        %3365 = vmatprep.subr.mxu0 0.0
        %3366 = vmatpush1.msra.mxu0 %v3337
        %3367 = vmatprep.subr.mxu0 0.0
        %3368 = vmatpush1.msra.mxu0 %v3338
        %3369 = vmatprep.subr.mxu0 0.0
        %3370 = vmatpush1.msra.mxu0 %v3339
        %3371 = vmatprep.subr.mxu0 0.0
        %3372 = vmatpush1.msra.mxu0 %v3340
        %3373 = vmatprep.subr.mxu0 0.0
        %3374 = vmatpush1.msra.mxu0 0.0
        %3375 = vmatprep.subr.mxu0 0.0
        %3376 = vmatpush1.msra.mxu0 0.0
        %3377 = vmatprep.subr.mxu0 0.0
        %3378 = vmatpush1.msra.mxu0 0.0
        %3379 = vmatprep.subr.mxu0 0.0
        %3380 = vmatpush1.msra.mxu0 0.0
        %3381 = vmatprep.subr.mxu0 0.0
        %3382 = vmatpush1.msra.mxu0 0.0
        %3383 = vmatprep.subr.mxu0 0.0
        %3384 = vmatpush1.msra.mxu0 0.0
        %3385 = vmatprep.subr.mxu0 0.0
        %3386 = vmatpush1.msra.mxu0 0.0
        %3387 = vmatprep.subr.mxu0 0.0
        %3388 = vmatpush1.msra.mxu0 0.0
        %3389 = vmatprep.subr.mxu0 0.0
        %3390 = vmatpush1.msra.mxu0 0.0
        %3391 = vmatprep.subr.mxu0 0.0
        %3392 = vmatpush1.msra.mxu0 0.0
        %3393 = vmatprep.subr.mxu0 0.0
        %3394 = vmatpush1.msra.mxu0 0.0
        %3395 = vmatprep.subr.mxu0 0.0
        %3396 = vmatpush1.msra.mxu0 0.0
        %3397 = vmatprep.subr.mxu0 0.0
        %3398 = vmatpush1.msra.mxu0 0.0
        %3399 = vmatprep.subr.mxu0 0.0
        %3400 = vmatpush1.msra.mxu0 0.0
        %3401 = vmatprep.subr.mxu0 0.0
        %3402 = vmatpush1.msra.mxu0 0.0
        %3403 = vmatprep.subr.mxu0 0.0
        %3404 = vmatpush1.msra.mxu0 0.0
        %3405 = vmatprep.mubr.f32.mxu0 0.0
        %3406 = vmatmul.mubr.f32.gmra.mrb[0].mxu0 %v3288
        %v3407 = vpop.f32.mrb[0].mxu0
        %v3408 = vadd.f32 0.0, %v3407
        %v3409 = vpop.f32.mrb[0].mxu0
        %3410 = vmatprep.mubr.f32.mxu0 0.0
        %3411 = vmatmul.mubr.f32.gmra.mrb[0].mxu0 %v3289
        %v3412 = vpop.f32.mrb[0].mxu0
        %v3413 = vadd.f32 0.0, %v3412
        %v3414 = vpop.f32.mrb[0].mxu0
        %3415 = vmatprep.mubr.f32.mxu0 0.0
        %3416 = vmatmul.mubr.f32.gmra.mrb[0].mxu0 %v3290
        %v3417 = vpop.f32.mrb[0].mxu0
        %v3418 = vadd.f32 0.0, %v3417
        %v3419 = vpop.f32.mrb[0].mxu0
        %3420 = vmatprep.mubr.f32.mxu0 0.0
        %3421 = vmatmul.mubr.f32.gmra.mrb[0].mxu0 %v3291
        %v3422 = vpop.f32.mrb[0].mxu0
        %v3423 = vadd.f32 0.0, %v3422
        %v3424 = vpop.f32.mrb[0].mxu0
        %3425 = vmatprep.mubr.f32.mxu0 0.0
        %3426 = vmatmul.mubr.f32.gmra.mrb[0].mxu0 %v3292
        %v3427 = vpop.f32.mrb[0].mxu0
        %v3428 = vadd.f32 0.0, %v3427
        %v3429 = vpop.f32.mrb[0].mxu0
        %3430 = vmatprep.mubr.f32.mxu0 0.0
        %3431 = vmatmul.mubr.f32.gmra.mrb[0].mxu0 %v3293
        %v3432 = vpop.f32.mrb[0].mxu0
        %v3433 = vadd.f32 0.0, %v3432
        %v3434 = vpop.f32.mrb[0].mxu0
        %3435 = vmatprep.mubr.f32.mxu0 0.0
        %3436 = vmatmul.mubr.f32.gmra.mrb[0].mxu0 %v3294
        %v3437 = vpop.f32.mrb[0].mxu0
        %v3438 = vadd.f32 0.0, %v3437
        %v3439 = vpop.f32.mrb[0].mxu0
        %3440 = vmatprep.mubr.f32.mxu0 0.0
        %3441 = vmatmul.mubr.f32.gmra.mrb[0].mxu0 %v3295
        %v3442 = vpop.f32.mrb[0].mxu0
        %v3443 = vadd.f32 0.0, %v3442
        %v3444 = vpop.f32.mrb[0].mxu0
        %3445 = vmatprep.mubr.f32.mxu0 0.0
        %3446 = vmatmul.mubr.f32.gmra.mrb[0].mxu0 %v3296
        %v3447 = vpop.f32.mrb[0].mxu0
        %v3448 = vadd.f32 0.0, %v3447
        %v3449 = vpop.f32.mrb[0].mxu0
        %3450 = vmatprep.mubr.f32.mxu0 0.0
        %3451 = vmatmul.mubr.f32.gmra.mrb[0].mxu0 %v3297
        %v3452 = vpop.f32.mrb[0].mxu0
        %v3453 = vadd.f32 0.0, %v3452
        %v3454 = vpop.f32.mrb[0].mxu0
        %3455 = vmatprep.mubr.f32.mxu0 0.0
        %3456 = vmatmul.mubr.f32.gmra.mrb[0].mxu0 %v3298
        %v3457 = vpop.f32.mrb[0].mxu0
        %v3458 = vadd.f32 0.0, %v3457
        %v3459 = vpop.f32.mrb[0].mxu0
        %3460 = vmatprep.mubr.f32.mxu0 0.0
        %3461 = vmatmul.mubr.f32.gmra.mrb[0].mxu0 %v3299
        %v3462 = vpop.f32.mrb[0].mxu0
        %v3463 = vadd.f32 0.0, %v3462
        %v3464 = vpop.f32.mrb[0].mxu0
        %3465 = vmatprep.mubr.f32.mxu0 0.0
        %3466 = vmatmul.mubr.f32.gmra.mrb[0].mxu0 %v3300
        %v3467 = vpop.f32.mrb[0].mxu0
        %v3468 = vadd.f32 0.0, %v3467
        %v3469 = vpop.f32.mrb[0].mxu0
        %3470 = vmatprep.mubr.f32.mxu0 0.0
        %3471 = vmatmul.mubr.f32.gmra.mrb[0].mxu0 %v3301
        %v3472 = vpop.f32.mrb[0].mxu0
        %v3473 = vadd.f32 0.0, %v3472
        %v3474 = vpop.f32.mrb[0].mxu0
        %3475 = vmatprep.mubr.f32.mxu0 0.0
        %3476 = vmatmul.mubr.f32.gmra.mrb[0].mxu0 %v3302
        %v3477 = vpop.f32.mrb[0].mxu0
        %v3478 = vadd.f32 0.0, %v3477
        %v3479 = vpop.f32.mrb[0].mxu0
        %3480 = vmatprep.mubr.f32.mxu0 0.0
        %3481 = vmatmul.mubr.f32.gmra.mrb[0].mxu0 %v3303
        %v3482 = vpop.f32.mrb[0].mxu0
        %v3483 = vadd.f32 0.0, %v3482
        %v3484 = vpop.f32.mrb[0].mxu0
        %3485 = vmatprep.mubr.f32.mxu0 0.0
        %3486 = vmatmul.mubr.f32.gmra.mrb[0].mxu0 %v3304
        %v3487 = vpop.f32.mrb[0].mxu0
        %v3488 = vadd.f32 0.0, %v3487
        %v3489 = vpop.f32.mrb[0].mxu0
        %3490 = vmatprep.mubr.f32.mxu0 0.0
        %3491 = vmatmul.mubr.f32.gmra.mrb[0].mxu0 %v3305
        %v3492 = vpop.f32.mrb[0].mxu0
        %v3493 = vadd.f32 0.0, %v3492
        %v3494 = vpop.f32.mrb[0].mxu0
        %3495 = vmatprep.mubr.f32.mxu0 0.0
        %3496 = vmatmul.mubr.f32.gmra.mrb[0].mxu0 %v3306
        %v3497 = vpop.f32.mrb[0].mxu0
        %v3498 = vadd.f32 0.0, %v3497
        %v3499 = vpop.f32.mrb[0].mxu0
        %3500 = vmatprep.mubr.f32.mxu0 0.0
        %3501 = vmatmul.mubr.f32.gmra.mrb[0].mxu0 %v3307
        %v3502 = vpop.f32.mrb[0].mxu0
        %v3503 = vadd.f32 0.0, %v3502
        %v3504 = vpop.f32.mrb[0].mxu0
        %3505 = vmatprep.mubr.f32.mxu0 0.0
        %3506 = vmatmul.mubr.f32.gmra.mrb[0].mxu0 %v3308
        %v3507 = vpop.f32.mrb[0].mxu0
        %v3508 = vadd.f32 0.0, %v3507
        %v3509 = vpop.f32.mrb[0].mxu0
        %3510 = vmatprep.mubr.f32.mxu0 0.0
        %3511 = vmatmul.mubr.f32.gmra.mrb[0].mxu0 %v3309
        %v3512 = vpop.f32.mrb[0].mxu0
        %v3513 = vadd.f32 0.0, %v3512
        %v3514 = vpop.f32.mrb[0].mxu0
        %3515 = vmatprep.mubr.f32.mxu0 0.0
        %3516 = vmatmul.mubr.f32.gmra.mrb[0].mxu0 %v3310
        %v3517 = vpop.f32.mrb[0].mxu0
        %v3518 = vadd.f32 0.0, %v3517
        %v3519 = vpop.f32.mrb[0].mxu0
        %3520 = vmatprep.mubr.f32.mxu0 0.0
        %3521 = vmatmul.mubr.f32.gmra.mrb[0].mxu0 %v3311
        %v3522 = vpop.f32.mrb[0].mxu0
        %v3523 = vadd.f32 0.0, %v3522
        %v3524 = vpop.f32.mrb[0].mxu0
        %3525 = vmatprep.mubr.f32.mxu0 0.0
        %3526 = vmatmul.mubr.f32.gmra.mrb[0].mxu0 %v3312
        %v3527 = vpop.f32.mrb[0].mxu0
        %v3528 = vadd.f32 0.0, %v3527
        %v3529 = vpop.f32.mrb[0].mxu0
        %3530 = vmatprep.mubr.f32.mxu0 0.0
        %3531 = vmatmul.mubr.f32.gmra.mrb[0].mxu0 %v3313
        %v3532 = vpop.f32.mrb[0].mxu0
        %v3533 = vadd.f32 0.0, %v3532
        %v3534 = vpop.f32.mrb[0].mxu0
        %3535 = vmatprep.mubr.f32.mxu0 0.0
        %3536 = vmatmul.mubr.f32.gmra.mrb[0].mxu0 %v3314
        %v3537 = vpop.f32.mrb[0].mxu0
        %v3538 = vadd.f32 0.0, %v3537
        %v3539 = vpop.f32.mrb[0].mxu0
        %3540 = vmatprep.mubr.f32.mxu0 0.0
        %3541 = vmatmul.mubr.f32.gmra.mrb[0].mxu0 %v3315
        %v3542 = vpop.f32.mrb[0].mxu0
        %v3543 = vadd.f32 0.0, %v3542
        %v3544 = vpop.f32.mrb[0].mxu0
        %3545 = vmatprep.mubr.f32.mxu0 0.0
        %3546 = vmatmul.mubr.f32.gmra.mrb[0].mxu0 %v3316
        %v3547 = vpop.f32.mrb[0].mxu0
        %v3548 = vadd.f32 0.0, %v3547
        %v3549 = vpop.f32.mrb[0].mxu0
        %3550 = vmatprep.mubr.f32.mxu0 0.0
        %3551 = vmatmul.mubr.f32.gmra.mrb[0].mxu0 %v3317
        %v3552 = vpop.f32.mrb[0].mxu0
        %v3553 = vadd.f32 0.0, %v3552
        %v3554 = vpop.f32.mrb[0].mxu0
        %3555 = vmatprep.mubr.f32.mxu0 0.0
        %3556 = vmatmul.mubr.f32.gmra.mrb[0].mxu0 %v3318
        %v3557 = vpop.f32.mrb[0].mxu0
        %v3558 = vadd.f32 0.0, %v3557
        %v3559 = vpop.f32.mrb[0].mxu0
        %3560 = vmatprep.mubr.f32.mxu0 0.0
        %3561 = vmatmul.mubr.f32.gmra.mrb[0].mxu0 %v3319
        %v3562 = vpop.f32.mrb[0].mxu0
        %v3563 = vadd.f32 0.0, %v3562
        %v3564 = vpop.f32.mrb[0].mxu0
        %3565 = vmatprep.mubr.f32.mxu0 0.0
        %3566 = vmatmul.mubr.f32.gmra.mrb[0].mxu0 %v3320
        %v3567 = vpop.f32.mrb[0].mxu0
        %v3568 = vadd.f32 0.0, %v3567
        %v3569 = vpop.f32.mrb[0].mxu0
        %3570 = vmatprep.mubr.f32.mxu0 0.0
        %3571 = vmatmul.mubr.f32.gmra.mrb[0].mxu0 %v3321
        %v3572 = vpop.f32.mrb[0].mxu0
        %v3573 = vadd.f32 0.0, %v3572
        %v3574 = vpop.f32.mrb[0].mxu0
        %3575 = vmatprep.mubr.f32.mxu0 0.0
        %3576 = vmatmul.mubr.f32.gmra.mrb[0].mxu0 %v3322
        %v3577 = vpop.f32.mrb[0].mxu0
        %v3578 = vadd.f32 0.0, %v3577
        %v3579 = vpop.f32.mrb[0].mxu0
        %3580 = vmatprep.mubr.f32.mxu0 0.0
        %3581 = vmatmul.mubr.f32.gmra.mrb[0].mxu0 %v3323
        %v3582 = vpop.f32.mrb[0].mxu0
        %v3583 = vadd.f32 0.0, %v3582
        %v3584 = vpop.f32.mrb[0].mxu0
        %3585 = vdwg.mxu0
        %v3586 = vld [vmem:[#allocation3] sm:$0xff]
        %v3587 = vld [vmem:[#allocation3 + $0x8] sm:$0xff]
        %v3588 = vld [vmem:[#allocation3 + $0x10] sm:$0xff]
        %v3589 = vld [vmem:[#allocation3 + $0x18] sm:$0xff]
        %v3590 = vld [vmem:[#allocation3 + $0x20] sm:$0xff]
        %v3591 = vld [vmem:[#allocation3 + $0x28] sm:$0xff]
        %v3592 = vld [vmem:[#allocation3 + $0x30] sm:$0xff]
        %v3593 = vld [vmem:[#allocation3 + $0x38] sm:$0xff]
        %v3594 = vld [vmem:[#allocation3 + $0x40] sm:$0xff]
        %v3595 = vld [vmem:[#allocation3 + $0x48] sm:$0xff]
        %v3596 = vld [vmem:[#allocation3 + $0x50] sm:$0xff]
        %v3597 = vld [vmem:[#allocation3 + $0x58] sm:$0xff]
        %v3598 = vld [vmem:[#allocation3 + $0x60] sm:$0xff]
        %v3599 = vld [vmem:[#allocation3 + $0x68] sm:$0xff]
        %v3600 = vld [vmem:[#allocation3 + $0x70] sm:$0xff]
        %v3601 = vld [vmem:[#allocation3 + $0x78] sm:$0xff]
        %v3602 = vld [vmem:[#allocation3 + $0x80] sm:$0xff]
        %v3603 = vld [vmem:[#allocation3 + $0x88] sm:$0xff]
        %v3604 = vld [vmem:[#allocation3 + $0x90] sm:$0xff]
        %v3605 = vld [vmem:[#allocation3 + $0x98] sm:$0xff]
        %v3606 = vld [vmem:[#allocation3 + $0xa0] sm:$0xff]
        %v3607 = vld [vmem:[#allocation3 + $0xa8] sm:$0xff]
        %v3608 = vld [vmem:[#allocation3 + $0xb0] sm:$0xff]
        %v3609 = vld [vmem:[#allocation3 + $0xb8] sm:$0xff]
        %v3610 = vld [vmem:[#allocation3 + $0xc0] sm:$0xff]
        %v3611 = vld [vmem:[#allocation3 + $0xc8] sm:$0xff]
        %v3612 = vld [vmem:[#allocation3 + $0xd0] sm:$0xff]
        %v3613 = vld [vmem:[#allocation3 + $0xd8] sm:$0xff]
        %v3614 = vld [vmem:[#allocation3 + $0xe0] sm:$0xff]
        %v3615 = vld [vmem:[#allocation3 + $0xe8] sm:$0xff]
        %v3616 = vld [vmem:[#allocation3 + $0xf0] sm:$0xff]
        %v3617 = vld [vmem:[#allocation3 + $0xf8] sm:$0xff]
        %v3618 = vld [vmem:[#allocation3 + $0x100] sm:$0xff]
        %v3619 = vld [vmem:[#allocation3 + $0x108] sm:$0xff]
        %v3620 = vld [vmem:[#allocation3 + $0x110] sm:$0xff]
        %v3621 = vld [vmem:[#allocation3 + $0x118] sm:$0xff]
        %v3622 = vadd.f32 %v3586, %v3408
        %v3623 = vadd.f32 %v3587, %v3413
        %v3624 = vadd.f32 %v3588, %v3418
        %v3625 = vadd.f32 %v3589, %v3423
        %v3626 = vadd.f32 %v3590, %v3428
        %v3627 = vadd.f32 %v3591, %v3433
        %v3628 = vadd.f32 %v3592, %v3438
        %v3629 = vadd.f32 %v3593, %v3443
        %v3630 = vadd.f32 %v3594, %v3448
        %v3631 = vadd.f32 %v3595, %v3453
        %v3632 = vadd.f32 %v3596, %v3458
        %v3633 = vadd.f32 %v3597, %v3463
        %v3634 = vadd.f32 %v3598, %v3468
        %v3635 = vadd.f32 %v3599, %v3473
        %v3636 = vadd.f32 %v3600, %v3478
        %v3637 = vadd.f32 %v3601, %v3483
        %v3638 = vadd.f32 %v3602, %v3488
        %v3639 = vadd.f32 %v3603, %v3493
        %v3640 = vadd.f32 %v3604, %v3498
        %v3641 = vadd.f32 %v3605, %v3503
        %v3642 = vadd.f32 %v3606, %v3508
        %v3643 = vadd.f32 %v3607, %v3513
        %v3644 = vadd.f32 %v3608, %v3518
        %v3645 = vadd.f32 %v3609, %v3523
        %v3646 = vadd.f32 %v3610, %v3528
        %v3647 = vadd.f32 %v3611, %v3533
        %v3648 = vadd.f32 %v3612, %v3538
        %v3649 = vadd.f32 %v3613, %v3543
        %v3650 = vadd.f32 %v3614, %v3548
        %v3651 = vadd.f32 %v3615, %v3553
        %v3652 = vadd.f32 %v3616, %v3558
        %v3653 = vadd.f32 %v3617, %v3563
        %v3654 = vadd.f32 %v3618, %v3568
        %v3655 = vadd.f32 %v3619, %v3573
        %v3656 = vadd.f32 %v3620, %v3578
        %v3657 = vadd.f32 %v3621, %v3583
        %3658 = vst [vmem:[#allocation3] sm:$0xff] %v3622
        %3659 = vst [vmem:[#allocation3 + $0x8] sm:$0xff] %v3623
        %3660 = vst [vmem:[#allocation3 + $0x10] sm:$0xff] %v3624
        %3661 = vst [vmem:[#allocation3 + $0x18] sm:$0xff] %v3625
        %3662 = vst [vmem:[#allocation3 + $0x20] sm:$0xff] %v3626
        %3663 = vst [vmem:[#allocation3 + $0x28] sm:$0xff] %v3627
        %3664 = vst [vmem:[#allocation3 + $0x30] sm:$0xff] %v3628
        %3665 = vst [vmem:[#allocation3 + $0x38] sm:$0xff] %v3629
        %3666 = vst [vmem:[#allocation3 + $0x40] sm:$0xff] %v3630
        %3667 = vst [vmem:[#allocation3 + $0x48] sm:$0xff] %v3631
        %3668 = vst [vmem:[#allocation3 + $0x50] sm:$0xff] %v3632
        %3669 = vst [vmem:[#allocation3 + $0x58] sm:$0xff] %v3633
        %3670 = vst [vmem:[#allocation3 + $0x60] sm:$0xff] %v3634
        %3671 = vst [vmem:[#allocation3 + $0x68] sm:$0xff] %v3635
        %3672 = vst [vmem:[#allocation3 + $0x70] sm:$0xff] %v3636
        %3673 = vst [vmem:[#allocation3 + $0x78] sm:$0xff] %v3637
        %3674 = vst [vmem:[#allocation3 + $0x80] sm:$0xff] %v3638
        %3675 = vst [vmem:[#allocation3 + $0x88] sm:$0xff] %v3639
        %3676 = vst [vmem:[#allocation3 + $0x90] sm:$0xff] %v3640
        %3677 = vst [vmem:[#allocation3 + $0x98] sm:$0xff] %v3641
        %3678 = vst [vmem:[#allocation3 + $0xa0] sm:$0xff] %v3642
        %3679 = vst [vmem:[#allocation3 + $0xa8] sm:$0xff] %v3643
        %3680 = vst [vmem:[#allocation3 + $0xb0] sm:$0xff] %v3644
        %3681 = vst [vmem:[#allocation3 + $0xb8] sm:$0xff] %v3645
        %3682 = vst [vmem:[#allocation3 + $0xc0] sm:$0xff] %v3646
        %3683 = vst [vmem:[#allocation3 + $0xc8] sm:$0xff] %v3647
        %3684 = vst [vmem:[#allocation3 + $0xd0] sm:$0xff] %v3648
        %3685 = vst [vmem:[#allocation3 + $0xd8] sm:$0xff] %v3649
        %3686 = vst [vmem:[#allocation3 + $0xe0] sm:$0xff] %v3650
        %3687 = vst [vmem:[#allocation3 + $0xe8] sm:$0xff] %v3651
        %3688 = vst [vmem:[#allocation3 + $0xf0] sm:$0xff] %v3652
        %3689 = vst [vmem:[#allocation3 + $0xf8] sm:$0xff] %v3653
        %3690 = vst [vmem:[#allocation3 + $0x100] sm:$0xff] %v3654
        %3691 = vst [vmem:[#allocation3 + $0x108] sm:$0xff] %v3655
        %3692 = vst [vmem:[#allocation3 + $0x110] sm:$0xff] %v3656
        %3693 = vst [vmem:[#allocation3 + $0x118] sm:$0xff] %v3657
        %v3694 = vld [vmem:[#allocation2 + $0x25] sm:$0xff]
        %v3695 = vld [vmem:[#allocation2 + $0x2d] sm:$0xff]
        %v3696 = vld [vmem:[#allocation2 + $0x35] sm:$0xff]
        %v3697 = vld [vmem:[#allocation2 + $0x3d] sm:$0xff]
        %v3698 = vld [vmem:[#allocation2 + $0x45] sm:$0xff]
        %v3699 = vld [vmem:[#allocation2 + $0x4d] sm:$0xff]
        %v3700 = vld [vmem:[#allocation2 + $0x55] sm:$0xff]
        %v3701 = vld [vmem:[#allocation2 + $0x5d] sm:$0xff]
        %v3702 = vld [vmem:[#allocation2 + $0x65] sm:$0xff]
        %v3703 = vld [vmem:[#allocation2 + $0x6d] sm:$0xff]
        %v3704 = vld [vmem:[#allocation2 + $0x75] sm:$0xff]
        %v3705 = vld [vmem:[#allocation2 + $0x7d] sm:$0xff]
        %v3706 = vld [vmem:[#allocation2 + $0x85] sm:$0xff]
        %v3707 = vld [vmem:[#allocation2 + $0x8d] sm:$0xff]
        %v3708 = vld [vmem:[#allocation2 + $0x95] sm:$0xff]
        %v3709 = vld [vmem:[#allocation2 + $0x9d] sm:$0xff]
        %v3710 = vld [vmem:[#allocation2 + $0xa5] sm:$0xff]
        %v3711 = vld [vmem:[#allocation2 + $0xad] sm:$0xff]
        %v3712 = vld [vmem:[#allocation2 + $0xb5] sm:$0xff]
        %v3713 = vld [vmem:[#allocation2 + $0xbd] sm:$0xff]
        %v3714 = vld [vmem:[#allocation2 + $0xc5] sm:$0xff]
        %v3715 = vld [vmem:[#allocation2 + $0xcd] sm:$0xff]
        %v3716 = vld [vmem:[#allocation2 + $0xd5] sm:$0xff]
        %v3717 = vld [vmem:[#allocation2 + $0xdd] sm:$0xff]
        %v3718 = vld [vmem:[#allocation2 + $0xe5] sm:$0xff]
        %v3719 = vld [vmem:[#allocation2 + $0xed] sm:$0xff]
        %v3720 = vld [vmem:[#allocation2 + $0xf5] sm:$0xff]
        %v3721 = vld [vmem:[#allocation2 + $0xfd] sm:$0xff]
        %v3722 = vld [vmem:[#allocation2 + $0x105] sm:$0xff]
        %v3723 = vld [vmem:[#allocation2 + $0x10d] sm:$0xff]
        %v3724 = vld [vmem:[#allocation2 + $0x115] sm:$0xff]
        %v3725 = vld [vmem:[#allocation2 + $0x11d] sm:$0xff]
        %v3726 = vld [vmem:[#allocation2 + $0x125] sm:$0xff]
        %v3727 = vld [vmem:[#allocation2 + $0x12d] sm:$0xff]
        %v3728 = vld [vmem:[#allocation2 + $0x135] sm:$0xff]
        %v3729 = vld [vmem:[#allocation2 + $0x13d] sm:$0xff]
        %s3730 = scalar_lea.vmem [#allocation13], 896
        %v3731 = vld [vmem:[%s3730] sm:$0xff]
        %v3732 = vld [vmem:[%s3730 + $0x8] sm:$0xff]
        %v3733 = vld [vmem:[%s3730 + $0x10] sm:$0xff]
        %v3734 = vld [vmem:[%s3730 + $0x18] sm:$0xff]
        %v3735 = vld [vmem:[%s3730 + $0x20] sm:$0xff]
        %v3736 = vld [vmem:[%s3730 + $0x28] sm:$0xff]
        %v3737 = vld [vmem:[%s3730 + $0x30] sm:$0xff]
        %v3738 = vld [vmem:[%s3730 + $0x38] sm:$0xff]
        %v3739 = vld [vmem:[%s3730 + $0x40] sm:$0xff]
        %v3740 = vld [vmem:[%s3730 + $0x48] sm:$0xff]
        %v3741 = vld [vmem:[%s3730 + $0x50] sm:$0xff]
        %v3742 = vld [vmem:[%s3730 + $0x58] sm:$0xff]
        %v3743 = vld [vmem:[%s3730 + $0x60] sm:$0xff]
        %v3744 = vld [vmem:[%s3730 + $0x68] sm:$0xff]
        %v3745 = vld [vmem:[%s3730 + $0x70] sm:$0xff]
        %v3746 = vld [vmem:[%s3730 + $0x78] sm:$0xff]
        %3747 = vmatprep.subr.mxu0 0.0
        %3748 = vmatpush1.msra.mxu0 %v3731
        %3749 = vmatprep.subr.mxu0 0.0
        %3750 = vmatpush1.msra.mxu0 %v3732
        %3751 = vmatprep.subr.mxu0 0.0
        %3752 = vmatpush1.msra.mxu0 %v3733
        %3753 = vmatprep.subr.mxu0 0.0
        %3754 = vmatpush1.msra.mxu0 %v3734
        %3755 = vmatprep.subr.mxu0 0.0
        %3756 = vmatpush1.msra.mxu0 %v3735
        %3757 = vmatprep.subr.mxu0 0.0
        %3758 = vmatpush1.msra.mxu0 %v3736
        %3759 = vmatprep.subr.mxu0 0.0
        %3760 = vmatpush1.msra.mxu0 %v3737
        %3761 = vmatprep.subr.mxu0 0.0
        %3762 = vmatpush1.msra.mxu0 %v3738
        %3763 = vmatprep.subr.mxu0 0.0
        %3764 = vmatpush1.msra.mxu0 %v3739
        %3765 = vmatprep.subr.mxu0 0.0
        %3766 = vmatpush1.msra.mxu0 %v3740
        %3767 = vmatprep.subr.mxu0 0.0
        %3768 = vmatpush1.msra.mxu0 %v3741
        %3769 = vmatprep.subr.mxu0 0.0
        %3770 = vmatpush1.msra.mxu0 %v3742
        %3771 = vmatprep.subr.mxu0 0.0
        %3772 = vmatpush1.msra.mxu0 %v3743
        %3773 = vmatprep.subr.mxu0 0.0
        %3774 = vmatpush1.msra.mxu0 %v3744
        %3775 = vmatprep.subr.mxu0 0.0
        %3776 = vmatpush1.msra.mxu0 %v3745
        %3777 = vmatprep.subr.mxu0 0.0
        %3778 = vmatpush1.msra.mxu0 %v3746
        %3779 = vmatprep.subr.mxu0 0.0
        %3780 = vmatpush1.msra.mxu0 0.0
        %3781 = vmatprep.subr.mxu0 0.0
        %3782 = vmatpush1.msra.mxu0 0.0
        %3783 = vmatprep.subr.mxu0 0.0
        %3784 = vmatpush1.msra.mxu0 0.0
        %3785 = vmatprep.subr.mxu0 0.0
        %3786 = vmatpush1.msra.mxu0 0.0
        %3787 = vmatprep.subr.mxu0 0.0
        %3788 = vmatpush1.msra.mxu0 0.0
        %3789 = vmatprep.subr.mxu0 0.0
        %3790 = vmatpush1.msra.mxu0 0.0
        %3791 = vmatprep.subr.mxu0 0.0
        %3792 = vmatpush1.msra.mxu0 0.0
        %3793 = vmatprep.subr.mxu0 0.0
        %3794 = vmatpush1.msra.mxu0 0.0
        %3795 = vmatprep.subr.mxu0 0.0
        %3796 = vmatpush1.msra.mxu0 0.0
        %3797 = vmatprep.subr.mxu0 0.0
        %3798 = vmatpush1.msra.mxu0 0.0
        %3799 = vmatprep.subr.mxu0 0.0
        %3800 = vmatpush1.msra.mxu0 0.0
        %3801 = vmatprep.subr.mxu0 0.0
        %3802 = vmatpush1.msra.mxu0 0.0
        %3803 = vmatprep.subr.mxu0 0.0
        %3804 = vmatpush1.msra.mxu0 0.0
        %3805 = vmatprep.subr.mxu0 0.0
        %3806 = vmatpush1.msra.mxu0 0.0
        %3807 = vmatprep.subr.mxu0 0.0
        %3808 = vmatpush1.msra.mxu0 0.0
        %3809 = vmatprep.subr.mxu0 0.0
        %3810 = vmatpush1.msra.mxu0 0.0
        %3811 = vmatprep.mubr.f32.mxu0 0.0
        %3812 = vmatmul.mubr.f32.gmra.mrb[0].mxu0 %v3694
        %v3813 = vpop.f32.mrb[0].mxu0
        %v3814 = vadd.f32 0.0, %v3813
        %v3815 = vpop.f32.mrb[0].mxu0
        %3816 = vmatprep.mubr.f32.mxu0 0.0
        %3817 = vmatmul.mubr.f32.gmra.mrb[0].mxu0 %v3695
        %v3818 = vpop.f32.mrb[0].mxu0
        %v3819 = vadd.f32 0.0, %v3818
        %v3820 = vpop.f32.mrb[0].mxu0
        %3821 = vmatprep.mubr.f32.mxu0 0.0
        %3822 = vmatmul.mubr.f32.gmra.mrb[0].mxu0 %v3696
        %v3823 = vpop.f32.mrb[0].mxu0
        %v3824 = vadd.f32 0.0, %v3823
        %v3825 = vpop.f32.mrb[0].mxu0
        %3826 = vmatprep.mubr.f32.mxu0 0.0
        %3827 = vmatmul.mubr.f32.gmra.mrb[0].mxu0 %v3697
        %v3828 = vpop.f32.mrb[0].mxu0
        %v3829 = vadd.f32 0.0, %v3828
        %v3830 = vpop.f32.mrb[0].mxu0
        %3831 = vmatprep.mubr.f32.mxu0 0.0
        %3832 = vmatmul.mubr.f32.gmra.mrb[0].mxu0 %v3698
        %v3833 = vpop.f32.mrb[0].mxu0
        %v3834 = vadd.f32 0.0, %v3833
        %v3835 = vpop.f32.mrb[0].mxu0
        %3836 = vmatprep.mubr.f32.mxu0 0.0
        %3837 = vmatmul.mubr.f32.gmra.mrb[0].mxu0 %v3699
        %v3838 = vpop.f32.mrb[0].mxu0
        %v3839 = vadd.f32 0.0, %v3838
        %v3840 = vpop.f32.mrb[0].mxu0
        %3841 = vmatprep.mubr.f32.mxu0 0.0
        %3842 = vmatmul.mubr.f32.gmra.mrb[0].mxu0 %v3700
        %v3843 = vpop.f32.mrb[0].mxu0
        %v3844 = vadd.f32 0.0, %v3843
        %v3845 = vpop.f32.mrb[0].mxu0
        %3846 = vmatprep.mubr.f32.mxu0 0.0
        %3847 = vmatmul.mubr.f32.gmra.mrb[0].mxu0 %v3701
        %v3848 = vpop.f32.mrb[0].mxu0
        %v3849 = vadd.f32 0.0, %v3848
        %v3850 = vpop.f32.mrb[0].mxu0
        %3851 = vmatprep.mubr.f32.mxu0 0.0
        %3852 = vmatmul.mubr.f32.gmra.mrb[0].mxu0 %v3702
        %v3853 = vpop.f32.mrb[0].mxu0
        %v3854 = vadd.f32 0.0, %v3853
        %v3855 = vpop.f32.mrb[0].mxu0
        %3856 = vmatprep.mubr.f32.mxu0 0.0
        %3857 = vmatmul.mubr.f32.gmra.mrb[0].mxu0 %v3703
        %v3858 = vpop.f32.mrb[0].mxu0
        %v3859 = vadd.f32 0.0, %v3858
        %v3860 = vpop.f32.mrb[0].mxu0
        %3861 = vmatprep.mubr.f32.mxu0 0.0
        %3862 = vmatmul.mubr.f32.gmra.mrb[0].mxu0 %v3704
        %v3863 = vpop.f32.mrb[0].mxu0
        %v3864 = vadd.f32 0.0, %v3863
        %v3865 = vpop.f32.mrb[0].mxu0
        %3866 = vmatprep.mubr.f32.mxu0 0.0
        %3867 = vmatmul.mubr.f32.gmra.mrb[0].mxu0 %v3705
        %v3868 = vpop.f32.mrb[0].mxu0
        %v3869 = vadd.f32 0.0, %v3868
        %v3870 = vpop.f32.mrb[0].mxu0
        %3871 = vmatprep.mubr.f32.mxu0 0.0
        %3872 = vmatmul.mubr.f32.gmra.mrb[0].mxu0 %v3706
        %v3873 = vpop.f32.mrb[0].mxu0
        %v3874 = vadd.f32 0.0, %v3873
        %v3875 = vpop.f32.mrb[0].mxu0
        %3876 = vmatprep.mubr.f32.mxu0 0.0
        %3877 = vmatmul.mubr.f32.gmra.mrb[0].mxu0 %v3707
        %v3878 = vpop.f32.mrb[0].mxu0
        %v3879 = vadd.f32 0.0, %v3878
        %v3880 = vpop.f32.mrb[0].mxu0
        %3881 = vmatprep.mubr.f32.mxu0 0.0
        %3882 = vmatmul.mubr.f32.gmra.mrb[0].mxu0 %v3708
        %v3883 = vpop.f32.mrb[0].mxu0
        %v3884 = vadd.f32 0.0, %v3883
        %v3885 = vpop.f32.mrb[0].mxu0
        %3886 = vmatprep.mubr.f32.mxu0 0.0
        %3887 = vmatmul.mubr.f32.gmra.mrb[0].mxu0 %v3709
        %v3888 = vpop.f32.mrb[0].mxu0
        %v3889 = vadd.f32 0.0, %v3888
        %v3890 = vpop.f32.mrb[0].mxu0
        %3891 = vmatprep.mubr.f32.mxu0 0.0
        %3892 = vmatmul.mubr.f32.gmra.mrb[0].mxu0 %v3710
        %v3893 = vpop.f32.mrb[0].mxu0
        %v3894 = vadd.f32 0.0, %v3893
        %v3895 = vpop.f32.mrb[0].mxu0
        %3896 = vmatprep.mubr.f32.mxu0 0.0
        %3897 = vmatmul.mubr.f32.gmra.mrb[0].mxu0 %v3711
        %v3898 = vpop.f32.mrb[0].mxu0
        %v3899 = vadd.f32 0.0, %v3898
        %v3900 = vpop.f32.mrb[0].mxu0
        %3901 = vmatprep.mubr.f32.mxu0 0.0
        %3902 = vmatmul.mubr.f32.gmra.mrb[0].mxu0 %v3712
        %v3903 = vpop.f32.mrb[0].mxu0
        %v3904 = vadd.f32 0.0, %v3903
        %v3905 = vpop.f32.mrb[0].mxu0
        %3906 = vmatprep.mubr.f32.mxu0 0.0
        %3907 = vmatmul.mubr.f32.gmra.mrb[0].mxu0 %v3713
        %v3908 = vpop.f32.mrb[0].mxu0
        %v3909 = vadd.f32 0.0, %v3908
        %v3910 = vpop.f32.mrb[0].mxu0
        %3911 = vmatprep.mubr.f32.mxu0 0.0
        %3912 = vmatmul.mubr.f32.gmra.mrb[0].mxu0 %v3714
        %v3913 = vpop.f32.mrb[0].mxu0
        %v3914 = vadd.f32 0.0, %v3913
        %v3915 = vpop.f32.mrb[0].mxu0
        %3916 = vmatprep.mubr.f32.mxu0 0.0
        %3917 = vmatmul.mubr.f32.gmra.mrb[0].mxu0 %v3715
        %v3918 = vpop.f32.mrb[0].mxu0
        %v3919 = vadd.f32 0.0, %v3918
        %v3920 = vpop.f32.mrb[0].mxu0
        %3921 = vmatprep.mubr.f32.mxu0 0.0
        %3922 = vmatmul.mubr.f32.gmra.mrb[0].mxu0 %v3716
        %v3923 = vpop.f32.mrb[0].mxu0
        %v3924 = vadd.f32 0.0, %v3923
        %v3925 = vpop.f32.mrb[0].mxu0
        %3926 = vmatprep.mubr.f32.mxu0 0.0
        %3927 = vmatmul.mubr.f32.gmra.mrb[0].mxu0 %v3717
        %v3928 = vpop.f32.mrb[0].mxu0
        %v3929 = vadd.f32 0.0, %v3928
        %v3930 = vpop.f32.mrb[0].mxu0
        %3931 = vmatprep.mubr.f32.mxu0 0.0
        %3932 = vmatmul.mubr.f32.gmra.mrb[0].mxu0 %v3718
        %v3933 = vpop.f32.mrb[0].mxu0
        %v3934 = vadd.f32 0.0, %v3933
        %v3935 = vpop.f32.mrb[0].mxu0
        %3936 = vmatprep.mubr.f32.mxu0 0.0
        %3937 = vmatmul.mubr.f32.gmra.mrb[0].mxu0 %v3719
        %v3938 = vpop.f32.mrb[0].mxu0
        %v3939 = vadd.f32 0.0, %v3938
        %v3940 = vpop.f32.mrb[0].mxu0
        %3941 = vmatprep.mubr.f32.mxu0 0.0
        %3942 = vmatmul.mubr.f32.gmra.mrb[0].mxu0 %v3720
        %v3943 = vpop.f32.mrb[0].mxu0
        %v3944 = vadd.f32 0.0, %v3943
        %v3945 = vpop.f32.mrb[0].mxu0
        %3946 = vmatprep.mubr.f32.mxu0 0.0
        %3947 = vmatmul.mubr.f32.gmra.mrb[0].mxu0 %v3721
        %v3948 = vpop.f32.mrb[0].mxu0
        %v3949 = vadd.f32 0.0, %v3948
        %v3950 = vpop.f32.mrb[0].mxu0
        %3951 = vmatprep.mubr.f32.mxu0 0.0
        %3952 = vmatmul.mubr.f32.gmra.mrb[0].mxu0 %v3722
        %v3953 = vpop.f32.mrb[0].mxu0
        %v3954 = vadd.f32 0.0, %v3953
        %v3955 = vpop.f32.mrb[0].mxu0
        %3956 = vmatprep.mubr.f32.mxu0 0.0
        %3957 = vmatmul.mubr.f32.gmra.mrb[0].mxu0 %v3723
        %v3958 = vpop.f32.mrb[0].mxu0
        %v3959 = vadd.f32 0.0, %v3958
        %v3960 = vpop.f32.mrb[0].mxu0
        %3961 = vmatprep.mubr.f32.mxu0 0.0
        %3962 = vmatmul.mubr.f32.gmra.mrb[0].mxu0 %v3724
        %v3963 = vpop.f32.mrb[0].mxu0
        %v3964 = vadd.f32 0.0, %v3963
        %v3965 = vpop.f32.mrb[0].mxu0
        %3966 = vmatprep.mubr.f32.mxu0 0.0
        %3967 = vmatmul.mubr.f32.gmra.mrb[0].mxu0 %v3725
        %v3968 = vpop.f32.mrb[0].mxu0
        %v3969 = vadd.f32 0.0, %v3968
        %v3970 = vpop.f32.mrb[0].mxu0
        %3971 = vmatprep.mubr.f32.mxu0 0.0
        %3972 = vmatmul.mubr.f32.gmra.mrb[0].mxu0 %v3726
        %v3973 = vpop.f32.mrb[0].mxu0
        %v3974 = vadd.f32 0.0, %v3973
        %v3975 = vpop.f32.mrb[0].mxu0
        %3976 = vmatprep.mubr.f32.mxu0 0.0
        %3977 = vmatmul.mubr.f32.gmra.mrb[0].mxu0 %v3727
        %v3978 = vpop.f32.mrb[0].mxu0
        %v3979 = vadd.f32 0.0, %v3978
        %v3980 = vpop.f32.mrb[0].mxu0
        %3981 = vmatprep.mubr.f32.mxu0 0.0
        %3982 = vmatmul.mubr.f32.gmra.mrb[0].mxu0 %v3728
        %v3983 = vpop.f32.mrb[0].mxu0
        %v3984 = vadd.f32 0.0, %v3983
        %v3985 = vpop.f32.mrb[0].mxu0
        %3986 = vmatprep.mubr.f32.mxu0 0.0
        %3987 = vmatmul.mubr.f32.gmra.mrb[0].mxu0 %v3729
        %v3988 = vpop.f32.mrb[0].mxu0
        %v3989 = vadd.f32 0.0, %v3988
        %v3990 = vpop.f32.mrb[0].mxu0
        %3991 = vdwg.mxu0
        %v3992 = vld [vmem:[#allocation3] sm:$0xff]
        %v3993 = vld [vmem:[#allocation3 + $0x8] sm:$0xff]
        %v3994 = vld [vmem:[#allocation3 + $0x10] sm:$0xff]
        %v3995 = vld [vmem:[#allocation3 + $0x18] sm:$0xff]
        %v3996 = vld [vmem:[#allocation3 + $0x20] sm:$0xff]
        %v3997 = vld [vmem:[#allocation3 + $0x28] sm:$0xff]
        %v3998 = vld [vmem:[#allocation3 + $0x30] sm:$0xff]
        %v3999 = vld [vmem:[#allocation3 + $0x38] sm:$0xff]
        %v4000 = vld [vmem:[#allocation3 + $0x40] sm:$0xff]
        %v4001 = vld [vmem:[#allocation3 + $0x48] sm:$0xff]
        %v4002 = vld [vmem:[#allocation3 + $0x50] sm:$0xff]
        %v4003 = vld [vmem:[#allocation3 + $0x58] sm:$0xff]
        %v4004 = vld [vmem:[#allocation3 + $0x60] sm:$0xff]
        %v4005 = vld [vmem:[#allocation3 + $0x68] sm:$0xff]
        %v4006 = vld [vmem:[#allocation3 + $0x70] sm:$0xff]
        %v4007 = vld [vmem:[#allocation3 + $0x78] sm:$0xff]
        %v4008 = vld [vmem:[#allocation3 + $0x80] sm:$0xff]
        %v4009 = vld [vmem:[#allocation3 + $0x88] sm:$0xff]
        %v4010 = vld [vmem:[#allocation3 + $0x90] sm:$0xff]
        %v4011 = vld [vmem:[#allocation3 + $0x98] sm:$0xff]
        %v4012 = vld [vmem:[#allocation3 + $0xa0] sm:$0xff]
        %v4013 = vld [vmem:[#allocation3 + $0xa8] sm:$0xff]
        %v4014 = vld [vmem:[#allocation3 + $0xb0] sm:$0xff]
        %v4015 = vld [vmem:[#allocation3 + $0xb8] sm:$0xff]
        %v4016 = vld [vmem:[#allocation3 + $0xc0] sm:$0xff]
        %v4017 = vld [vmem:[#allocation3 + $0xc8] sm:$0xff]
        %v4018 = vld [vmem:[#allocation3 + $0xd0] sm:$0xff]
        %v4019 = vld [vmem:[#allocation3 + $0xd8] sm:$0xff]
        %v4020 = vld [vmem:[#allocation3 + $0xe0] sm:$0xff]
        %v4021 = vld [vmem:[#allocation3 + $0xe8] sm:$0xff]
        %v4022 = vld [vmem:[#allocation3 + $0xf0] sm:$0xff]
        %v4023 = vld [vmem:[#allocation3 + $0xf8] sm:$0xff]
        %v4024 = vld [vmem:[#allocation3 + $0x100] sm:$0xff]
        %v4025 = vld [vmem:[#allocation3 + $0x108] sm:$0xff]
        %v4026 = vld [vmem:[#allocation3 + $0x110] sm:$0xff]
        %v4027 = vld [vmem:[#allocation3 + $0x118] sm:$0xff]
        %v4028 = vadd.f32 %v3992, %v3814
        %v4029 = vadd.f32 %v3993, %v3819
        %v4030 = vadd.f32 %v3994, %v3824
        %v4031 = vadd.f32 %v3995, %v3829
        %v4032 = vadd.f32 %v3996, %v3834
        %v4033 = vadd.f32 %v3997, %v3839
        %v4034 = vadd.f32 %v3998, %v3844
        %v4035 = vadd.f32 %v3999, %v3849
        %v4036 = vadd.f32 %v4000, %v3854
        %v4037 = vadd.f32 %v4001, %v3859
        %v4038 = vadd.f32 %v4002, %v3864
        %v4039 = vadd.f32 %v4003, %v3869
        %v4040 = vadd.f32 %v4004, %v3874
        %v4041 = vadd.f32 %v4005, %v3879
        %v4042 = vadd.f32 %v4006, %v3884
        %v4043 = vadd.f32 %v4007, %v3889
        %v4044 = vadd.f32 %v4008, %v3894
        %v4045 = vadd.f32 %v4009, %v3899
        %v4046 = vadd.f32 %v4010, %v3904
        %v4047 = vadd.f32 %v4011, %v3909
        %v4048 = vadd.f32 %v4012, %v3914
        %v4049 = vadd.f32 %v4013, %v3919
        %v4050 = vadd.f32 %v4014, %v3924
        %v4051 = vadd.f32 %v4015, %v3929
        %v4052 = vadd.f32 %v4016, %v3934
        %v4053 = vadd.f32 %v4017, %v3939
        %v4054 = vadd.f32 %v4018, %v3944
        %v4055 = vadd.f32 %v4019, %v3949
        %v4056 = vadd.f32 %v4020, %v3954
        %v4057 = vadd.f32 %v4021, %v3959
        %v4058 = vadd.f32 %v4022, %v3964
        %v4059 = vadd.f32 %v4023, %v3969
        %v4060 = vadd.f32 %v4024, %v3974
        %v4061 = vadd.f32 %v4025, %v3979
        %v4062 = vadd.f32 %v4026, %v3984
        %v4063 = vadd.f32 %v4027, %v3989
        %4064 = vst [vmem:[#allocation3] sm:$0xff] %v4028
        %4065 = vst [vmem:[#allocation3 + $0x8] sm:$0xff] %v4029
        %4066 = vst [vmem:[#allocation3 + $0x10] sm:$0xff] %v4030
        %4067 = vst [vmem:[#allocation3 + $0x18] sm:$0xff] %v4031
        %4068 = vst [vmem:[#allocation3 + $0x20] sm:$0xff] %v4032
        %4069 = vst [vmem:[#allocation3 + $0x28] sm:$0xff] %v4033
        %4070 = vst [vmem:[#allocation3 + $0x30] sm:$0xff] %v4034
        %4071 = vst [vmem:[#allocation3 + $0x38] sm:$0xff] %v4035
        %4072 = vst [vmem:[#allocation3 + $0x40] sm:$0xff] %v4036
        %4073 = vst [vmem:[#allocation3 + $0x48] sm:$0xff] %v4037
        %4074 = vst [vmem:[#allocation3 + $0x50] sm:$0xff] %v4038
        %4075 = vst [vmem:[#allocation3 + $0x58] sm:$0xff] %v4039
        %4076 = vst [vmem:[#allocation3 + $0x60] sm:$0xff] %v4040
        %4077 = vst [vmem:[#allocation3 + $0x68] sm:$0xff] %v4041
        %4078 = vst [vmem:[#allocation3 + $0x70] sm:$0xff] %v4042
        %4079 = vst [vmem:[#allocation3 + $0x78] sm:$0xff] %v4043
        %4080 = vst [vmem:[#allocation3 + $0x80] sm:$0xff] %v4044
        %4081 = vst [vmem:[#allocation3 + $0x88] sm:$0xff] %v4045
        %4082 = vst [vmem:[#allocation3 + $0x90] sm:$0xff] %v4046
        %4083 = vst [vmem:[#allocation3 + $0x98] sm:$0xff] %v4047
        %4084 = vst [vmem:[#allocation3 + $0xa0] sm:$0xff] %v4048
        %4085 = vst [vmem:[#allocation3 + $0xa8] sm:$0xff] %v4049
        %4086 = vst [vmem:[#allocation3 + $0xb0] sm:$0xff] %v4050
        %4087 = vst [vmem:[#allocation3 + $0xb8] sm:$0xff] %v4051
        %4088 = vst [vmem:[#allocation3 + $0xc0] sm:$0xff] %v4052
        %4089 = vst [vmem:[#allocation3 + $0xc8] sm:$0xff] %v4053
        %4090 = vst [vmem:[#allocation3 + $0xd0] sm:$0xff] %v4054
        %4091 = vst [vmem:[#allocation3 + $0xd8] sm:$0xff] %v4055
        %4092 = vst [vmem:[#allocation3 + $0xe0] sm:$0xff] %v4056
        %4093 = vst [vmem:[#allocation3 + $0xe8] sm:$0xff] %v4057
        %4094 = vst [vmem:[#allocation3 + $0xf0] sm:$0xff] %v4058
        %4095 = vst [vmem:[#allocation3 + $0xf8] sm:$0xff] %v4059
        %4096 = vst [vmem:[#allocation3 + $0x100] sm:$0xff] %v4060
        %4097 = vst [vmem:[#allocation3 + $0x108] sm:$0xff] %v4061
        %4098 = vst [vmem:[#allocation3 + $0x110] sm:$0xff] %v4062
        %4099 = vst [vmem:[#allocation3 + $0x118] sm:$0xff] %v4063
        %v4100 = vld [vmem:[#allocation2 + $0x26] sm:$0xff]
        %v4101 = vld [vmem:[#allocation2 + $0x2e] sm:$0xff]
        %v4102 = vld [vmem:[#allocation2 + $0x36] sm:$0xff]
        %v4103 = vld [vmem:[#allocation2 + $0x3e] sm:$0xff]
        %v4104 = vld [vmem:[#allocation2 + $0x46] sm:$0xff]
        %v4105 = vld [vmem:[#allocation2 + $0x4e] sm:$0xff]
        %v4106 = vld [vmem:[#allocation2 + $0x56] sm:$0xff]
        %v4107 = vld [vmem:[#allocation2 + $0x5e] sm:$0xff]
        %v4108 = vld [vmem:[#allocation2 + $0x66] sm:$0xff]
        %v4109 = vld [vmem:[#allocation2 + $0x6e] sm:$0xff]
        %v4110 = vld [vmem:[#allocation2 + $0x76] sm:$0xff]
        %v4111 = vld [vmem:[#allocation2 + $0x7e] sm:$0xff]
        %v4112 = vld [vmem:[#allocation2 + $0x86] sm:$0xff]
        %v4113 = vld [vmem:[#allocation2 + $0x8e] sm:$0xff]
        %v4114 = vld [vmem:[#allocation2 + $0x96] sm:$0xff]
        %v4115 = vld [vmem:[#allocation2 + $0x9e] sm:$0xff]
        %v4116 = vld [vmem:[#allocation2 + $0xa6] sm:$0xff]
        %v4117 = vld [vmem:[#allocation2 + $0xae] sm:$0xff]
        %v4118 = vld [vmem:[#allocation2 + $0xb6] sm:$0xff]
        %v4119 = vld [vmem:[#allocation2 + $0xbe] sm:$0xff]
        %v4120 = vld [vmem:[#allocation2 + $0xc6] sm:$0xff]
        %v4121 = vld [vmem:[#allocation2 + $0xce] sm:$0xff]
        %v4122 = vld [vmem:[#allocation2 + $0xd6] sm:$0xff]
        %v4123 = vld [vmem:[#allocation2 + $0xde] sm:$0xff]
        %v4124 = vld [vmem:[#allocation2 + $0xe6] sm:$0xff]
        %v4125 = vld [vmem:[#allocation2 + $0xee] sm:$0xff]
        %v4126 = vld [vmem:[#allocation2 + $0xf6] sm:$0xff]
        %v4127 = vld [vmem:[#allocation2 + $0xfe] sm:$0xff]
        %v4128 = vld [vmem:[#allocation2 + $0x106] sm:$0xff]
        %v4129 = vld [vmem:[#allocation2 + $0x10e] sm:$0xff]
        %v4130 = vld [vmem:[#allocation2 + $0x116] sm:$0xff]
        %v4131 = vld [vmem:[#allocation2 + $0x11e] sm:$0xff]
        %v4132 = vld [vmem:[#allocation2 + $0x126] sm:$0xff]
        %v4133 = vld [vmem:[#allocation2 + $0x12e] sm:$0xff]
        %v4134 = vld [vmem:[#allocation2 + $0x136] sm:$0xff]
        %v4135 = vld [vmem:[#allocation2 + $0x13e] sm:$0xff]
        %s4136 = scalar_lea.vmem [#allocation13], 1024
        %v4137 = vld [vmem:[%s4136] sm:$0xff]
        %v4138 = vld [vmem:[%s4136 + $0x8] sm:$0xff]
        %v4139 = vld [vmem:[%s4136 + $0x10] sm:$0xff]
        %v4140 = vld [vmem:[%s4136 + $0x18] sm:$0xff]
        %v4141 = vld [vmem:[%s4136 + $0x20] sm:$0xff]
        %v4142 = vld [vmem:[%s4136 + $0x28] sm:$0xff]
        %v4143 = vld [vmem:[%s4136 + $0x30] sm:$0xff]
        %v4144 = vld [vmem:[%s4136 + $0x38] sm:$0xff]
        %v4145 = vld [vmem:[%s4136 + $0x40] sm:$0xff]
        %v4146 = vld [vmem:[%s4136 + $0x48] sm:$0xff]
        %v4147 = vld [vmem:[%s4136 + $0x50] sm:$0xff]
        %v4148 = vld [vmem:[%s4136 + $0x58] sm:$0xff]
        %v4149 = vld [vmem:[%s4136 + $0x60] sm:$0xff]
        %v4150 = vld [vmem:[%s4136 + $0x68] sm:$0xff]
        %v4151 = vld [vmem:[%s4136 + $0x70] sm:$0xff]
        %v4152 = vld [vmem:[%s4136 + $0x78] sm:$0xff]
        %4153 = vmatprep.subr.mxu0 0.0
        %4154 = vmatpush1.msra.mxu0 %v4137
        %4155 = vmatprep.subr.mxu0 0.0
        %4156 = vmatpush1.msra.mxu0 %v4138
        %4157 = vmatprep.subr.mxu0 0.0
        %4158 = vmatpush1.msra.mxu0 %v4139
        %4159 = vmatprep.subr.mxu0 0.0
        %4160 = vmatpush1.msra.mxu0 %v4140
        %4161 = vmatprep.subr.mxu0 0.0
        %4162 = vmatpush1.msra.mxu0 %v4141
        %4163 = vmatprep.subr.mxu0 0.0
        %4164 = vmatpush1.msra.mxu0 %v4142
        %4165 = vmatprep.subr.mxu0 0.0
        %4166 = vmatpush1.msra.mxu0 %v4143
        %4167 = vmatprep.subr.mxu0 0.0
        %4168 = vmatpush1.msra.mxu0 %v4144
        %4169 = vmatprep.subr.mxu0 0.0
        %4170 = vmatpush1.msra.mxu0 %v4145
        %4171 = vmatprep.subr.mxu0 0.0
        %4172 = vmatpush1.msra.mxu0 %v4146
        %4173 = vmatprep.subr.mxu0 0.0
        %4174 = vmatpush1.msra.mxu0 %v4147
        %4175 = vmatprep.subr.mxu0 0.0
        %4176 = vmatpush1.msra.mxu0 %v4148
        %4177 = vmatprep.subr.mxu0 0.0
        %4178 = vmatpush1.msra.mxu0 %v4149
        %4179 = vmatprep.subr.mxu0 0.0
        %4180 = vmatpush1.msra.mxu0 %v4150
        %4181 = vmatprep.subr.mxu0 0.0
        %4182 = vmatpush1.msra.mxu0 %v4151
        %4183 = vmatprep.subr.mxu0 0.0
        %4184 = vmatpush1.msra.mxu0 %v4152
        %4185 = vmatprep.subr.mxu0 0.0
        %4186 = vmatpush1.msra.mxu0 0.0
        %4187 = vmatprep.subr.mxu0 0.0
        %4188 = vmatpush1.msra.mxu0 0.0
        %4189 = vmatprep.subr.mxu0 0.0
        %4190 = vmatpush1.msra.mxu0 0.0
        %4191 = vmatprep.subr.mxu0 0.0
        %4192 = vmatpush1.msra.mxu0 0.0
        %4193 = vmatprep.subr.mxu0 0.0
        %4194 = vmatpush1.msra.mxu0 0.0
        %4195 = vmatprep.subr.mxu0 0.0
        %4196 = vmatpush1.msra.mxu0 0.0
        %4197 = vmatprep.subr.mxu0 0.0
        %4198 = vmatpush1.msra.mxu0 0.0
        %4199 = vmatprep.subr.mxu0 0.0
        %4200 = vmatpush1.msra.mxu0 0.0
        %4201 = vmatprep.subr.mxu0 0.0
        %4202 = vmatpush1.msra.mxu0 0.0
        %4203 = vmatprep.subr.mxu0 0.0
        %4204 = vmatpush1.msra.mxu0 0.0
        %4205 = vmatprep.subr.mxu0 0.0
        %4206 = vmatpush1.msra.mxu0 0.0
        %4207 = vmatprep.subr.mxu0 0.0
        %4208 = vmatpush1.msra.mxu0 0.0
        %4209 = vmatprep.subr.mxu0 0.0
        %4210 = vmatpush1.msra.mxu0 0.0
        %4211 = vmatprep.subr.mxu0 0.0
        %4212 = vmatpush1.msra.mxu0 0.0
        %4213 = vmatprep.subr.mxu0 0.0
        %4214 = vmatpush1.msra.mxu0 0.0
        %4215 = vmatprep.subr.mxu0 0.0
        %4216 = vmatpush1.msra.mxu0 0.0
        %4217 = vmatprep.mubr.f32.mxu0 0.0
        %4218 = vmatmul.mubr.f32.gmra.mrb[0].mxu0 %v4100
        %v4219 = vpop.f32.mrb[0].mxu0
        %v4220 = vadd.f32 0.0, %v4219
        %v4221 = vpop.f32.mrb[0].mxu0
        %4222 = vmatprep.mubr.f32.mxu0 0.0
        %4223 = vmatmul.mubr.f32.gmra.mrb[0].mxu0 %v4101
        %v4224 = vpop.f32.mrb[0].mxu0
        %v4225 = vadd.f32 0.0, %v4224
        %v4226 = vpop.f32.mrb[0].mxu0
        %4227 = vmatprep.mubr.f32.mxu0 0.0
        %4228 = vmatmul.mubr.f32.gmra.mrb[0].mxu0 %v4102
        %v4229 = vpop.f32.mrb[0].mxu0
        %v4230 = vadd.f32 0.0, %v4229
        %v4231 = vpop.f32.mrb[0].mxu0
        %4232 = vmatprep.mubr.f32.mxu0 0.0
        %4233 = vmatmul.mubr.f32.gmra.mrb[0].mxu0 %v4103
        %v4234 = vpop.f32.mrb[0].mxu0
        %v4235 = vadd.f32 0.0, %v4234
        %v4236 = vpop.f32.mrb[0].mxu0
        %4237 = vmatprep.mubr.f32.mxu0 0.0
        %4238 = vmatmul.mubr.f32.gmra.mrb[0].mxu0 %v4104
        %v4239 = vpop.f32.mrb[0].mxu0
        %v4240 = vadd.f32 0.0, %v4239
        %v4241 = vpop.f32.mrb[0].mxu0
        %4242 = vmatprep.mubr.f32.mxu0 0.0
        %4243 = vmatmul.mubr.f32.gmra.mrb[0].mxu0 %v4105
        %v4244 = vpop.f32.mrb[0].mxu0
        %v4245 = vadd.f32 0.0, %v4244
        %v4246 = vpop.f32.mrb[0].mxu0
        %4247 = vmatprep.mubr.f32.mxu0 0.0
        %4248 = vmatmul.mubr.f32.gmra.mrb[0].mxu0 %v4106
        %v4249 = vpop.f32.mrb[0].mxu0
        %v4250 = vadd.f32 0.0, %v4249
        %v4251 = vpop.f32.mrb[0].mxu0
        %4252 = vmatprep.mubr.f32.mxu0 0.0
        %4253 = vmatmul.mubr.f32.gmra.mrb[0].mxu0 %v4107
        %v4254 = vpop.f32.mrb[0].mxu0
        %v4255 = vadd.f32 0.0, %v4254
        %v4256 = vpop.f32.mrb[0].mxu0
        %4257 = vmatprep.mubr.f32.mxu0 0.0
        %4258 = vmatmul.mubr.f32.gmra.mrb[0].mxu0 %v4108
        %v4259 = vpop.f32.mrb[0].mxu0
        %v4260 = vadd.f32 0.0, %v4259
        %v4261 = vpop.f32.mrb[0].mxu0
        %4262 = vmatprep.mubr.f32.mxu0 0.0
        %4263 = vmatmul.mubr.f32.gmra.mrb[0].mxu0 %v4109
        %v4264 = vpop.f32.mrb[0].mxu0
        %v4265 = vadd.f32 0.0, %v4264
        %v4266 = vpop.f32.mrb[0].mxu0
        %4267 = vmatprep.mubr.f32.mxu0 0.0
        %4268 = vmatmul.mubr.f32.gmra.mrb[0].mxu0 %v4110
        %v4269 = vpop.f32.mrb[0].mxu0
        %v4270 = vadd.f32 0.0, %v4269
        %v4271 = vpop.f32.mrb[0].mxu0
        %4272 = vmatprep.mubr.f32.mxu0 0.0
        %4273 = vmatmul.mubr.f32.gmra.mrb[0].mxu0 %v4111
        %v4274 = vpop.f32.mrb[0].mxu0
        %v4275 = vadd.f32 0.0, %v4274
        %v4276 = vpop.f32.mrb[0].mxu0
        %4277 = vmatprep.mubr.f32.mxu0 0.0
        %4278 = vmatmul.mubr.f32.gmra.mrb[0].mxu0 %v4112
        %v4279 = vpop.f32.mrb[0].mxu0
        %v4280 = vadd.f32 0.0, %v4279
        %v4281 = vpop.f32.mrb[0].mxu0
        %4282 = vmatprep.mubr.f32.mxu0 0.0
        %4283 = vmatmul.mubr.f32.gmra.mrb[0].mxu0 %v4113
        %v4284 = vpop.f32.mrb[0].mxu0
        %v4285 = vadd.f32 0.0, %v4284
        %v4286 = vpop.f32.mrb[0].mxu0
        %4287 = vmatprep.mubr.f32.mxu0 0.0
        %4288 = vmatmul.mubr.f32.gmra.mrb[0].mxu0 %v4114
        %v4289 = vpop.f32.mrb[0].mxu0
        %v4290 = vadd.f32 0.0, %v4289
        %v4291 = vpop.f32.mrb[0].mxu0
        %4292 = vmatprep.mubr.f32.mxu0 0.0
        %4293 = vmatmul.mubr.f32.gmra.mrb[0].mxu0 %v4115
        %v4294 = vpop.f32.mrb[0].mxu0
        %v4295 = vadd.f32 0.0, %v4294
        %v4296 = vpop.f32.mrb[0].mxu0
        %4297 = vmatprep.mubr.f32.mxu0 0.0
        %4298 = vmatmul.mubr.f32.gmra.mrb[0].mxu0 %v4116
        %v4299 = vpop.f32.mrb[0].mxu0
        %v4300 = vadd.f32 0.0, %v4299
        %v4301 = vpop.f32.mrb[0].mxu0
        %4302 = vmatprep.mubr.f32.mxu0 0.0
        %4303 = vmatmul.mubr.f32.gmra.mrb[0].mxu0 %v4117
        %v4304 = vpop.f32.mrb[0].mxu0
        %v4305 = vadd.f32 0.0, %v4304
        %v4306 = vpop.f32.mrb[0].mxu0
        %4307 = vmatprep.mubr.f32.mxu0 0.0
        %4308 = vmatmul.mubr.f32.gmra.mrb[0].mxu0 %v4118
        %v4309 = vpop.f32.mrb[0].mxu0
        %v4310 = vadd.f32 0.0, %v4309
        %v4311 = vpop.f32.mrb[0].mxu0
        %4312 = vmatprep.mubr.f32.mxu0 0.0
        %4313 = vmatmul.mubr.f32.gmra.mrb[0].mxu0 %v4119
        %v4314 = vpop.f32.mrb[0].mxu0
        %v4315 = vadd.f32 0.0, %v4314
        %v4316 = vpop.f32.mrb[0].mxu0
        %4317 = vmatprep.mubr.f32.mxu0 0.0
        %4318 = vmatmul.mubr.f32.gmra.mrb[0].mxu0 %v4120
        %v4319 = vpop.f32.mrb[0].mxu0
        %v4320 = vadd.f32 0.0, %v4319
        %v4321 = vpop.f32.mrb[0].mxu0
        %4322 = vmatprep.mubr.f32.mxu0 0.0
        %4323 = vmatmul.mubr.f32.gmra.mrb[0].mxu0 %v4121
        %v4324 = vpop.f32.mrb[0].mxu0
        %v4325 = vadd.f32 0.0, %v4324
        %v4326 = vpop.f32.mrb[0].mxu0
        %4327 = vmatprep.mubr.f32.mxu0 0.0
        %4328 = vmatmul.mubr.f32.gmra.mrb[0].mxu0 %v4122
        %v4329 = vpop.f32.mrb[0].mxu0
        %v4330 = vadd.f32 0.0, %v4329
        %v4331 = vpop.f32.mrb[0].mxu0
        %4332 = vmatprep.mubr.f32.mxu0 0.0
        %4333 = vmatmul.mubr.f32.gmra.mrb[0].mxu0 %v4123
        %v4334 = vpop.f32.mrb[0].mxu0
        %v4335 = vadd.f32 0.0, %v4334
        %v4336 = vpop.f32.mrb[0].mxu0
        %4337 = vmatprep.mubr.f32.mxu0 0.0
        %4338 = vmatmul.mubr.f32.gmra.mrb[0].mxu0 %v4124
        %v4339 = vpop.f32.mrb[0].mxu0
        %v4340 = vadd.f32 0.0, %v4339
        %v4341 = vpop.f32.mrb[0].mxu0
        %4342 = vmatprep.mubr.f32.mxu0 0.0
        %4343 = vmatmul.mubr.f32.gmra.mrb[0].mxu0 %v4125
        %v4344 = vpop.f32.mrb[0].mxu0
        %v4345 = vadd.f32 0.0, %v4344
        %v4346 = vpop.f32.mrb[0].mxu0
        %4347 = vmatprep.mubr.f32.mxu0 0.0
        %4348 = vmatmul.mubr.f32.gmra.mrb[0].mxu0 %v4126
        %v4349 = vpop.f32.mrb[0].mxu0
        %v4350 = vadd.f32 0.0, %v4349
        %v4351 = vpop.f32.mrb[0].mxu0
        %4352 = vmatprep.mubr.f32.mxu0 0.0
        %4353 = vmatmul.mubr.f32.gmra.mrb[0].mxu0 %v4127
        %v4354 = vpop.f32.mrb[0].mxu0
        %v4355 = vadd.f32 0.0, %v4354
        %v4356 = vpop.f32.mrb[0].mxu0
        %4357 = vmatprep.mubr.f32.mxu0 0.0
        %4358 = vmatmul.mubr.f32.gmra.mrb[0].mxu0 %v4128
        %v4359 = vpop.f32.mrb[0].mxu0
        %v4360 = vadd.f32 0.0, %v4359
        %v4361 = vpop.f32.mrb[0].mxu0
        %4362 = vmatprep.mubr.f32.mxu0 0.0
        %4363 = vmatmul.mubr.f32.gmra.mrb[0].mxu0 %v4129
        %v4364 = vpop.f32.mrb[0].mxu0
        %v4365 = vadd.f32 0.0, %v4364
        %v4366 = vpop.f32.mrb[0].mxu0
        %4367 = vmatprep.mubr.f32.mxu0 0.0
        %4368 = vmatmul.mubr.f32.gmra.mrb[0].mxu0 %v4130
        %v4369 = vpop.f32.mrb[0].mxu0
        %v4370 = vadd.f32 0.0, %v4369
        %v4371 = vpop.f32.mrb[0].mxu0
        %4372 = vmatprep.mubr.f32.mxu0 0.0
        %4373 = vmatmul.mubr.f32.gmra.mrb[0].mxu0 %v4131
        %v4374 = vpop.f32.mrb[0].mxu0
        %v4375 = vadd.f32 0.0, %v4374
        %v4376 = vpop.f32.mrb[0].mxu0
        %4377 = vmatprep.mubr.f32.mxu0 0.0
        %4378 = vmatmul.mubr.f32.gmra.mrb[0].mxu0 %v4132
        %v4379 = vpop.f32.mrb[0].mxu0
        %v4380 = vadd.f32 0.0, %v4379
        %v4381 = vpop.f32.mrb[0].mxu0
        %4382 = vmatprep.mubr.f32.mxu0 0.0
        %4383 = vmatmul.mubr.f32.gmra.mrb[0].mxu0 %v4133
        %v4384 = vpop.f32.mrb[0].mxu0
        %v4385 = vadd.f32 0.0, %v4384
        %v4386 = vpop.f32.mrb[0].mxu0
        %4387 = vmatprep.mubr.f32.mxu0 0.0
        %4388 = vmatmul.mubr.f32.gmra.mrb[0].mxu0 %v4134
        %v4389 = vpop.f32.mrb[0].mxu0
        %v4390 = vadd.f32 0.0, %v4389
        %v4391 = vpop.f32.mrb[0].mxu0
        %4392 = vmatprep.mubr.f32.mxu0 0.0
        %4393 = vmatmul.mubr.f32.gmra.mrb[0].mxu0 %v4135
        %v4394 = vpop.f32.mrb[0].mxu0
        %v4395 = vadd.f32 0.0, %v4394
        %v4396 = vpop.f32.mrb[0].mxu0
        %4397 = vdwg.mxu0
        %v4398 = vld [vmem:[#allocation3] sm:$0xff]
        %v4399 = vld [vmem:[#allocation3 + $0x8] sm:$0xff]
        %v4400 = vld [vmem:[#allocation3 + $0x10] sm:$0xff]
        %v4401 = vld [vmem:[#allocation3 + $0x18] sm:$0xff]
        %v4402 = vld [vmem:[#allocation3 + $0x20] sm:$0xff]
        %v4403 = vld [vmem:[#allocation3 + $0x28] sm:$0xff]
        %v4404 = vld [vmem:[#allocation3 + $0x30] sm:$0xff]
        %v4405 = vld [vmem:[#allocation3 + $0x38] sm:$0xff]
        %v4406 = vld [vmem:[#allocation3 + $0x40] sm:$0xff]
        %v4407 = vld [vmem:[#allocation3 + $0x48] sm:$0xff]
        %v4408 = vld [vmem:[#allocation3 + $0x50] sm:$0xff]
        %v4409 = vld [vmem:[#allocation3 + $0x58] sm:$0xff]
        %v4410 = vld [vmem:[#allocation3 + $0x60] sm:$0xff]
        %v4411 = vld [vmem:[#allocation3 + $0x68] sm:$0xff]
        %v4412 = vld [vmem:[#allocation3 + $0x70] sm:$0xff]
        %v4413 = vld [vmem:[#allocation3 + $0x78] sm:$0xff]
        %v4414 = vld [vmem:[#allocation3 + $0x80] sm:$0xff]
        %v4415 = vld [vmem:[#allocation3 + $0x88] sm:$0xff]
        %v4416 = vld [vmem:[#allocation3 + $0x90] sm:$0xff]
        %v4417 = vld [vmem:[#allocation3 + $0x98] sm:$0xff]
        %v4418 = vld [vmem:[#allocation3 + $0xa0] sm:$0xff]
        %v4419 = vld [vmem:[#allocation3 + $0xa8] sm:$0xff]
        %v4420 = vld [vmem:[#allocation3 + $0xb0] sm:$0xff]
        %v4421 = vld [vmem:[#allocation3 + $0xb8] sm:$0xff]
        %v4422 = vld [vmem:[#allocation3 + $0xc0] sm:$0xff]
        %v4423 = vld [vmem:[#allocation3 + $0xc8] sm:$0xff]
        %v4424 = vld [vmem:[#allocation3 + $0xd0] sm:$0xff]
        %v4425 = vld [vmem:[#allocation3 + $0xd8] sm:$0xff]
        %v4426 = vld [vmem:[#allocation3 + $0xe0] sm:$0xff]
        %v4427 = vld [vmem:[#allocation3 + $0xe8] sm:$0xff]
        %v4428 = vld [vmem:[#allocation3 + $0xf0] sm:$0xff]
        %v4429 = vld [vmem:[#allocation3 + $0xf8] sm:$0xff]
        %v4430 = vld [vmem:[#allocation3 + $0x100] sm:$0xff]
        %v4431 = vld [vmem:[#allocation3 + $0x108] sm:$0xff]
        %v4432 = vld [vmem:[#allocation3 + $0x110] sm:$0xff]
        %v4433 = vld [vmem:[#allocation3 + $0x118] sm:$0xff]
        %v4434 = vadd.f32 %v4398, %v4220
        %v4435 = vadd.f32 %v4399, %v4225
        %v4436 = vadd.f32 %v4400, %v4230
        %v4437 = vadd.f32 %v4401, %v4235
        %v4438 = vadd.f32 %v4402, %v4240
        %v4439 = vadd.f32 %v4403, %v4245
        %v4440 = vadd.f32 %v4404, %v4250
        %v4441 = vadd.f32 %v4405, %v4255
        %v4442 = vadd.f32 %v4406, %v4260
        %v4443 = vadd.f32 %v4407, %v4265
        %v4444 = vadd.f32 %v4408, %v4270
        %v4445 = vadd.f32 %v4409, %v4275
        %v4446 = vadd.f32 %v4410, %v4280
        %v4447 = vadd.f32 %v4411, %v4285
        %v4448 = vadd.f32 %v4412, %v4290
        %v4449 = vadd.f32 %v4413, %v4295
        %v4450 = vadd.f32 %v4414, %v4300
        %v4451 = vadd.f32 %v4415, %v4305
        %v4452 = vadd.f32 %v4416, %v4310
        %v4453 = vadd.f32 %v4417, %v4315
        %v4454 = vadd.f32 %v4418, %v4320
        %v4455 = vadd.f32 %v4419, %v4325
        %v4456 = vadd.f32 %v4420, %v4330
        %v4457 = vadd.f32 %v4421, %v4335
        %v4458 = vadd.f32 %v4422, %v4340
        %v4459 = vadd.f32 %v4423, %v4345
        %v4460 = vadd.f32 %v4424, %v4350
        %v4461 = vadd.f32 %v4425, %v4355
        %v4462 = vadd.f32 %v4426, %v4360
        %v4463 = vadd.f32 %v4427, %v4365
        %v4464 = vadd.f32 %v4428, %v4370
        %v4465 = vadd.f32 %v4429, %v4375
        %v4466 = vadd.f32 %v4430, %v4380
        %v4467 = vadd.f32 %v4431, %v4385
        %v4468 = vadd.f32 %v4432, %v4390
        %v4469 = vadd.f32 %v4433, %v4395
        %4470 = vst [vmem:[#allocation3] sm:$0xff] %v4434
        %4471 = vst [vmem:[#allocation3 + $0x8] sm:$0xff] %v4435
        %4472 = vst [vmem:[#allocation3 + $0x10] sm:$0xff] %v4436
        %4473 = vst [vmem:[#allocation3 + $0x18] sm:$0xff] %v4437
        %4474 = vst [vmem:[#allocation3 + $0x20] sm:$0xff] %v4438
        %4475 = vst [vmem:[#allocation3 + $0x28] sm:$0xff] %v4439
        %4476 = vst [vmem:[#allocation3 + $0x30] sm:$0xff] %v4440
        %4477 = vst [vmem:[#allocation3 + $0x38] sm:$0xff] %v4441
        %4478 = vst [vmem:[#allocation3 + $0x40] sm:$0xff] %v4442
        %4479 = vst [vmem:[#allocation3 + $0x48] sm:$0xff] %v4443
        %4480 = vst [vmem:[#allocation3 + $0x50] sm:$0xff] %v4444
        %4481 = vst [vmem:[#allocation3 + $0x58] sm:$0xff] %v4445
        %4482 = vst [vmem:[#allocation3 + $0x60] sm:$0xff] %v4446
        %4483 = vst [vmem:[#allocation3 + $0x68] sm:$0xff] %v4447
        %4484 = vst [vmem:[#allocation3 + $0x70] sm:$0xff] %v4448
        %4485 = vst [vmem:[#allocation3 + $0x78] sm:$0xff] %v4449
        %4486 = vst [vmem:[#allocation3 + $0x80] sm:$0xff] %v4450
        %4487 = vst [vmem:[#allocation3 + $0x88] sm:$0xff] %v4451
        %4488 = vst [vmem:[#allocation3 + $0x90] sm:$0xff] %v4452
        %4489 = vst [vmem:[#allocation3 + $0x98] sm:$0xff] %v4453
        %4490 = vst [vmem:[#allocation3 + $0xa0] sm:$0xff] %v4454
        %4491 = vst [vmem:[#allocation3 + $0xa8] sm:$0xff] %v4455
        %4492 = vst [vmem:[#allocation3 + $0xb0] sm:$0xff] %v4456
        %4493 = vst [vmem:[#allocation3 + $0xb8] sm:$0xff] %v4457
        %4494 = vst [vmem:[#allocation3 + $0xc0] sm:$0xff] %v4458
        %4495 = vst [vmem:[#allocation3 + $0xc8] sm:$0xff] %v4459
        %4496 = vst [vmem:[#allocation3 + $0xd0] sm:$0xff] %v4460
        %4497 = vst [vmem:[#allocation3 + $0xd8] sm:$0xff] %v4461
        %4498 = vst [vmem:[#allocation3 + $0xe0] sm:$0xff] %v4462
        %4499 = vst [vmem:[#allocation3 + $0xe8] sm:$0xff] %v4463
        %4500 = vst [vmem:[#allocation3 + $0xf0] sm:$0xff] %v4464
        %4501 = vst [vmem:[#allocation3 + $0xf8] sm:$0xff] %v4465
        %4502 = vst [vmem:[#allocation3 + $0x100] sm:$0xff] %v4466
        %4503 = vst [vmem:[#allocation3 + $0x108] sm:$0xff] %v4467
        %4504 = vst [vmem:[#allocation3 + $0x110] sm:$0xff] %v4468
        %4505 = vst [vmem:[#allocation3 + $0x118] sm:$0xff] %v4469
        %v4506 = vld [vmem:[#allocation3] sm:$0xff]
        %v4507 = vld [vmem:[#allocation3 + $0x8] sm:$0xff]
        %4510 = vrot.lane.b32.xlu0 %v4506, 8
        %v4511 = vpop.permute.xlu0 %4510
        %4512 = vrot.lane.b32.xlu0 %v4507, 8
        %v4513 = vpop.permute.xlu0 %4512
        %vm4516 = vcmask 97344
        %4517 = vst.msk [vmem:[%s334] sm:$0xff] %vm4516, %v4511
        %4518 = vst.msk [vmem:[%s334 + $0x8] sm:$0xff] %vm4516, %v4513
        %v4519 = vld [vmem:[#allocation3 + $0x12] sm:$0xff]
        %v4520 = vld [vmem:[#allocation3 + $0x1a] sm:$0xff]
        %4523 = vrot.lane.b32.xlu0 %v4519, 8
        %v4524 = vpop.permute.xlu0 %4523
        %4525 = vrot.lane.b32.xlu0 %v4520, 8
        %v4526 = vpop.permute.xlu0 %4525
        %4529 = vst.msk [vmem:[%s334 + $0x10] sm:$0xff] %vm4516, %v4524
        %4530 = vst.msk [vmem:[%s334 + $0x18] sm:$0xff] %vm4516, %v4526
        %v4531 = vld [vmem:[#allocation3 + $0x24] sm:$0xff]
        %v4532 = vld [vmem:[#allocation3 + $0x2c] sm:$0xff]
        %4535 = vrot.lane.b32.xlu0 %v4531, 8
        %v4536 = vpop.permute.xlu0 %4535
        %4537 = vrot.lane.b32.xlu0 %v4532, 8
        %v4538 = vpop.permute.xlu0 %4537
        %4541 = vst.msk [vmem:[%s334 + $0x20] sm:$0xff] %vm4516, %v4536
        %4542 = vst.msk [vmem:[%s334 + $0x28] sm:$0xff] %vm4516, %v4538
        %v4543 = vld [vmem:[#allocation3 + $0x36] sm:$0xff]
        %v4544 = vld [vmem:[#allocation3 + $0x3e] sm:$0xff]
        %4547 = vrot.lane.b32.xlu0 %v4543, 8
        %v4548 = vpop.permute.xlu0 %4547
        %4549 = vrot.lane.b32.xlu0 %v4544, 8
        %v4550 = vpop.permute.xlu0 %4549
        %4553 = vst.msk [vmem:[%s334 + $0x30] sm:$0xff] %vm4516, %v4548
        %4554 = vst.msk [vmem:[%s334 + $0x38] sm:$0xff] %vm4516, %v4550
        %v4555 = vld [vmem:[#allocation3 + $0x48] sm:$0xff]
        %v4556 = vld [vmem:[#allocation3 + $0x50] sm:$0xff]
        %4559 = vrot.lane.b32.xlu0 %v4555, 8
        %v4560 = vpop.permute.xlu0 %4559
        %4561 = vrot.lane.b32.xlu0 %v4556, 8
        %v4562 = vpop.permute.xlu0 %4561
        %4565 = vst.msk [vmem:[%s334 + $0x40] sm:$0xff] %vm4516, %v4560
        %4566 = vst.msk [vmem:[%s334 + $0x48] sm:$0xff] %vm4516, %v4562
        %v4567 = vld [vmem:[#allocation3 + $0x5a] sm:$0xff]
        %v4568 = vld [vmem:[#allocation3 + $0x62] sm:$0xff]
        %4571 = vrot.lane.b32.xlu0 %v4567, 8
        %v4572 = vpop.permute.xlu0 %4571
        %4573 = vrot.lane.b32.xlu0 %v4568, 8
        %v4574 = vpop.permute.xlu0 %4573
        %4577 = vst.msk [vmem:[%s334 + $0x50] sm:$0xff] %vm4516, %v4572
        %4578 = vst.msk [vmem:[%s334 + $0x58] sm:$0xff] %vm4516, %v4574
        %v4579 = vld [vmem:[#allocation3 + $0x6c] sm:$0xff]
        %v4580 = vld [vmem:[#allocation3 + $0x74] sm:$0xff]
        %4583 = vrot.lane.b32.xlu0 %v4579, 8
        %v4584 = vpop.permute.xlu0 %4583
        %4585 = vrot.lane.b32.xlu0 %v4580, 8
        %v4586 = vpop.permute.xlu0 %4585
        %4589 = vst.msk [vmem:[%s334 + $0x60] sm:$0xff] %vm4516, %v4584
        %4590 = vst.msk [vmem:[%s334 + $0x68] sm:$0xff] %vm4516, %v4586
        %v4591 = vld [vmem:[#allocation3 + $0x7e] sm:$0xff]
        %v4592 = vld [vmem:[#allocation3 + $0x86] sm:$0xff]
        %4595 = vrot.lane.b32.xlu0 %v4591, 8
        %v4596 = vpop.permute.xlu0 %4595
        %4597 = vrot.lane.b32.xlu0 %v4592, 8
        %v4598 = vpop.permute.xlu0 %4597
        %4601 = vst.msk [vmem:[%s334 + $0x70] sm:$0xff] %vm4516, %v4596
        %4602 = vst.msk [vmem:[%s334 + $0x78] sm:$0xff] %vm4516, %v4598
        %v4603 = vld [vmem:[#allocation3 + $0x90] sm:$0xff]
        %v4604 = vld [vmem:[#allocation3 + $0x98] sm:$0xff]
        %4607 = vrot.lane.b32.xlu0 %v4603, 8
        %v4608 = vpop.permute.xlu0 %4607
        %4609 = vrot.lane.b32.xlu0 %v4604, 8
        %v4610 = vpop.permute.xlu0 %4609
        %4613 = vst.msk [vmem:[%s334 + $0x80] sm:$0xff] %vm4516, %v4608
        %4614 = vst.msk [vmem:[%s334 + $0x88] sm:$0xff] %vm4516, %v4610
        %v4615 = vld [vmem:[#allocation3 + $0xa2] sm:$0xff]
        %v4616 = vld [vmem:[#allocation3 + $0xaa] sm:$0xff]
        %4619 = vrot.lane.b32.xlu0 %v4615, 8
        %v4620 = vpop.permute.xlu0 %4619
        %4621 = vrot.lane.b32.xlu0 %v4616, 8
        %v4622 = vpop.permute.xlu0 %4621
        %4625 = vst.msk [vmem:[%s334 + $0x90] sm:$0xff] %vm4516, %v4620
        %4626 = vst.msk [vmem:[%s334 + $0x98] sm:$0xff] %vm4516, %v4622
        %v4627 = vld [vmem:[#allocation3 + $0xb4] sm:$0xff]
        %v4628 = vld [vmem:[#allocation3 + $0xbc] sm:$0xff]
        %4631 = vrot.lane.b32.xlu0 %v4627, 8
        %v4632 = vpop.permute.xlu0 %4631
        %4633 = vrot.lane.b32.xlu0 %v4628, 8
        %v4634 = vpop.permute.xlu0 %4633
        %4637 = vst.msk [vmem:[%s334 + $0xa0] sm:$0xff] %vm4516, %v4632
        %4638 = vst.msk [vmem:[%s334 + $0xa8] sm:$0xff] %vm4516, %v4634
        %v4639 = vld [vmem:[#allocation3 + $0xc6] sm:$0xff]
        %v4640 = vld [vmem:[#allocation3 + $0xce] sm:$0xff]
        %4643 = vrot.lane.b32.xlu0 %v4639, 8
        %v4644 = vpop.permute.xlu0 %4643
        %4645 = vrot.lane.b32.xlu0 %v4640, 8
        %v4646 = vpop.permute.xlu0 %4645
        %4649 = vst.msk [vmem:[%s334 + $0xb0] sm:$0xff] %vm4516, %v4644
        %4650 = vst.msk [vmem:[%s334 + $0xb8] sm:$0xff] %vm4516, %v4646
        %v4651 = vld [vmem:[#allocation3 + $0xd8] sm:$0xff]
        %v4652 = vld [vmem:[#allocation3 + $0xe0] sm:$0xff]
        %4655 = vrot.lane.b32.xlu0 %v4651, 8
        %v4656 = vpop.permute.xlu0 %4655
        %4657 = vrot.lane.b32.xlu0 %v4652, 8
        %v4658 = vpop.permute.xlu0 %4657
        %4661 = vst.msk [vmem:[%s334 + $0xc0] sm:$0xff] %vm4516, %v4656
        %4662 = vst.msk [vmem:[%s334 + $0xc8] sm:$0xff] %vm4516, %v4658
        %v4663 = vld [vmem:[#allocation3 + $0xea] sm:$0xff]
        %v4664 = vld [vmem:[#allocation3 + $0xf2] sm:$0xff]
        %4667 = vrot.lane.b32.xlu0 %v4663, 8
        %v4668 = vpop.permute.xlu0 %4667
        %4669 = vrot.lane.b32.xlu0 %v4664, 8
        %v4670 = vpop.permute.xlu0 %4669
        %4673 = vst.msk [vmem:[%s334 + $0xd0] sm:$0xff] %vm4516, %v4668
        %4674 = vst.msk [vmem:[%s334 + $0xd8] sm:$0xff] %vm4516, %v4670
        %v4675 = vld [vmem:[#allocation3 + $0xfc] sm:$0xff]
        %v4676 = vld [vmem:[#allocation3 + $0x104] sm:$0xff]
        %4679 = vrot.lane.b32.xlu0 %v4675, 8
        %v4680 = vpop.permute.xlu0 %4679
        %4681 = vrot.lane.b32.xlu0 %v4676, 8
        %v4682 = vpop.permute.xlu0 %4681
        %4685 = vst.msk [vmem:[%s334 + $0xe0] sm:$0xff] %vm4516, %v4680
        %4686 = vst.msk [vmem:[%s334 + $0xe8] sm:$0xff] %vm4516, %v4682
        %v4687 = vld [vmem:[#allocation3 + $0x10e] sm:$0xff]
        %v4688 = vld [vmem:[#allocation3 + $0x116] sm:$0xff]
        %4691 = vrot.lane.b32.xlu0 %v4687, 8
        %v4692 = vpop.permute.xlu0 %4691
        %4693 = vrot.lane.b32.xlu0 %v4688, 8
        %v4694 = vpop.permute.xlu0 %4693
        %4697 = vst.msk [vmem:[%s334 + $0xf0] sm:$0xff] %vm4516, %v4692
        %4698 = vst.msk [vmem:[%s334 + $0xf8] sm:$0xff] %vm4516, %v4694
        %s4699 = sand.u32 %s165, 1
        %s4700 = scalar_lea.sflag [#allocation6], %s4699
        %s4701 = sand.u32 %s165, 1
        %s4702 = smul.addr %s4701, 256
        %s4703 = scalar_lea.vmem [#allocation15], %s4702
        // Predicated region
        $region69: #{dense_layer_forward_nhwc.1} parent=43 // pred_check
          %p4704 = pneg %p175
        $region70: #{dense_layer_forward_nhwc.1} parent=43 // pred_check_branch
          %4706 = sbr.rel (%p4704) target = $region72
        $region71: #{dense_layer_forward_nhwc.1} parent=43 // pred_region
          %s4708 = ssub.s32 4096, 4096
          %4709 = vsyncadd %s4700, %s4708
          %s4710 = smul.addr %s26, 32
          %s4711 = smul.addr %s4710, 128
          %s4712 = scalar_lea.hbm %s6, %s4711
          %s4713 = sshll.u32 %s4703, 4
          %s4714 = int_to_ptr.vmem [resolvable:$true] %s4713
          %4719 = dma.vmem_to_hbm [thread:$0]  %s4714, 4096, %s4712, %s4700, 128, 128, 8
        $region72: #{dense_layer_forward_nhwc.1} parent=43 // pred_fallthru
          _
      $region44: #{dense_layer_forward_nhwc.1} parent=5 // pred_fallthru
        _
      %p4720 = scmp.le.s32.totalorder 2, %s21
      // Predicated region
      $region73: #{dense_layer_forward_nhwc.1} parent=5 // pred_check
        %p4721 = pneg %p4720
      $region74: #{dense_layer_forward_nhwc.1} parent=5 // pred_check_branch
        %4723 = sbr.rel (%p4721) target = $region76
      $region75: #{dense_layer_forward_nhwc.1} parent=5 // pred_region
        %s4724 = ssub.s32 %s21, 2
        // Predicated region
        $region77: #{dense_layer_forward_nhwc.1} parent=75 // pred_check
          %p4725 = pneg %p181
        $region78: #{dense_layer_forward_nhwc.1} parent=75 // pred_check_branch
          %4727 = sbr.rel (%p4725) target = $region80
        $region79: #{dense_layer_forward_nhwc.1} parent=75 // pred_region
          %s4728 = sand.u32 %s166, 1
          %s4729 = scalar_lea.sflag [#allocation6], %s4728
          %s4730 = sand.u32 %s166, 1
          %s4731 = smul.addr %s4730, 256
          %s4732 = scalar_lea.vmem [#allocation15], %s4731
          %4733 = dma.done %s4729, 4096
        $region80: #{dense_layer_forward_nhwc.1} parent=75 // pred_fallthru
          _
      $region76: #{dense_layer_forward_nhwc.1} parent=5 // pred_fallthru
        _
    $region6: #{dense_layer_forward_nhwc.1} parent=1 // loop_footer
      %s25 = sadd.s32 1, %s21
    $region7: #{dense_layer_forward_nhwc.1} parent=1 // loop_footer_branch
      %20 = sbr.rel target = $region3
    $region8: #{dense_layer_forward_nhwc.1} parent=1 // loop_exit
      _
    %4734 = vsyncpa [#allocation5], 1
    %s4735 = scalar_lea.sflag [#allocation5], 1
    %4736 = vsyncpa %s4735, 1
    %4737 = vsyncpa [#allocation8], 1
    %4738 = vsyncpa [#allocation11], 1
    %4739 = vsyncpa [#allocation14], 1
    %4740 = vsyncpa [#allocation6], 1
    %s4741 = scalar_lea.sflag [#allocation6], 1
    %4742 = vsyncpa %s4741, 1

</llo_original>
